<compile_context>
chip_gen: v5e
topology: v5e:2x2
jax: 0.10.0
libtpu: 0.0.40
codegen_flags: <defaults>
</compile_context>

<pallas_src>
import jax
import jax.numpy as jnp
from jax import lax
from jax.experimental import pallas as pl
from jax.experimental.pallas import tpu as pltpu

KSIZE = 7
PAD = 3
_CB = 8  # sublane chunk for the fused channel reduction


def _round_up(n, m):
    return ((n + m - 1) // m) * m


def _pick_channel_tile(C, HW, itemsize, budget_bytes=4 * 1024 * 1024):
    # Largest channel tile that divides C, is a multiple of 8 (or == C), and
    # keeps one x block under ~4 MiB so the double-buffered pipeline stays well
    # inside v7x's 32 MiB scoped-VMEM default (plenty of slack on v5e/v6e).
    if C * HW * itemsize <= budget_bytes:
        return C
    best = None
    for d in range(8, C, 8):
        if C % d == 0 and d * HW * itemsize <= budget_bytes:
            best = d
    return best if best is not None else C


def _make_reduce_kernel(C_total, Ct, NC):
    inv_c = 1.0 / float(C_total)

    def kernel(x_ref, o_ref):
        # x_ref: (1, Ct, HW) input block; o_ref: (1, 2, HW) output block,
        # resident across the channel-tile grid axis (accumulator pattern).
        s = None
        m = None
        nfull = Ct // _CB
        rem = Ct - nfull * _CB
        # Fused single pass: each chunk is read from VMEM once and feeds both
        # the running sum and the running max.
        for j in range(nfull):
            ch = x_ref[0, j * _CB:(j + 1) * _CB, :].astype(jnp.float32)
            s = ch if s is None else s + ch
            m = ch if m is None else jnp.maximum(m, ch)
        if s is not None:
            s = jnp.sum(s, axis=0, keepdims=True)   # (1, HW)
            m = jnp.max(m, axis=0, keepdims=True)   # (1, HW)
        if rem:
            tail = x_ref[0, nfull * _CB:Ct, :].astype(jnp.float32)
            ts = jnp.sum(tail, axis=0, keepdims=True)
            tm = jnp.max(tail, axis=0, keepdims=True)
            s = ts if s is None else s + ts
            m = tm if m is None else jnp.maximum(m, tm)

        if NC == 1:
            o_ref[0, 0:1, :] = s * inv_c
            o_ref[0, 1:2, :] = m
        else:
            c = pl.program_id(1)

            @pl.when(c == 0)
            def _():
                o_ref[0, 0:1, :] = jnp.zeros_like(s)
                o_ref[0, 1:2, :] = jnp.full_like(m, -jnp.inf)

            o_ref[0, 0:1, :] = o_ref[0, 0:1, :] + s
            o_ref[0, 1:2, :] = jnp.maximum(o_ref[0, 1:2, :], m)

            @pl.when(c == NC - 1)
            def _():
                o_ref[0, 0:1, :] = o_ref[0, 0:1, :] * inv_c

    return kernel


def _make_conv_kernel(H, W, Hp, Wp):
    def kernel(w_ref, p_ref, o_ref, sh_ref):
        # w_ref : SMEM (2*7*7,) conv weight, flattened (in_ch, kh, kw)
        # p_ref : VMEM (1, 2, H, W) [mean, max] planes for one batch element
        # o_ref : VMEM (1, 1, H, W) output
        # sh_ref: VMEM (2, 7, Hp, Wp) scratch; sh_ref[c, kj] is the zero-padded
        #         plane c pre-shifted by kj along W (hoisted lane shifts).
        for ci in range(2):
            a = p_ref[0, ci].astype(jnp.float32)                        # (H, W)
            a = jnp.concatenate(
                [jnp.zeros((PAD, W), jnp.float32), a,
                 jnp.zeros((Hp - PAD - H, W), jnp.float32)], axis=0)    # (Hp, W)
            a = jnp.concatenate(
                [jnp.zeros((Hp, PAD), jnp.float32), a,
                 jnp.zeros((Hp, Wp - PAD - W), jnp.float32)], axis=1)   # (Hp, Wp)
            sh_ref[ci, 0] = a
            for kj in range(1, KSIZE):
                # left-shift along W by kj; tail lanes >= Wp - kj are never
                # read for the valid output columns w < W.
                sh_ref[ci, kj, :, 0:Wp - kj] = a[:, kj:]

        # 98 taps on the VPU over the full 128-lane padded width; 4 independent
        # accumulators break the dependent mul+add chain (no f32 FMA).
        accs = [jnp.zeros((H, Wp), jnp.float32) for _ in range(4)]
        for ci in range(2):
            for ki in range(KSIZE):
                idx = 2 * ci + (ki & 1)
                for kj in range(KSIZE):
                    wgt = w_ref[ci * KSIZE * KSIZE + ki * KSIZE + kj]
                    accs[idx] = accs[idx] + wgt * sh_ref[ci, kj, ki:ki + H, :]
        total = (accs[0] + accs[1]) + (accs[2] + accs[3])

        o_ref[0, 0] = jax.nn.sigmoid(total[:, :W]).astype(o_ref.dtype)

    return kernel


@jax.jit
def sam_forward(x, w):
    """x: (B, C, H, W); w: (1, 2, 7, 7) Conv2d(2,1,7,pad=3,bias=False) weight."""
    B, C, H, W = x.shape
    HW = H * W
    Hp = _round_up(H + 2 * PAD, 8)
    Wp = _round_up(W + 2 * PAD, 128)

    Ct = _pick_channel_tile(C, HW, x.dtype.itemsize)
    NC = C // Ct

    # ---- kernel 1: fused channel mean/max, lane-dense flattened spatial -----
    x_flat = x.reshape(B, C, HW)
    planes_flat = pl.pallas_call(
        _make_reduce_kernel(C, Ct, NC),
        out_shape=jax.ShapeDtypeStruct((B, 2, HW), jnp.float32),
        grid_spec=pltpu.PrefetchScalarGridSpec(
            num_scalar_prefetch=0,
            grid=(B, NC),
            in_specs=[pl.BlockSpec((1, Ct, HW), lambda b, c: (b, c, 0))],
            out_specs=pl.BlockSpec((1, 2, HW), lambda b, c: (b, 0, 0)),
        ),
        compiler_params=pltpu.CompilerParams(
            dimension_semantics=("parallel", "arbitrary"),
            vmem_limit_bytes=32 * 1024 * 1024),
    )(x_flat)

    # free (contiguous) reshape back to 2-D planes for the conv kernel
    planes = planes_flat.reshape(B, 2, H, W)

    # ---- kernel 2: 7x7 conv (2 -> 1) + sigmoid -------------------------------
    w_flat = w.reshape(-1).astype(jnp.float32)  # (98,) scalars in SMEM
    out = pl.pallas_call(
        _make_conv_kernel(H, W, Hp, Wp),
        out_shape=jax.ShapeDtypeStruct((B, 1, H, W), x.dtype),
        grid_spec=pltpu.PrefetchScalarGridSpec(
            num_scalar_prefetch=0,
            grid=(B,),
            in_specs=[
                pl.BlockSpec(memory_space=pltpu.MemorySpace.SMEM),
                pl.BlockSpec((1, 2, H, W), lambda b: (b, 0, 0, 0)),
            ],
            out_specs=pl.BlockSpec((1, 1, H, W), lambda b: (b, 0, 0, 0)),
            scratch_shapes=[pltpu.VMEM((2, KSIZE, Hp, Wp), jnp.float32)],
        ),
        compiler_params=pltpu.CompilerParams(
            dimension_semantics=("parallel",),
            vmem_limit_bytes=32 * 1024 * 1024),
    )(w_flat, planes)
    return out


if __name__ == "__main__":
    key = jax.random.PRNGKey(0)
    kx, kw = jax.random.split(key)

    B, C, H, W = 2, 4, 16, 16
    x = jax.random.normal(kx, (B, C, H, W), dtype=jnp.float32)

    # nn.Conv2d(2, 1, 7, padding=3, bias=False) weight: (1, 2, 7, 7)
    fan_in = 2 * KSIZE * KSIZE
    bound = (1.0 / fan_in) ** 0.5
    w = jax.random.uniform(kw, (1, 2, KSIZE, KSIZE), jnp.float32, -bound, bound)

    out = jax.block_until_ready(sam_forward(x, w))

    # Pure-JAX reference for sanity check.
    avg = jnp.mean(x, axis=1, keepdims=True)
    mx = jnp.max(x, axis=1, keepdims=True)
    cat = jnp.concatenate([avg, mx], axis=1)
    ref = jax.nn.sigmoid(lax.conv_general_dilated(
        cat, w, window_strides=(1, 1), padding=((PAD, PAD), (PAD, PAD)),
        dimension_numbers=("NCHW", "OIHW", "NCHW")))

    assert out.shape == (B, 1, H, W), out.shape
    err = float(jnp.max(jnp.abs(out - ref)))
    assert jnp.allclose(out, ref, atol=1e-5, rtol=1e-5), err
    print("KERNEL_OK")
</pallas_src>

<mosaic_0001>
module attributes {stable_mosaic.version = 11 : i64} {
  func.func @kernel(%arg0: i32, %arg1: i32, %arg2: memref<1x4x256xf32, #tpu.memory_space<vmem>>, %arg3: memref<1x2x256xf32, #tpu.memory_space<vmem>>) attributes {dimension_semantics = [#tpu.dimension_semantics<parallel>, #tpu.dimension_semantics<arbitrary>], iteration_bounds = array<i64: 2, 1>, scalar_prefetch = 0 : i64, scratch_operands = 0 : i64, tpu.core_type = #tpu.core_type<tc>, window_params = [{transform_indices = @transform_0, window_bounds = array<i64: 1, 4, 256>}, {transform_indices = @transform_1, window_bounds = array<i64: 1, 2, 256>}]} {
    %c0 = arith.constant 0 : index
    %c0_0 = arith.constant 0 : index
    %c0_1 = arith.constant 0 : index
    %0 = vector.load %arg2[%c0, %c0_0, %c0_1] : memref<1x4x256xf32, #tpu.memory_space<vmem>>, vector<1x4x256xf32>
    %1 = vector.shape_cast %0 : vector<1x4x256xf32> to vector<4x256xf32>
    %cst = arith.constant dense<0.000000e+00> : vector<256xf32>
    %2 = vector.multi_reduction <add>, %1, %cst [0] : vector<4x256xf32> to vector<256xf32>
    %3 = vector.shape_cast %2 : vector<256xf32> to vector<1x256xf32>
    %cst_2 = arith.constant dense<0xFF800000> : vector<256xf32>
    %4 = vector.multi_reduction <maximumf>, %1, %cst_2 [0] : vector<4x256xf32> to vector<256xf32>
    %5 = vector.shape_cast %4 : vector<256xf32> to vector<1x256xf32>
    %cst_3 = arith.constant 2.500000e-01 : f32
    %6 = vector.broadcast %cst_3 : f32 to vector<1x256xf32>
    %7 = arith.mulf %3, %6 : vector<1x256xf32>
    %c0_4 = arith.constant 0 : index
    %c0_5 = arith.constant 0 : index
    %c0_6 = arith.constant 0 : index
    %8 = vector.load %arg3[%c0_4, %c0_5, %c0_6] : memref<1x2x256xf32, #tpu.memory_space<vmem>>, vector<1x1x256xf32>
    %9 = vector.shape_cast %8 : vector<1x1x256xf32> to vector<1x256xf32>
    %10 = vector.shape_cast %7 : vector<1x256xf32> to vector<1x1x256xf32>
    tpu.vector_store %arg3[%c0_4, %c0_5, %c0_6], %10 {strides = array<i32>} : memref<1x2x256xf32, #tpu.memory_space<vmem>>, vector<1x1x256xf32>,
    %c0_7 = arith.constant 0 : index
    %c1 = arith.constant 1 : index
    %c0_8 = arith.constant 0 : index
    %11 = vector.load %arg3[%c0_7, %c1, %c0_8] : memref<1x2x256xf32, #tpu.memory_space<vmem>>, vector<1x1x256xf32>
    %12 = vector.shape_cast %11 : vector<1x1x256xf32> to vector<1x256xf32>
    %13 = vector.shape_cast %5 : vector<1x256xf32> to vector<1x1x256xf32>
    tpu.vector_store %arg3[%c0_7, %c1, %c0_8], %13 {strides = array<i32>} : memref<1x2x256xf32, #tpu.memory_space<vmem>>, vector<1x1x256xf32>,
    return
  }
  func.func @transform_0(%arg0: i32, %arg1: i32) -> (i32, i32, i32) {
    %c0_i32 = arith.constant 0 : i32
    %c0_i32_0 = arith.constant 0 : i32
    return %arg0, %arg1, %c0_i32 : i32, i32, i32
  }
  func.func @transform_1(%arg0: i32, %arg1: i32) -> (i32, i32, i32) {
    %c0_i32 = arith.constant 0 : i32
    %c0_i32_0 = arith.constant 0 : i32
    %c0_i32_1 = arith.constant 0 : i32
    return %arg0, %c0_i32, %c0_i32_0 : i32, i32, i32
  }
}

module attributes {stable_mosaic.version = 11 : i64} {
  func.func @kernel(%arg0: i32, %arg1: memref<98xf32, #tpu.memory_space<smem>>, %arg2: memref<1x2x16x16xf32, #tpu.memory_space<vmem>>, %arg3: memref<1x1x16x16xf32, #tpu.memory_space<vmem>>, %arg4: memref<2x7x24x128xf32, #tpu.memory_space<vmem>>) attributes {dimension_semantics = [#tpu.dimension_semantics<parallel>], iteration_bounds = array<i64: 2>, scalar_prefetch = 0 : i64, scratch_operands = 1 : i64, tpu.core_type = #tpu.core_type<tc>, window_params = [{transform_indices = @transform_0, window_bounds = array<i64: 98>}, {transform_indices = @transform_1, window_bounds = array<i64: 1, 2, 16, 16>}, {transform_indices = @transform_2, window_bounds = array<i64: 1, 1, 16, 16>}]} {
    %c0 = arith.constant 0 : index
    %c0_0 = arith.constant 0 : index
    %c0_1 = arith.constant 0 : index
    %c0_2 = arith.constant 0 : index
    %0 = vector.load %arg2[%c0, %c0_0, %c0_1, %c0_2] : memref<1x2x16x16xf32, #tpu.memory_space<vmem>>, vector<1x1x16x16xf32>
    %1 = vector.shape_cast %0 : vector<1x1x16x16xf32> to vector<16x16xf32>
    %cst = arith.constant 0.000000e+00 : f32
    %2 = vector.broadcast %cst : f32 to vector<3x16xf32>
    %cst_3 = arith.constant 0.000000e+00 : f32
    %3 = vector.broadcast %cst_3 : f32 to vector<5x16xf32>
    %4 = tpu.concatenate %2, %1, %3 in 0 : vector<3x16xf32>, vector<16x16xf32>, vector<5x16xf32> -> vector<24x16xf32>
    %cst_4 = arith.constant 0.000000e+00 : f32
    %5 = vector.broadcast %cst_4 : f32 to vector<24x3xf32>
    %cst_5 = arith.constant 0.000000e+00 : f32
    %6 = vector.broadcast %cst_5 : f32 to vector<24x109xf32>
    %7 = tpu.concatenate %5, %4, %6 in 1 : vector<24x3xf32>, vector<24x16xf32>, vector<24x109xf32> -> vector<24x128xf32>
    %c0_6 = arith.constant 0 : index
    %c0_7 = arith.constant 0 : index
    %c0_8 = arith.constant 0 : index
    %c0_9 = arith.constant 0 : index
    %8 = vector.load %arg4[%c0_6, %c0_7, %c0_8, %c0_9] : memref<2x7x24x128xf32, #tpu.memory_space<vmem>>, vector<1x1x24x128xf32>
    %9 = vector.shape_cast %8 : vector<1x1x24x128xf32> to vector<24x128xf32>
    %10 = vector.shape_cast %7 : vector<24x128xf32> to vector<1x1x24x128xf32>
    tpu.vector_store %arg4[%c0_6, %c0_7, %c0_8, %c0_9], %10 {strides = array<i32>} : memref<2x7x24x128xf32, #tpu.memory_space<vmem>>, vector<1x1x24x128xf32>,
    %11 = vector.extract_strided_slice %7 {offsets = [0, 1], sizes = [24, 127], strides = [1, 1]} : vector<24x128xf32> to vector<24x127xf32>
    %c0_10 = arith.constant 0 : index
    %c1 = arith.constant 1 : index
    %c0_11 = arith.constant 0 : index
    %c0_12 = arith.constant 0 : index
    %12 = vector.load %arg4[%c0_10, %c1, %c0_11, %c0_12] : memref<2x7x24x128xf32, #tpu.memory_space<vmem>>, vector<1x1x24x127xf32>
    %13 = vector.shape_cast %12 : vector<1x1x24x127xf32> to vector<24x127xf32>
    %14 = vector.shape_cast %11 : vector<24x127xf32> to vector<1x1x24x127xf32>
    tpu.vector_store %arg4[%c0_10, %c1, %c0_11, %c0_12], %14 {strides = array<i32>} : memref<2x7x24x128xf32, #tpu.memory_space<vmem>>, vector<1x1x24x127xf32>,
    %15 = vector.extract_strided_slice %7 {offsets = [0, 2], sizes = [24, 126], strides = [1, 1]} : vector<24x128xf32> to vector<24x126xf32>
    %c0_13 = arith.constant 0 : index
    %c2 = arith.constant 2 : index
    %c0_14 = arith.constant 0 : index
    %c0_15 = arith.constant 0 : index
    %16 = vector.load %arg4[%c0_13, %c2, %c0_14, %c0_15] : memref<2x7x24x128xf32, #tpu.memory_space<vmem>>, vector<1x1x24x126xf32>
    %17 = vector.shape_cast %16 : vector<1x1x24x126xf32> to vector<24x126xf32>
    %18 = vector.shape_cast %15 : vector<24x126xf32> to vector<1x1x24x126xf32>
    tpu.vector_store %arg4[%c0_13, %c2, %c0_14, %c0_15], %18 {strides = array<i32>} : memref<2x7x24x128xf32, #tpu.memory_space<vmem>>, vector<1x1x24x126xf32>,
    %19 = vector.extract_strided_slice %7 {offsets = [0, 3], sizes = [24, 125], strides = [1, 1]} : vector<24x128xf32> to vector<24x125xf32>
    %c0_16 = arith.constant 0 : index
    %c3 = arith.constant 3 : index
    %c0_17 = arith.constant 0 : index
    %c0_18 = arith.constant 0 : index
    %20 = vector.load %arg4[%c0_16, %c3, %c0_17, %c0_18] : memref<2x7x24x128xf32, #tpu.memory_space<vmem>>, vector<1x1x24x125xf32>
    %21 = vector.shape_cast %20 : vector<1x1x24x125xf32> to vector<24x125xf32>
    %22 = vector.shape_cast %19 : vector<24x125xf32> to vector<1x1x24x125xf32>
    tpu.vector_store %arg4[%c0_16, %c3, %c0_17, %c0_18], %22 {strides = array<i32>} : memref<2x7x24x128xf32, #tpu.memory_space<vmem>>, vector<1x1x24x125xf32>,
    %23 = vector.extract_strided_slice %7 {offsets = [0, 4], sizes = [24, 124], strides = [1, 1]} : vector<24x128xf32> to vector<24x124xf32>
    %c0_19 = arith.constant 0 : index
    %c4 = arith.constant 4 : index
    %c0_20 = arith.constant 0 : index
    %c0_21 = arith.constant 0 : index
    %24 = vector.load %arg4[%c0_19, %c4, %c0_20, %c0_21] : memref<2x7x24x128xf32, #tpu.memory_space<vmem>>, vector<1x1x24x124xf32>
    %25 = vector.shape_cast %24 : vector<1x1x24x124xf32> to vector<24x124xf32>
    %26 = vector.shape_cast %23 : vector<24x124xf32> to vector<1x1x24x124xf32>
    tpu.vector_store %arg4[%c0_19, %c4, %c0_20, %c0_21], %26 {strides = array<i32>} : memref<2x7x24x128xf32, #tpu.memory_space<vmem>>, vector<1x1x24x124xf32>,
    %27 = vector.extract_strided_slice %7 {offsets = [0, 5], sizes = [24, 123], strides = [1, 1]} : vector<24x128xf32> to vector<24x123xf32>
    %c0_22 = arith.constant 0 : index
    %c5 = arith.constant 5 : index
    %c0_23 = arith.constant 0 : index
    %c0_24 = arith.constant 0 : index
    %28 = vector.load %arg4[%c0_22, %c5, %c0_23, %c0_24] : memref<2x7x24x128xf32, #tpu.memory_space<vmem>>, vector<1x1x24x123xf32>
    %29 = vector.shape_cast %28 : vector<1x1x24x123xf32> to vector<24x123xf32>
    %30 = vector.shape_cast %27 : vector<24x123xf32> to vector<1x1x24x123xf32>
    tpu.vector_store %arg4[%c0_22, %c5, %c0_23, %c0_24], %30 {strides = array<i32>} : memref<2x7x24x128xf32, #tpu.memory_space<vmem>>, vector<1x1x24x123xf32>,
    %31 = vector.extract_strided_slice %7 {offsets = [0, 6], sizes = [24, 122], strides = [1, 1]} : vector<24x128xf32> to vector<24x122xf32>
    %c0_25 = arith.constant 0 : index
    %c6 = arith.constant 6 : index
    %c0_26 = arith.constant 0 : index
    %c0_27 = arith.constant 0 : index
    %32 = vector.load %arg4[%c0_25, %c6, %c0_26, %c0_27] : memref<2x7x24x128xf32, #tpu.memory_space<vmem>>, vector<1x1x24x122xf32>
    %33 = vector.shape_cast %32 : vector<1x1x24x122xf32> to vector<24x122xf32>
    %34 = vector.shape_cast %31 : vector<24x122xf32> to vector<1x1x24x122xf32>
    tpu.vector_store %arg4[%c0_25, %c6, %c0_26, %c0_27], %34 {strides = array<i32>} : memref<2x7x24x128xf32, #tpu.memory_space<vmem>>, vector<1x1x24x122xf32>,
    %c0_28 = arith.constant 0 : index
    %c1_29 = arith.constant 1 : index
    %c0_30 = arith.constant 0 : index
    %c0_31 = arith.constant 0 : index
    %35 = vector.load %arg2[%c0_28, %c1_29, %c0_30, %c0_31] : memref<1x2x16x16xf32, #tpu.memory_space<vmem>>, vector<1x1x16x16xf32>
    %36 = vector.shape_cast %35 : vector<1x1x16x16xf32> to vector<16x16xf32>
    %cst_32 = arith.constant 0.000000e+00 : f32
    %37 = vector.broadcast %cst_32 : f32 to vector<3x16xf32>
    %cst_33 = arith.constant 0.000000e+00 : f32
    %38 = vector.broadcast %cst_33 : f32 to vector<5x16xf32>
    %39 = tpu.concatenate %37, %36, %38 in 0 : vector<3x16xf32>, vector<16x16xf32>, vector<5x16xf32> -> vector<24x16xf32>
    %cst_34 = arith.constant 0.000000e+00 : f32
    %40 = vector.broadcast %cst_34 : f32 to vector<24x3xf32>
    %cst_35 = arith.constant 0.000000e+00 : f32
    %41 = vector.broadcast %cst_35 : f32 to vector<24x109xf32>
    %42 = tpu.concatenate %40, %39, %41 in 1 : vector<24x3xf32>, vector<24x16xf32>, vector<24x109xf32> -> vector<24x128xf32>
    %c1_36 = arith.constant 1 : index
    %c0_37 = arith.constant 0 : index
    %c0_38 = arith.constant 0 : index
    %c0_39 = arith.constant 0 : index
    %43 = vector.load %arg4[%c1_36, %c0_37, %c0_38, %c0_39] : memref<2x7x24x128xf32, #tpu.memory_space<vmem>>, vector<1x1x24x128xf32>
    %44 = vector.shape_cast %43 : vector<1x1x24x128xf32> to vector<24x128xf32>
    %45 = vector.shape_cast %42 : vector<24x128xf32> to vector<1x1x24x128xf32>
    tpu.vector_store %arg4[%c1_36, %c0_37, %c0_38, %c0_39], %45 {strides = array<i32>} : memref<2x7x24x128xf32, #tpu.memory_space<vmem>>, vector<1x1x24x128xf32>,
    %46 = vector.extract_strided_slice %42 {offsets = [0, 1], sizes = [24, 127], strides = [1, 1]} : vector<24x128xf32> to vector<24x127xf32>
    %c1_40 = arith.constant 1 : index
    %c1_41 = arith.constant 1 : index
    %c0_42 = arith.constant 0 : index
    %c0_43 = arith.constant 0 : index
    %47 = vector.load %arg4[%c1_40, %c1_41, %c0_42, %c0_43] : memref<2x7x24x128xf32, #tpu.memory_space<vmem>>, vector<1x1x24x127xf32>
    %48 = vector.shape_cast %47 : vector<1x1x24x127xf32> to vector<24x127xf32>
    %49 = vector.shape_cast %46 : vector<24x127xf32> to vector<1x1x24x127xf32>
    tpu.vector_store %arg4[%c1_40, %c1_41, %c0_42, %c0_43], %49 {strides = array<i32>} : memref<2x7x24x128xf32, #tpu.memory_space<vmem>>, vector<1x1x24x127xf32>,
    %50 = vector.extract_strided_slice %42 {offsets = [0, 2], sizes = [24, 126], strides = [1, 1]} : vector<24x128xf32> to vector<24x126xf32>
    %c1_44 = arith.constant 1 : index
    %c2_45 = arith.constant 2 : index
    %c0_46 = arith.constant 0 : index
    %c0_47 = arith.constant 0 : index
    %51 = vector.load %arg4[%c1_44, %c2_45, %c0_46, %c0_47] : memref<2x7x24x128xf32, #tpu.memory_space<vmem>>, vector<1x1x24x126xf32>
    %52 = vector.shape_cast %51 : vector<1x1x24x126xf32> to vector<24x126xf32>
    %53 = vector.shape_cast %50 : vector<24x126xf32> to vector<1x1x24x126xf32>
    tpu.vector_store %arg4[%c1_44, %c2_45, %c0_46, %c0_47], %53 {strides = array<i32>} : memref<2x7x24x128xf32, #tpu.memory_space<vmem>>, vector<1x1x24x126xf32>,
    %54 = vector.extract_strided_slice %42 {offsets = [0, 3], sizes = [24, 125], strides = [1, 1]} : vector<24x128xf32> to vector<24x125xf32>
    %c1_48 = arith.constant 1 : index
    %c3_49 = arith.constant 3 : index
    %c0_50 = arith.constant 0 : index
    %c0_51 = arith.constant 0 : index
    %55 = vector.load %arg4[%c1_48, %c3_49, %c0_50, %c0_51] : memref<2x7x24x128xf32, #tpu.memory_space<vmem>>, vector<1x1x24x125xf32>
    %56 = vector.shape_cast %55 : vector<1x1x24x125xf32> to vector<24x125xf32>
    %57 = vector.shape_cast %54 : vector<24x125xf32> to vector<1x1x24x125xf32>
    tpu.vector_store %arg4[%c1_48, %c3_49, %c0_50, %c0_51], %57 {strides = array<i32>} : memref<2x7x24x128xf32, #tpu.memory_space<vmem>>, vector<1x1x24x125xf32>,
    %58 = vector.extract_strided_slice %42 {offsets = [0, 4], sizes = [24, 124], strides = [1, 1]} : vector<24x128xf32> to vector<24x124xf32>
    %c1_52 = arith.constant 1 : index
    %c4_53 = arith.constant 4 : index
    %c0_54 = arith.constant 0 : index
    %c0_55 = arith.constant 0 : index
    %59 = vector.load %arg4[%c1_52, %c4_53, %c0_54, %c0_55] : memref<2x7x24x128xf32, #tpu.memory_space<vmem>>, vector<1x1x24x124xf32>
    %60 = vector.shape_cast %59 : vector<1x1x24x124xf32> to vector<24x124xf32>
    %61 = vector.shape_cast %58 : vector<24x124xf32> to vector<1x1x24x124xf32>
    tpu.vector_store %arg4[%c1_52, %c4_53, %c0_54, %c0_55], %61 {strides = array<i32>} : memref<2x7x24x128xf32, #tpu.memory_space<vmem>>, vector<1x1x24x124xf32>,
    %62 = vector.extract_strided_slice %42 {offsets = [0, 5], sizes = [24, 123], strides = [1, 1]} : vector<24x128xf32> to vector<24x123xf32>
    %c1_56 = arith.constant 1 : index
    %c5_57 = arith.constant 5 : index
    %c0_58 = arith.constant 0 : index
    %c0_59 = arith.constant 0 : index
    %63 = vector.load %arg4[%c1_56, %c5_57, %c0_58, %c0_59] : memref<2x7x24x128xf32, #tpu.memory_space<vmem>>, vector<1x1x24x123xf32>
    %64 = vector.shape_cast %63 : vector<1x1x24x123xf32> to vector<24x123xf32>
    %65 = vector.shape_cast %62 : vector<24x123xf32> to vector<1x1x24x123xf32>
    tpu.vector_store %arg4[%c1_56, %c5_57, %c0_58, %c0_59], %65 {strides = array<i32>} : memref<2x7x24x128xf32, #tpu.memory_space<vmem>>, vector<1x1x24x123xf32>,
    %66 = vector.extract_strided_slice %42 {offsets = [0, 6], sizes = [24, 122], strides = [1, 1]} : vector<24x128xf32> to vector<24x122xf32>
    %c1_60 = arith.constant 1 : index
    %c6_61 = arith.constant 6 : index
    %c0_62 = arith.constant 0 : index
    %c0_63 = arith.constant 0 : index
    %67 = vector.load %arg4[%c1_60, %c6_61, %c0_62, %c0_63] : memref<2x7x24x128xf32, #tpu.memory_space<vmem>>, vector<1x1x24x122xf32>
    %68 = vector.shape_cast %67 : vector<1x1x24x122xf32> to vector<24x122xf32>
    %69 = vector.shape_cast %66 : vector<24x122xf32> to vector<1x1x24x122xf32>
    tpu.vector_store %arg4[%c1_60, %c6_61, %c0_62, %c0_63], %69 {strides = array<i32>} : memref<2x7x24x128xf32, #tpu.memory_space<vmem>>, vector<1x1x24x122xf32>,
    %cst_64 = arith.constant 0.000000e+00 : f32
    %70 = vector.broadcast %cst_64 : f32 to vector<16x128xf32>
    %cst_65 = arith.constant 0.000000e+00 : f32
    %71 = vector.broadcast %cst_65 : f32 to vector<16x128xf32>
    %cst_66 = arith.constant 0.000000e+00 : f32
    %72 = vector.broadcast %cst_66 : f32 to vector<16x128xf32>
    %cst_67 = arith.constant 0.000000e+00 : f32
    %73 = vector.broadcast %cst_67 : f32 to vector<16x128xf32>
    %c0_68 = arith.constant 0 : index
    %74 = memref.load %arg1[%c0_68] : memref<98xf32, #tpu.memory_space<smem>>
    %c0_69 = arith.constant 0 : index
    %c0_70 = arith.constant 0 : index
    %c0_71 = arith.constant 0 : index
    %c0_72 = arith.constant 0 : index
    %75 = vector.load %arg4[%c0_69, %c0_70, %c0_71, %c0_72] : memref<2x7x24x128xf32, #tpu.memory_space<vmem>>, vector<1x1x16x128xf32>
    %76 = vector.shape_cast %75 : vector<1x1x16x128xf32> to vector<16x128xf32>
    %77 = vector.broadcast %74 : f32 to vector<16x128xf32>
    %78 = arith.mulf %77, %76 : vector<16x128xf32>
    %79 = arith.addf %70, %78 : vector<16x128xf32>
    %c1_73 = arith.constant 1 : index
    %80 = memref.load %arg1[%c1_73] : memref<98xf32, #tpu.memory_space<smem>>
    %c0_74 = arith.constant 0 : index
    %c1_75 = arith.constant 1 : index
    %c0_76 = arith.constant 0 : index
    %c0_77 = arith.constant 0 : index
    %81 = vector.load %arg4[%c0_74, %c1_75, %c0_76, %c0_77] : memref<2x7x24x128xf32, #tpu.memory_space<vmem>>, vector<1x1x16x128xf32>
    %82 = vector.shape_cast %81 : vector<1x1x16x128xf32> to vector<16x128xf32>
    %83 = vector.broadcast %80 : f32 to vector<16x128xf32>
    %84 = arith.mulf %83, %82 : vector<16x128xf32>
    %85 = arith.addf %79, %84 : vector<16x128xf32>
    %c2_78 = arith.constant 2 : index
    %86 = memref.load %arg1[%c2_78] : memref<98xf32, #tpu.memory_space<smem>>
    %c0_79 = arith.constant 0 : index
    %c2_80 = arith.constant 2 : index
    %c0_81 = arith.constant 0 : index
    %c0_82 = arith.constant 0 : index
    %87 = vector.load %arg4[%c0_79, %c2_80, %c0_81, %c0_82] : memref<2x7x24x128xf32, #tpu.memory_space<vmem>>, vector<1x1x16x128xf32>
    %88 = vector.shape_cast %87 : vector<1x1x16x128xf32> to vector<16x128xf32>
    %89 = vector.broadcast %86 : f32 to vector<16x128xf32>
    %90 = arith.mulf %89, %88 : vector<16x128xf32>
    %91 = arith.addf %85, %90 : vector<16x128xf32>
    %c3_83 = arith.constant 3 : index
    %92 = memref.load %arg1[%c3_83] : memref<98xf32, #tpu.memory_space<smem>>
    %c0_84 = arith.constant 0 : index
    %c3_85 = arith.constant 3 : index
    %c0_86 = arith.constant 0 : index
    %c0_87 = arith.constant 0 : index
    %93 = vector.load %arg4[%c0_84, %c3_85, %c0_86, %c0_87] : memref<2x7x24x128xf32, #tpu.memory_space<vmem>>, vector<1x1x16x128xf32>
    %94 = vector.shape_cast %93 : vector<1x1x16x128xf32> to vector<16x128xf32>
    %95 = vector.broadcast %92 : f32 to vector<16x128xf32>
    %96 = arith.mulf %95, %94 : vector<16x128xf32>
    %97 = arith.addf %91, %96 : vector<16x128xf32>
    %c4_88 = arith.constant 4 : index
    %98 = memref.load %arg1[%c4_88] : memref<98xf32, #tpu.memory_space<smem>>
    %c0_89 = arith.constant 0 : index
    %c4_90 = arith.constant 4 : index
    %c0_91 = arith.constant 0 : index
    %c0_92 = arith.constant 0 : index
    %99 = vector.load %arg4[%c0_89, %c4_90, %c0_91, %c0_92] : memref<2x7x24x128xf32, #tpu.memory_space<vmem>>, vector<1x1x16x128xf32>
    %100 = vector.shape_cast %99 : vector<1x1x16x128xf32> to vector<16x128xf32>
    %101 = vector.broadcast %98 : f32 to vector<16x128xf32>
    %102 = arith.mulf %101, %100 : vector<16x128xf32>
    %103 = arith.addf %97, %102 : vector<16x128xf32>
    %c5_93 = arith.constant 5 : index
    %104 = memref.load %arg1[%c5_93] : memref<98xf32, #tpu.memory_space<smem>>
    %c0_94 = arith.constant 0 : index
    %c5_95 = arith.constant 5 : index
    %c0_96 = arith.constant 0 : index
    %c0_97 = arith.constant 0 : index
    %105 = vector.load %arg4[%c0_94, %c5_95, %c0_96, %c0_97] : memref<2x7x24x128xf32, #tpu.memory_space<vmem>>, vector<1x1x16x128xf32>
    %106 = vector.shape_cast %105 : vector<1x1x16x128xf32> to vector<16x128xf32>
    %107 = vector.broadcast %104 : f32 to vector<16x128xf32>
    %108 = arith.mulf %107, %106 : vector<16x128xf32>
    %109 = arith.addf %103, %108 : vector<16x128xf32>
    %c6_98 = arith.constant 6 : index
    %110 = memref.load %arg1[%c6_98] : memref<98xf32, #tpu.memory_space<smem>>
    %c0_99 = arith.constant 0 : index
    %c6_100 = arith.constant 6 : index
    %c0_101 = arith.constant 0 : index
    %c0_102 = arith.constant 0 : index
    %111 = vector.load %arg4[%c0_99, %c6_100, %c0_101, %c0_102] : memref<2x7x24x128xf32, #tpu.memory_space<vmem>>, vector<1x1x16x128xf32>
    %112 = vector.shape_cast %111 : vector<1x1x16x128xf32> to vector<16x128xf32>
    %113 = vector.broadcast %110 : f32 to vector<16x128xf32>
    %114 = arith.mulf %113, %112 : vector<16x128xf32>
    %115 = arith.addf %109, %114 : vector<16x128xf32>
    %c7 = arith.constant 7 : index
    %116 = memref.load %arg1[%c7] : memref<98xf32, #tpu.memory_space<smem>>
    %c0_103 = arith.constant 0 : index
    %c0_104 = arith.constant 0 : index
    %c1_105 = arith.constant 1 : index
    %c0_106 = arith.constant 0 : index
    %117 = vector.load %arg4[%c0_103, %c0_104, %c1_105, %c0_106] : memref<2x7x24x128xf32, #tpu.memory_space<vmem>>, vector<1x1x16x128xf32>
    %118 = vector.shape_cast %117 : vector<1x1x16x128xf32> to vector<16x128xf32>
    %119 = vector.broadcast %116 : f32 to vector<16x128xf32>
    %120 = arith.mulf %119, %118 : vector<16x128xf32>
    %121 = arith.addf %71, %120 : vector<16x128xf32>
    %c8 = arith.constant 8 : index
    %122 = memref.load %arg1[%c8] : memref<98xf32, #tpu.memory_space<smem>>
    %c0_107 = arith.constant 0 : index
    %c1_108 = arith.constant 1 : index
    %c1_109 = arith.constant 1 : index
    %c0_110 = arith.constant 0 : index
    %123 = vector.load %arg4[%c0_107, %c1_108, %c1_109, %c0_110] : memref<2x7x24x128xf32, #tpu.memory_space<vmem>>, vector<1x1x16x128xf32>
    %124 = vector.shape_cast %123 : vector<1x1x16x128xf32> to vector<16x128xf32>
    %125 = vector.broadcast %122 : f32 to vector<16x128xf32>
    %126 = arith.mulf %125, %124 : vector<16x128xf32>
    %127 = arith.addf %121, %126 : vector<16x128xf32>
    %c9 = arith.constant 9 : index
    %128 = memref.load %arg1[%c9] : memref<98xf32, #tpu.memory_space<smem>>
    %c0_111 = arith.constant 0 : index
    %c2_112 = arith.constant 2 : index
    %c1_113 = arith.constant 1 : index
    %c0_114 = arith.constant 0 : index
    %129 = vector.load %arg4[%c0_111, %c2_112, %c1_113, %c0_114] : memref<2x7x24x128xf32, #tpu.memory_space<vmem>>, vector<1x1x16x128xf32>
    %130 = vector.shape_cast %129 : vector<1x1x16x128xf32> to vector<16x128xf32>
    %131 = vector.broadcast %128 : f32 to vector<16x128xf32>
    %132 = arith.mulf %131, %130 : vector<16x128xf32>
    %133 = arith.addf %127, %132 : vector<16x128xf32>
    %c10 = arith.constant 10 : index
    %134 = memref.load %arg1[%c10] : memref<98xf32, #tpu.memory_space<smem>>
    %c0_115 = arith.constant 0 : index
    %c3_116 = arith.constant 3 : index
    %c1_117 = arith.constant 1 : index
    %c0_118 = arith.constant 0 : index
    %135 = vector.load %arg4[%c0_115, %c3_116, %c1_117, %c0_118] : memref<2x7x24x128xf32, #tpu.memory_space<vmem>>, vector<1x1x16x128xf32>
    %136 = vector.shape_cast %135 : vector<1x1x16x128xf32> to vector<16x128xf32>
    %137 = vector.broadcast %134 : f32 to vector<16x128xf32>
    %138 = arith.mulf %137, %136 : vector<16x128xf32>
    %139 = arith.addf %133, %138 : vector<16x128xf32>
    %c11 = arith.constant 11 : index
    %140 = memref.load %arg1[%c11] : memref<98xf32, #tpu.memory_space<smem>>
    %c0_119 = arith.constant 0 : index
    %c4_120 = arith.constant 4 : index
    %c1_121 = arith.constant 1 : index
    %c0_122 = arith.constant 0 : index
    %141 = vector.load %arg4[%c0_119, %c4_120, %c1_121, %c0_122] : memref<2x7x24x128xf32, #tpu.memory_space<vmem>>, vector<1x1x16x128xf32>
    %142 = vector.shape_cast %141 : vector<1x1x16x128xf32> to vector<16x128xf32>
    %143 = vector.broadcast %140 : f32 to vector<16x128xf32>
    %144 = arith.mulf %143, %142 : vector<16x128xf32>
    %145 = arith.addf %139, %144 : vector<16x128xf32>
    %c12 = arith.constant 12 : index
    %146 = memref.load %arg1[%c12] : memref<98xf32, #tpu.memory_space<smem>>
    %c0_123 = arith.constant 0 : index
    %c5_124 = arith.constant 5 : index
    %c1_125 = arith.constant 1 : index
    %c0_126 = arith.constant 0 : index
    %147 = vector.load %arg4[%c0_123, %c5_124, %c1_125, %c0_126] : memref<2x7x24x128xf32, #tpu.memory_space<vmem>>, vector<1x1x16x128xf32>
    %148 = vector.shape_cast %147 : vector<1x1x16x128xf32> to vector<16x128xf32>
    %149 = vector.broadcast %146 : f32 to vector<16x128xf32>
    %150 = arith.mulf %149, %148 : vector<16x128xf32>
    %151 = arith.addf %145, %150 : vector<16x128xf32>
    %c13 = arith.constant 13 : index
    %152 = memref.load %arg1[%c13] : memref<98xf32, #tpu.memory_space<smem>>
    %c0_127 = arith.constant 0 : index
    %c6_128 = arith.constant 6 : index
    %c1_129 = arith.constant 1 : index
    %c0_130 = arith.constant 0 : index
    %153 = vector.load %arg4[%c0_127, %c6_128, %c1_129, %c0_130] : memref<2x7x24x128xf32, #tpu.memory_space<vmem>>, vector<1x1x16x128xf32>
    %154 = vector.shape_cast %153 : vector<1x1x16x128xf32> to vector<16x128xf32>
    %155 = vector.broadcast %152 : f32 to vector<16x128xf32>
    %156 = arith.mulf %155, %154 : vector<16x128xf32>
    %157 = arith.addf %151, %156 : vector<16x128xf32>
    %c14 = arith.constant 14 : index
    %158 = memref.load %arg1[%c14] : memref<98xf32, #tpu.memory_space<smem>>
    %c0_131 = arith.constant 0 : index
    %c0_132 = arith.constant 0 : index
    %c2_133 = arith.constant 2 : index
    %c0_134 = arith.constant 0 : index
    %159 = vector.load %arg4[%c0_131, %c0_132, %c2_133, %c0_134] : memref<2x7x24x128xf32, #tpu.memory_space<vmem>>, vector<1x1x16x128xf32>
    %160 = vector.shape_cast %159 : vector<1x1x16x128xf32> to vector<16x128xf32>
    %161 = vector.broadcast %158 : f32 to vector<16x128xf32>
    %162 = arith.mulf %161, %160 : vector<16x128xf32>
    %163 = arith.addf %115, %162 : vector<16x128xf32>
    %c15 = arith.constant 15 : index
    %164 = memref.load %arg1[%c15] : memref<98xf32, #tpu.memory_space<smem>>
    %c0_135 = arith.constant 0 : index
    %c1_136 = arith.constant 1 : index
    %c2_137 = arith.constant 2 : index
    %c0_138 = arith.constant 0 : index
    %165 = vector.load %arg4[%c0_135, %c1_136, %c2_137, %c0_138] : memref<2x7x24x128xf32, #tpu.memory_space<vmem>>, vector<1x1x16x128xf32>
    %166 = vector.shape_cast %165 : vector<1x1x16x128xf32> to vector<16x128xf32>
    %167 = vector.broadcast %164 : f32 to vector<16x128xf32>
    %168 = arith.mulf %167, %166 : vector<16x128xf32>
    %169 = arith.addf %163, %168 : vector<16x128xf32>
    %c16 = arith.constant 16 : index
    %170 = memref.load %arg1[%c16] : memref<98xf32, #tpu.memory_space<smem>>
    %c0_139 = arith.constant 0 : index
    %c2_140 = arith.constant 2 : index
    %c2_141 = arith.constant 2 : index
    %c0_142 = arith.constant 0 : index
    %171 = vector.load %arg4[%c0_139, %c2_140, %c2_141, %c0_142] : memref<2x7x24x128xf32, #tpu.memory_space<vmem>>, vector<1x1x16x128xf32>
    %172 = vector.shape_cast %171 : vector<1x1x16x128xf32> to vector<16x128xf32>
    %173 = vector.broadcast %170 : f32 to vector<16x128xf32>
    %174 = arith.mulf %173, %172 : vector<16x128xf32>
    %175 = arith.addf %169, %174 : vector<16x128xf32>
    %c17 = arith.constant 17 : index
    %176 = memref.load %arg1[%c17] : memref<98xf32, #tpu.memory_space<smem>>
    %c0_143 = arith.constant 0 : index
    %c3_144 = arith.constant 3 : index
    %c2_145 = arith.constant 2 : index
    %c0_146 = arith.constant 0 : index
    %177 = vector.load %arg4[%c0_143, %c3_144, %c2_145, %c0_146] : memref<2x7x24x128xf32, #tpu.memory_space<vmem>>, vector<1x1x16x128xf32>
    %178 = vector.shape_cast %177 : vector<1x1x16x128xf32> to vector<16x128xf32>
    %179 = vector.broadcast %176 : f32 to vector<16x128xf32>
    %180 = arith.mulf %179, %178 : vector<16x128xf32>
    %181 = arith.addf %175, %180 : vector<16x128xf32>
    %c18 = arith.constant 18 : index
    %182 = memref.load %arg1[%c18] : memref<98xf32, #tpu.memory_space<smem>>
    %c0_147 = arith.constant 0 : index
    %c4_148 = arith.constant 4 : index
    %c2_149 = arith.constant 2 : index
    %c0_150 = arith.constant 0 : index
    %183 = vector.load %arg4[%c0_147, %c4_148, %c2_149, %c0_150] : memref<2x7x24x128xf32, #tpu.memory_space<vmem>>, vector<1x1x16x128xf32>
    %184 = vector.shape_cast %183 : vector<1x1x16x128xf32> to vector<16x128xf32>
    %185 = vector.broadcast %182 : f32 to vector<16x128xf32>
    %186 = arith.mulf %185, %184 : vector<16x128xf32>
    %187 = arith.addf %181, %186 : vector<16x128xf32>
    %c19 = arith.constant 19 : index
    %188 = memref.load %arg1[%c19] : memref<98xf32, #tpu.memory_space<smem>>
    %c0_151 = arith.constant 0 : index
    %c5_152 = arith.constant 5 : index
    %c2_153 = arith.constant 2 : index
    %c0_154 = arith.constant 0 : index
    %189 = vector.load %arg4[%c0_151, %c5_152, %c2_153, %c0_154] : memref<2x7x24x128xf32, #tpu.memory_space<vmem>>, vector<1x1x16x128xf32>
    %190 = vector.shape_cast %189 : vector<1x1x16x128xf32> to vector<16x128xf32>
    %191 = vector.broadcast %188 : f32 to vector<16x128xf32>
    %192 = arith.mulf %191, %190 : vector<16x128xf32>
    %193 = arith.addf %187, %192 : vector<16x128xf32>
    %c20 = arith.constant 20 : index
    %194 = memref.load %arg1[%c20] : memref<98xf32, #tpu.memory_space<smem>>
    %c0_155 = arith.constant 0 : index
    %c6_156 = arith.constant 6 : index
    %c2_157 = arith.constant 2 : index
    %c0_158 = arith.constant 0 : index
    %195 = vector.load %arg4[%c0_155, %c6_156, %c2_157, %c0_158] : memref<2x7x24x128xf32, #tpu.memory_space<vmem>>, vector<1x1x16x128xf32>
    %196 = vector.shape_cast %195 : vector<1x1x16x128xf32> to vector<16x128xf32>
    %197 = vector.broadcast %194 : f32 to vector<16x128xf32>
    %198 = arith.mulf %197, %196 : vector<16x128xf32>
    %199 = arith.addf %193, %198 : vector<16x128xf32>
    %c21 = arith.constant 21 : index
    %200 = memref.load %arg1[%c21] : memref<98xf32, #tpu.memory_space<smem>>
    %c0_159 = arith.constant 0 : index
    %c0_160 = arith.constant 0 : index
    %c3_161 = arith.constant 3 : index
    %c0_162 = arith.constant 0 : index
    %201 = vector.load %arg4[%c0_159, %c0_160, %c3_161, %c0_162] : memref<2x7x24x128xf32, #tpu.memory_space<vmem>>, vector<1x1x16x128xf32>
    %202 = vector.shape_cast %201 : vector<1x1x16x128xf32> to vector<16x128xf32>
    %203 = vector.broadcast %200 : f32 to vector<16x128xf32>
    %204 = arith.mulf %203, %202 : vector<16x128xf32>
    %205 = arith.addf %157, %204 : vector<16x128xf32>
    %c22 = arith.constant 22 : index
    %206 = memref.load %arg1[%c22] : memref<98xf32, #tpu.memory_space<smem>>
    %c0_163 = arith.constant 0 : index
    %c1_164 = arith.constant 1 : index
    %c3_165 = arith.constant 3 : index
    %c0_166 = arith.constant 0 : index
    %207 = vector.load %arg4[%c0_163, %c1_164, %c3_165, %c0_166] : memref<2x7x24x128xf32, #tpu.memory_space<vmem>>, vector<1x1x16x128xf32>
    %208 = vector.shape_cast %207 : vector<1x1x16x128xf32> to vector<16x128xf32>
    %209 = vector.broadcast %206 : f32 to vector<16x128xf32>
    %210 = arith.mulf %209, %208 : vector<16x128xf32>
    %211 = arith.addf %205, %210 : vector<16x128xf32>
    %c23 = arith.constant 23 : index
    %212 = memref.load %arg1[%c23] : memref<98xf32, #tpu.memory_space<smem>>
    %c0_167 = arith.constant 0 : index
    %c2_168 = arith.constant 2 : index
    %c3_169 = arith.constant 3 : index
    %c0_170 = arith.constant 0 : index
    %213 = vector.load %arg4[%c0_167, %c2_168, %c3_169, %c0_170] : memref<2x7x24x128xf32, #tpu.memory_space<vmem>>, vector<1x1x16x128xf32>
    %214 = vector.shape_cast %213 : vector<1x1x16x128xf32> to vector<16x128xf32>
    %215 = vector.broadcast %212 : f32 to vector<16x128xf32>
    %216 = arith.mulf %215, %214 : vector<16x128xf32>
    %217 = arith.addf %211, %216 : vector<16x128xf32>
    %c24 = arith.constant 24 : index
    %218 = memref.load %arg1[%c24] : memref<98xf32, #tpu.memory_space<smem>>
    %c0_171 = arith.constant 0 : index
    %c3_172 = arith.constant 3 : index
    %c3_173 = arith.constant 3 : index
    %c0_174 = arith.constant 0 : index
    %219 = vector.load %arg4[%c0_171, %c3_172, %c3_173, %c0_174] : memref<2x7x24x128xf32, #tpu.memory_space<vmem>>, vector<1x1x16x128xf32>
    %220 = vector.shape_cast %219 : vector<1x1x16x128xf32> to vector<16x128xf32>
    %221 = vector.broadcast %218 : f32 to vector<16x128xf32>
    %222 = arith.mulf %221, %220 : vector<16x128xf32>
    %223 = arith.addf %217, %222 : vector<16x128xf32>
    %c25 = arith.constant 25 : index
    %224 = memref.load %arg1[%c25] : memref<98xf32, #tpu.memory_space<smem>>
    %c0_175 = arith.constant 0 : index
    %c4_176 = arith.constant 4 : index
    %c3_177 = arith.constant 3 : index
    %c0_178 = arith.constant 0 : index
    %225 = vector.load %arg4[%c0_175, %c4_176, %c3_177, %c0_178] : memref<2x7x24x128xf32, #tpu.memory_space<vmem>>, vector<1x1x16x128xf32>
    %226 = vector.shape_cast %225 : vector<1x1x16x128xf32> to vector<16x128xf32>
    %227 = vector.broadcast %224 : f32 to vector<16x128xf32>
    %228 = arith.mulf %227, %226 : vector<16x128xf32>
    %229 = arith.addf %223, %228 : vector<16x128xf32>
    %c26 = arith.constant 26 : index
    %230 = memref.load %arg1[%c26] : memref<98xf32, #tpu.memory_space<smem>>
    %c0_179 = arith.constant 0 : index
    %c5_180 = arith.constant 5 : index
    %c3_181 = arith.constant 3 : index
    %c0_182 = arith.constant 0 : index
    %231 = vector.load %arg4[%c0_179, %c5_180, %c3_181, %c0_182] : memref<2x7x24x128xf32, #tpu.memory_space<vmem>>, vector<1x1x16x128xf32>
    %232 = vector.shape_cast %231 : vector<1x1x16x128xf32> to vector<16x128xf32>
    %233 = vector.broadcast %230 : f32 to vector<16x128xf32>
    %234 = arith.mulf %233, %232 : vector<16x128xf32>
    %235 = arith.addf %229, %234 : vector<16x128xf32>
    %c27 = arith.constant 27 : index
    %236 = memref.load %arg1[%c27] : memref<98xf32, #tpu.memory_space<smem>>
    %c0_183 = arith.constant 0 : index
    %c6_184 = arith.constant 6 : index
    %c3_185 = arith.constant 3 : index
    %c0_186 = arith.constant 0 : index
    %237 = vector.load %arg4[%c0_183, %c6_184, %c3_185, %c0_186] : memref<2x7x24x128xf32, #tpu.memory_space<vmem>>, vector<1x1x16x128xf32>
    %238 = vector.shape_cast %237 : vector<1x1x16x128xf32> to vector<16x128xf32>
    %239 = vector.broadcast %236 : f32 to vector<16x128xf32>
    %240 = arith.mulf %239, %238 : vector<16x128xf32>
    %241 = arith.addf %235, %240 : vector<16x128xf32>
    %c28 = arith.constant 28 : index
    %242 = memref.load %arg1[%c28] : memref<98xf32, #tpu.memory_space<smem>>
    %c0_187 = arith.constant 0 : index
    %c0_188 = arith.constant 0 : index
    %c4_189 = arith.constant 4 : index
    %c0_190 = arith.constant 0 : index
    %243 = vector.load %arg4[%c0_187, %c0_188, %c4_189, %c0_190] : memref<2x7x24x128xf32, #tpu.memory_space<vmem>>, vector<1x1x16x128xf32>
    %244 = vector.shape_cast %243 : vector<1x1x16x128xf32> to vector<16x128xf32>
    %245 = vector.broadcast %242 : f32 to vector<16x128xf32>
    %246 = arith.mulf %245, %244 : vector<16x128xf32>
    %247 = arith.addf %199, %246 : vector<16x128xf32>
    %c29 = arith.constant 29 : index
    %248 = memref.load %arg1[%c29] : memref<98xf32, #tpu.memory_space<smem>>
    %c0_191 = arith.constant 0 : index
    %c1_192 = arith.constant 1 : index
    %c4_193 = arith.constant 4 : index
    %c0_194 = arith.constant 0 : index
    %249 = vector.load %arg4[%c0_191, %c1_192, %c4_193, %c0_194] : memref<2x7x24x128xf32, #tpu.memory_space<vmem>>, vector<1x1x16x128xf32>
    %250 = vector.shape_cast %249 : vector<1x1x16x128xf32> to vector<16x128xf32>
    %251 = vector.broadcast %248 : f32 to vector<16x128xf32>
    %252 = arith.mulf %251, %250 : vector<16x128xf32>
    %253 = arith.addf %247, %252 : vector<16x128xf32>
    %c30 = arith.constant 30 : index
    %254 = memref.load %arg1[%c30] : memref<98xf32, #tpu.memory_space<smem>>
    %c0_195 = arith.constant 0 : index
    %c2_196 = arith.constant 2 : index
    %c4_197 = arith.constant 4 : index
    %c0_198 = arith.constant 0 : index
    %255 = vector.load %arg4[%c0_195, %c2_196, %c4_197, %c0_198] : memref<2x7x24x128xf32, #tpu.memory_space<vmem>>, vector<1x1x16x128xf32>
    %256 = vector.shape_cast %255 : vector<1x1x16x128xf32> to vector<16x128xf32>
    %257 = vector.broadcast %254 : f32 to vector<16x128xf32>
    %258 = arith.mulf %257, %256 : vector<16x128xf32>
    %259 = arith.addf %253, %258 : vector<16x128xf32>
    %c31 = arith.constant 31 : index
    %260 = memref.load %arg1[%c31] : memref<98xf32, #tpu.memory_space<smem>>
    %c0_199 = arith.constant 0 : index
    %c3_200 = arith.constant 3 : index
    %c4_201 = arith.constant 4 : index
    %c0_202 = arith.constant 0 : index
    %261 = vector.load %arg4[%c0_199, %c3_200, %c4_201, %c0_202] : memref<2x7x24x128xf32, #tpu.memory_space<vmem>>, vector<1x1x16x128xf32>
    %262 = vector.shape_cast %261 : vector<1x1x16x128xf32> to vector<16x128xf32>
    %263 = vector.broadcast %260 : f32 to vector<16x128xf32>
    %264 = arith.mulf %263, %262 : vector<16x128xf32>
    %265 = arith.addf %259, %264 : vector<16x128xf32>
    %c32 = arith.constant 32 : index
    %266 = memref.load %arg1[%c32] : memref<98xf32, #tpu.memory_space<smem>>
    %c0_203 = arith.constant 0 : index
    %c4_204 = arith.constant 4 : index
    %c4_205 = arith.constant 4 : index
    %c0_206 = arith.constant 0 : index
    %267 = vector.load %arg4[%c0_203, %c4_204, %c4_205, %c0_206] : memref<2x7x24x128xf32, #tpu.memory_space<vmem>>, vector<1x1x16x128xf32>
    %268 = vector.shape_cast %267 : vector<1x1x16x128xf32> to vector<16x128xf32>
    %269 = vector.broadcast %266 : f32 to vector<16x128xf32>
    %270 = arith.mulf %269, %268 : vector<16x128xf32>
    %271 = arith.addf %265, %270 : vector<16x128xf32>
    %c33 = arith.constant 33 : index
    %272 = memref.load %arg1[%c33] : memref<98xf32, #tpu.memory_space<smem>>
    %c0_207 = arith.constant 0 : index
    %c5_208 = arith.constant 5 : index
    %c4_209 = arith.constant 4 : index
    %c0_210 = arith.constant 0 : index
    %273 = vector.load %arg4[%c0_207, %c5_208, %c4_209, %c0_210] : memref<2x7x24x128xf32, #tpu.memory_space<vmem>>, vector<1x1x16x128xf32>
    %274 = vector.shape_cast %273 : vector<1x1x16x128xf32> to vector<16x128xf32>
    %275 = vector.broadcast %272 : f32 to vector<16x128xf32>
    %276 = arith.mulf %275, %274 : vector<16x128xf32>
    %277 = arith.addf %271, %276 : vector<16x128xf32>
    %c34 = arith.constant 34 : index
    %278 = memref.load %arg1[%c34] : memref<98xf32, #tpu.memory_space<smem>>
    %c0_211 = arith.constant 0 : index
    %c6_212 = arith.constant 6 : index
    %c4_213 = arith.constant 4 : index
    %c0_214 = arith.constant 0 : index
    %279 = vector.load %arg4[%c0_211, %c6_212, %c4_213, %c0_214] : memref<2x7x24x128xf32, #tpu.memory_space<vmem>>, vector<1x1x16x128xf32>
    %280 = vector.shape_cast %279 : vector<1x1x16x128xf32> to vector<16x128xf32>
    %281 = vector.broadcast %278 : f32 to vector<16x128xf32>
    %282 = arith.mulf %281, %280 : vector<16x128xf32>
    %283 = arith.addf %277, %282 : vector<16x128xf32>
    %c35 = arith.constant 35 : index
    %284 = memref.load %arg1[%c35] : memref<98xf32, #tpu.memory_space<smem>>
    %c0_215 = arith.constant 0 : index
    %c0_216 = arith.constant 0 : index
    %c5_217 = arith.constant 5 : index
    %c0_218 = arith.constant 0 : index
    %285 = vector.load %arg4[%c0_215, %c0_216, %c5_217, %c0_218] : memref<2x7x24x128xf32, #tpu.memory_space<vmem>>, vector<1x1x16x128xf32>
    %286 = vector.shape_cast %285 : vector<1x1x16x128xf32> to vector<16x128xf32>
    %287 = vector.broadcast %284 : f32 to vector<16x128xf32>
    %288 = arith.mulf %287, %286 : vector<16x128xf32>
    %289 = arith.addf %241, %288 : vector<16x128xf32>
    %c36 = arith.constant 36 : index
    %290 = memref.load %arg1[%c36] : memref<98xf32, #tpu.memory_space<smem>>
    %c0_219 = arith.constant 0 : index
    %c1_220 = arith.constant 1 : index
    %c5_221 = arith.constant 5 : index
    %c0_222 = arith.constant 0 : index
    %291 = vector.load %arg4[%c0_219, %c1_220, %c5_221, %c0_222] : memref<2x7x24x128xf32, #tpu.memory_space<vmem>>, vector<1x1x16x128xf32>
    %292 = vector.shape_cast %291 : vector<1x1x16x128xf32> to vector<16x128xf32>
    %293 = vector.broadcast %290 : f32 to vector<16x128xf32>
    %294 = arith.mulf %293, %292 : vector<16x128xf32>
    %295 = arith.addf %289, %294 : vector<16x128xf32>
    %c37 = arith.constant 37 : index
    %296 = memref.load %arg1[%c37] : memref<98xf32, #tpu.memory_space<smem>>
    %c0_223 = arith.constant 0 : index
    %c2_224 = arith.constant 2 : index
    %c5_225 = arith.constant 5 : index
    %c0_226 = arith.constant 0 : index
    %297 = vector.load %arg4[%c0_223, %c2_224, %c5_225, %c0_226] : memref<2x7x24x128xf32, #tpu.memory_space<vmem>>, vector<1x1x16x128xf32>
    %298 = vector.shape_cast %297 : vector<1x1x16x128xf32> to vector<16x128xf32>
    %299 = vector.broadcast %296 : f32 to vector<16x128xf32>
    %300 = arith.mulf %299, %298 : vector<16x128xf32>
    %301 = arith.addf %295, %300 : vector<16x128xf32>
    %c38 = arith.constant 38 : index
    %302 = memref.load %arg1[%c38] : memref<98xf32, #tpu.memory_space<smem>>
    %c0_227 = arith.constant 0 : index
    %c3_228 = arith.constant 3 : index
    %c5_229 = arith.constant 5 : index
    %c0_230 = arith.constant 0 : index
    %303 = vector.load %arg4[%c0_227, %c3_228, %c5_229, %c0_230] : memref<2x7x24x128xf32, #tpu.memory_space<vmem>>, vector<1x1x16x128xf32>
    %304 = vector.shape_cast %303 : vector<1x1x16x128xf32> to vector<16x128xf32>
    %305 = vector.broadcast %302 : f32 to vector<16x128xf32>
    %306 = arith.mulf %305, %304 : vector<16x128xf32>
    %307 = arith.addf %301, %306 : vector<16x128xf32>
    %c39 = arith.constant 39 : index
    %308 = memref.load %arg1[%c39] : memref<98xf32, #tpu.memory_space<smem>>
    %c0_231 = arith.constant 0 : index
    %c4_232 = arith.constant 4 : index
    %c5_233 = arith.constant 5 : index
    %c0_234 = arith.constant 0 : index
    %309 = vector.load %arg4[%c0_231, %c4_232, %c5_233, %c0_234] : memref<2x7x24x128xf32, #tpu.memory_space<vmem>>, vector<1x1x16x128xf32>
    %310 = vector.shape_cast %309 : vector<1x1x16x128xf32> to vector<16x128xf32>
    %311 = vector.broadcast %308 : f32 to vector<16x128xf32>
    %312 = arith.mulf %311, %310 : vector<16x128xf32>
    %313 = arith.addf %307, %312 : vector<16x128xf32>
    %c40 = arith.constant 40 : index
    %314 = memref.load %arg1[%c40] : memref<98xf32, #tpu.memory_space<smem>>
    %c0_235 = arith.constant 0 : index
    %c5_236 = arith.constant 5 : index
    %c5_237 = arith.constant 5 : index
    %c0_238 = arith.constant 0 : index
    %315 = vector.load %arg4[%c0_235, %c5_236, %c5_237, %c0_238] : memref<2x7x24x128xf32, #tpu.memory_space<vmem>>, vector<1x1x16x128xf32>
    %316 = vector.shape_cast %315 : vector<1x1x16x128xf32> to vector<16x128xf32>
    %317 = vector.broadcast %314 : f32 to vector<16x128xf32>
    %318 = arith.mulf %317, %316 : vector<16x128xf32>
    %319 = arith.addf %313, %318 : vector<16x128xf32>
    %c41 = arith.constant 41 : index
    %320 = memref.load %arg1[%c41] : memref<98xf32, #tpu.memory_space<smem>>
    %c0_239 = arith.constant 0 : index
    %c6_240 = arith.constant 6 : index
    %c5_241 = arith.constant 5 : index
    %c0_242 = arith.constant 0 : index
    %321 = vector.load %arg4[%c0_239, %c6_240, %c5_241, %c0_242] : memref<2x7x24x128xf32, #tpu.memory_space<vmem>>, vector<1x1x16x128xf32>
    %322 = vector.shape_cast %321 : vector<1x1x16x128xf32> to vector<16x128xf32>
    %323 = vector.broadcast %320 : f32 to vector<16x128xf32>
    %324 = arith.mulf %323, %322 : vector<16x128xf32>
    %325 = arith.addf %319, %324 : vector<16x128xf32>
    %c42 = arith.constant 42 : index
    %326 = memref.load %arg1[%c42] : memref<98xf32, #tpu.memory_space<smem>>
    %c0_243 = arith.constant 0 : index
    %c0_244 = arith.constant 0 : index
    %c6_245 = arith.constant 6 : index
    %c0_246 = arith.constant 0 : index
    %327 = vector.load %arg4[%c0_243, %c0_244, %c6_245, %c0_246] : memref<2x7x24x128xf32, #tpu.memory_space<vmem>>, vector<1x1x16x128xf32>
    %328 = vector.shape_cast %327 : vector<1x1x16x128xf32> to vector<16x128xf32>
    %329 = vector.broadcast %326 : f32 to vector<16x128xf32>
    %330 = arith.mulf %329, %328 : vector<16x128xf32>
    %331 = arith.addf %283, %330 : vector<16x128xf32>
    %c43 = arith.constant 43 : index
    %332 = memref.load %arg1[%c43] : memref<98xf32, #tpu.memory_space<smem>>
    %c0_247 = arith.constant 0 : index
    %c1_248 = arith.constant 1 : index
    %c6_249 = arith.constant 6 : index
    %c0_250 = arith.constant 0 : index
    %333 = vector.load %arg4[%c0_247, %c1_248, %c6_249, %c0_250] : memref<2x7x24x128xf32, #tpu.memory_space<vmem>>, vector<1x1x16x128xf32>
    %334 = vector.shape_cast %333 : vector<1x1x16x128xf32> to vector<16x128xf32>
    %335 = vector.broadcast %332 : f32 to vector<16x128xf32>
    %336 = arith.mulf %335, %334 : vector<16x128xf32>
    %337 = arith.addf %331, %336 : vector<16x128xf32>
    %c44 = arith.constant 44 : index
    %338 = memref.load %arg1[%c44] : memref<98xf32, #tpu.memory_space<smem>>
    %c0_251 = arith.constant 0 : index
    %c2_252 = arith.constant 2 : index
    %c6_253 = arith.constant 6 : index
    %c0_254 = arith.constant 0 : index
    %339 = vector.load %arg4[%c0_251, %c2_252, %c6_253, %c0_254] : memref<2x7x24x128xf32, #tpu.memory_space<vmem>>, vector<1x1x16x128xf32>
    %340 = vector.shape_cast %339 : vector<1x1x16x128xf32> to vector<16x128xf32>
    %341 = vector.broadcast %338 : f32 to vector<16x128xf32>
    %342 = arith.mulf %341, %340 : vector<16x128xf32>
    %343 = arith.addf %337, %342 : vector<16x128xf32>
    %c45 = arith.constant 45 : index
    %344 = memref.load %arg1[%c45] : memref<98xf32, #tpu.memory_space<smem>>
    %c0_255 = arith.constant 0 : index
    %c3_256 = arith.constant 3 : index
    %c6_257 = arith.constant 6 : index
    %c0_258 = arith.constant 0 : index
    %345 = vector.load %arg4[%c0_255, %c3_256, %c6_257, %c0_258] : memref<2x7x24x128xf32, #tpu.memory_space<vmem>>, vector<1x1x16x128xf32>
    %346 = vector.shape_cast %345 : vector<1x1x16x128xf32> to vector<16x128xf32>
    %347 = vector.broadcast %344 : f32 to vector<16x128xf32>
    %348 = arith.mulf %347, %346 : vector<16x128xf32>
    %349 = arith.addf %343, %348 : vector<16x128xf32>
    %c46 = arith.constant 46 : index
    %350 = memref.load %arg1[%c46] : memref<98xf32, #tpu.memory_space<smem>>
    %c0_259 = arith.constant 0 : index
    %c4_260 = arith.constant 4 : index
    %c6_261 = arith.constant 6 : index
    %c0_262 = arith.constant 0 : index
    %351 = vector.load %arg4[%c0_259, %c4_260, %c6_261, %c0_262] : memref<2x7x24x128xf32, #tpu.memory_space<vmem>>, vector<1x1x16x128xf32>
    %352 = vector.shape_cast %351 : vector<1x1x16x128xf32> to vector<16x128xf32>
    %353 = vector.broadcast %350 : f32 to vector<16x128xf32>
    %354 = arith.mulf %353, %352 : vector<16x128xf32>
    %355 = arith.addf %349, %354 : vector<16x128xf32>
    %c47 = arith.constant 47 : index
    %356 = memref.load %arg1[%c47] : memref<98xf32, #tpu.memory_space<smem>>
    %c0_263 = arith.constant 0 : index
    %c5_264 = arith.constant 5 : index
    %c6_265 = arith.constant 6 : index
    %c0_266 = arith.constant 0 : index
    %357 = vector.load %arg4[%c0_263, %c5_264, %c6_265, %c0_266] : memref<2x7x24x128xf32, #tpu.memory_space<vmem>>, vector<1x1x16x128xf32>
    %358 = vector.shape_cast %357 : vector<1x1x16x128xf32> to vector<16x128xf32>
    %359 = vector.broadcast %356 : f32 to vector<16x128xf32>
    %360 = arith.mulf %359, %358 : vector<16x128xf32>
    %361 = arith.addf %355, %360 : vector<16x128xf32>
    %c48 = arith.constant 48 : index
    %362 = memref.load %arg1[%c48] : memref<98xf32, #tpu.memory_space<smem>>
    %c0_267 = arith.constant 0 : index
    %c6_268 = arith.constant 6 : index
    %c6_269 = arith.constant 6 : index
    %c0_270 = arith.constant 0 : index
    %363 = vector.load %arg4[%c0_267, %c6_268, %c6_269, %c0_270] : memref<2x7x24x128xf32, #tpu.memory_space<vmem>>, vector<1x1x16x128xf32>
    %364 = vector.shape_cast %363 : vector<1x1x16x128xf32> to vector<16x128xf32>
    %365 = vector.broadcast %362 : f32 to vector<16x128xf32>
    %366 = arith.mulf %365, %364 : vector<16x128xf32>
    %367 = arith.addf %361, %366 : vector<16x128xf32>
    %c49 = arith.constant 49 : index
    %368 = memref.load %arg1[%c49] : memref<98xf32, #tpu.memory_space<smem>>
    %c1_271 = arith.constant 1 : index
    %c0_272 = arith.constant 0 : index
    %c0_273 = arith.constant 0 : index
    %c0_274 = arith.constant 0 : index
    %369 = vector.load %arg4[%c1_271, %c0_272, %c0_273, %c0_274] : memref<2x7x24x128xf32, #tpu.memory_space<vmem>>, vector<1x1x16x128xf32>
    %370 = vector.shape_cast %369 : vector<1x1x16x128xf32> to vector<16x128xf32>
    %371 = vector.broadcast %368 : f32 to vector<16x128xf32>
    %372 = arith.mulf %371, %370 : vector<16x128xf32>
    %373 = arith.addf %72, %372 : vector<16x128xf32>
    %c50 = arith.constant 50 : index
    %374 = memref.load %arg1[%c50] : memref<98xf32, #tpu.memory_space<smem>>
    %c1_275 = arith.constant 1 : index
    %c1_276 = arith.constant 1 : index
    %c0_277 = arith.constant 0 : index
    %c0_278 = arith.constant 0 : index
    %375 = vector.load %arg4[%c1_275, %c1_276, %c0_277, %c0_278] : memref<2x7x24x128xf32, #tpu.memory_space<vmem>>, vector<1x1x16x128xf32>
    %376 = vector.shape_cast %375 : vector<1x1x16x128xf32> to vector<16x128xf32>
    %377 = vector.broadcast %374 : f32 to vector<16x128xf32>
    %378 = arith.mulf %377, %376 : vector<16x128xf32>
    %379 = arith.addf %373, %378 : vector<16x128xf32>
    %c51 = arith.constant 51 : index
    %380 = memref.load %arg1[%c51] : memref<98xf32, #tpu.memory_space<smem>>
    %c1_279 = arith.constant 1 : index
    %c2_280 = arith.constant 2 : index
    %c0_281 = arith.constant 0 : index
    %c0_282 = arith.constant 0 : index
    %381 = vector.load %arg4[%c1_279, %c2_280, %c0_281, %c0_282] : memref<2x7x24x128xf32, #tpu.memory_space<vmem>>, vector<1x1x16x128xf32>
    %382 = vector.shape_cast %381 : vector<1x1x16x128xf32> to vector<16x128xf32>
    %383 = vector.broadcast %380 : f32 to vector<16x128xf32>
    %384 = arith.mulf %383, %382 : vector<16x128xf32>
    %385 = arith.addf %379, %384 : vector<16x128xf32>
    %c52 = arith.constant 52 : index
    %386 = memref.load %arg1[%c52] : memref<98xf32, #tpu.memory_space<smem>>
    %c1_283 = arith.constant 1 : index
    %c3_284 = arith.constant 3 : index
    %c0_285 = arith.constant 0 : index
    %c0_286 = arith.constant 0 : index
    %387 = vector.load %arg4[%c1_283, %c3_284, %c0_285, %c0_286] : memref<2x7x24x128xf32, #tpu.memory_space<vmem>>, vector<1x1x16x128xf32>
    %388 = vector.shape_cast %387 : vector<1x1x16x128xf32> to vector<16x128xf32>
    %389 = vector.broadcast %386 : f32 to vector<16x128xf32>
    %390 = arith.mulf %389, %388 : vector<16x128xf32>
    %391 = arith.addf %385, %390 : vector<16x128xf32>
    %c53 = arith.constant 53 : index
    %392 = memref.load %arg1[%c53] : memref<98xf32, #tpu.memory_space<smem>>
    %c1_287 = arith.constant 1 : index
    %c4_288 = arith.constant 4 : index
    %c0_289 = arith.constant 0 : index
    %c0_290 = arith.constant 0 : index
    %393 = vector.load %arg4[%c1_287, %c4_288, %c0_289, %c0_290] : memref<2x7x24x128xf32, #tpu.memory_space<vmem>>, vector<1x1x16x128xf32>
    %394 = vector.shape_cast %393 : vector<1x1x16x128xf32> to vector<16x128xf32>
    %395 = vector.broadcast %392 : f32 to vector<16x128xf32>
    %396 = arith.mulf %395, %394 : vector<16x128xf32>
    %397 = arith.addf %391, %396 : vector<16x128xf32>
    %c54 = arith.constant 54 : index
    %398 = memref.load %arg1[%c54] : memref<98xf32, #tpu.memory_space<smem>>
    %c1_291 = arith.constant 1 : index
    %c5_292 = arith.constant 5 : index
    %c0_293 = arith.constant 0 : index
    %c0_294 = arith.constant 0 : index
    %399 = vector.load %arg4[%c1_291, %c5_292, %c0_293, %c0_294] : memref<2x7x24x128xf32, #tpu.memory_space<vmem>>, vector<1x1x16x128xf32>
    %400 = vector.shape_cast %399 : vector<1x1x16x128xf32> to vector<16x128xf32>
    %401 = vector.broadcast %398 : f32 to vector<16x128xf32>
    %402 = arith.mulf %401, %400 : vector<16x128xf32>
    %403 = arith.addf %397, %402 : vector<16x128xf32>
    %c55 = arith.constant 55 : index
    %404 = memref.load %arg1[%c55] : memref<98xf32, #tpu.memory_space<smem>>
    %c1_295 = arith.constant 1 : index
    %c6_296 = arith.constant 6 : index
    %c0_297 = arith.constant 0 : index
    %c0_298 = arith.constant 0 : index
    %405 = vector.load %arg4[%c1_295, %c6_296, %c0_297, %c0_298] : memref<2x7x24x128xf32, #tpu.memory_space<vmem>>, vector<1x1x16x128xf32>
    %406 = vector.shape_cast %405 : vector<1x1x16x128xf32> to vector<16x128xf32>
    %407 = vector.broadcast %404 : f32 to vector<16x128xf32>
    %408 = arith.mulf %407, %406 : vector<16x128xf32>
    %409 = arith.addf %403, %408 : vector<16x128xf32>
    %c56 = arith.constant 56 : index
    %410 = memref.load %arg1[%c56] : memref<98xf32, #tpu.memory_space<smem>>
    %c1_299 = arith.constant 1 : index
    %c0_300 = arith.constant 0 : index
    %c1_301 = arith.constant 1 : index
    %c0_302 = arith.constant 0 : index
    %411 = vector.load %arg4[%c1_299, %c0_300, %c1_301, %c0_302] : memref<2x7x24x128xf32, #tpu.memory_space<vmem>>, vector<1x1x16x128xf32>
    %412 = vector.shape_cast %411 : vector<1x1x16x128xf32> to vector<16x128xf32>
    %413 = vector.broadcast %410 : f32 to vector<16x128xf32>
    %414 = arith.mulf %413, %412 : vector<16x128xf32>
    %415 = arith.addf %73, %414 : vector<16x128xf32>
    %c57 = arith.constant 57 : index
    %416 = memref.load %arg1[%c57] : memref<98xf32, #tpu.memory_space<smem>>
    %c1_303 = arith.constant 1 : index
    %c1_304 = arith.constant 1 : index
    %c1_305 = arith.constant 1 : index
    %c0_306 = arith.constant 0 : index
    %417 = vector.load %arg4[%c1_303, %c1_304, %c1_305, %c0_306] : memref<2x7x24x128xf32, #tpu.memory_space<vmem>>, vector<1x1x16x128xf32>
    %418 = vector.shape_cast %417 : vector<1x1x16x128xf32> to vector<16x128xf32>
    %419 = vector.broadcast %416 : f32 to vector<16x128xf32>
    %420 = arith.mulf %419, %418 : vector<16x128xf32>
    %421 = arith.addf %415, %420 : vector<16x128xf32>
    %c58 = arith.constant 58 : index
    %422 = memref.load %arg1[%c58] : memref<98xf32, #tpu.memory_space<smem>>
    %c1_307 = arith.constant 1 : index
    %c2_308 = arith.constant 2 : index
    %c1_309 = arith.constant 1 : index
    %c0_310 = arith.constant 0 : index
    %423 = vector.load %arg4[%c1_307, %c2_308, %c1_309, %c0_310] : memref<2x7x24x128xf32, #tpu.memory_space<vmem>>, vector<1x1x16x128xf32>
    %424 = vector.shape_cast %423 : vector<1x1x16x128xf32> to vector<16x128xf32>
    %425 = vector.broadcast %422 : f32 to vector<16x128xf32>
    %426 = arith.mulf %425, %424 : vector<16x128xf32>
    %427 = arith.addf %421, %426 : vector<16x128xf32>
    %c59 = arith.constant 59 : index
    %428 = memref.load %arg1[%c59] : memref<98xf32, #tpu.memory_space<smem>>
    %c1_311 = arith.constant 1 : index
    %c3_312 = arith.constant 3 : index
    %c1_313 = arith.constant 1 : index
    %c0_314 = arith.constant 0 : index
    %429 = vector.load %arg4[%c1_311, %c3_312, %c1_313, %c0_314] : memref<2x7x24x128xf32, #tpu.memory_space<vmem>>, vector<1x1x16x128xf32>
    %430 = vector.shape_cast %429 : vector<1x1x16x128xf32> to vector<16x128xf32>
    %431 = vector.broadcast %428 : f32 to vector<16x128xf32>
    %432 = arith.mulf %431, %430 : vector<16x128xf32>
    %433 = arith.addf %427, %432 : vector<16x128xf32>
    %c60 = arith.constant 60 : index
    %434 = memref.load %arg1[%c60] : memref<98xf32, #tpu.memory_space<smem>>
    %c1_315 = arith.constant 1 : index
    %c4_316 = arith.constant 4 : index
    %c1_317 = arith.constant 1 : index
    %c0_318 = arith.constant 0 : index
    %435 = vector.load %arg4[%c1_315, %c4_316, %c1_317, %c0_318] : memref<2x7x24x128xf32, #tpu.memory_space<vmem>>, vector<1x1x16x128xf32>
    %436 = vector.shape_cast %435 : vector<1x1x16x128xf32> to vector<16x128xf32>
    %437 = vector.broadcast %434 : f32 to vector<16x128xf32>
    %438 = arith.mulf %437, %436 : vector<16x128xf32>
    %439 = arith.addf %433, %438 : vector<16x128xf32>
    %c61 = arith.constant 61 : index
    %440 = memref.load %arg1[%c61] : memref<98xf32, #tpu.memory_space<smem>>
    %c1_319 = arith.constant 1 : index
    %c5_320 = arith.constant 5 : index
    %c1_321 = arith.constant 1 : index
    %c0_322 = arith.constant 0 : index
    %441 = vector.load %arg4[%c1_319, %c5_320, %c1_321, %c0_322] : memref<2x7x24x128xf32, #tpu.memory_space<vmem>>, vector<1x1x16x128xf32>
    %442 = vector.shape_cast %441 : vector<1x1x16x128xf32> to vector<16x128xf32>
    %443 = vector.broadcast %440 : f32 to vector<16x128xf32>
    %444 = arith.mulf %443, %442 : vector<16x128xf32>
    %445 = arith.addf %439, %444 : vector<16x128xf32>
    %c62 = arith.constant 62 : index
    %446 = memref.load %arg1[%c62] : memref<98xf32, #tpu.memory_space<smem>>
    %c1_323 = arith.constant 1 : index
    %c6_324 = arith.constant 6 : index
    %c1_325 = arith.constant 1 : index
    %c0_326 = arith.constant 0 : index
    %447 = vector.load %arg4[%c1_323, %c6_324, %c1_325, %c0_326] : memref<2x7x24x128xf32, #tpu.memory_space<vmem>>, vector<1x1x16x128xf32>
    %448 = vector.shape_cast %447 : vector<1x1x16x128xf32> to vector<16x128xf32>
    %449 = vector.broadcast %446 : f32 to vector<16x128xf32>
    %450 = arith.mulf %449, %448 : vector<16x128xf32>
    %451 = arith.addf %445, %450 : vector<16x128xf32>
    %c63 = arith.constant 63 : index
    %452 = memref.load %arg1[%c63] : memref<98xf32, #tpu.memory_space<smem>>
    %c1_327 = arith.constant 1 : index
    %c0_328 = arith.constant 0 : index
    %c2_329 = arith.constant 2 : index
    %c0_330 = arith.constant 0 : index
    %453 = vector.load %arg4[%c1_327, %c0_328, %c2_329, %c0_330] : memref<2x7x24x128xf32, #tpu.memory_space<vmem>>, vector<1x1x16x128xf32>
    %454 = vector.shape_cast %453 : vector<1x1x16x128xf32> to vector<16x128xf32>
    %455 = vector.broadcast %452 : f32 to vector<16x128xf32>
    %456 = arith.mulf %455, %454 : vector<16x128xf32>
    %457 = arith.addf %409, %456 : vector<16x128xf32>
    %c64 = arith.constant 64 : index
    %458 = memref.load %arg1[%c64] : memref<98xf32, #tpu.memory_space<smem>>
    %c1_331 = arith.constant 1 : index
    %c1_332 = arith.constant 1 : index
    %c2_333 = arith.constant 2 : index
    %c0_334 = arith.constant 0 : index
    %459 = vector.load %arg4[%c1_331, %c1_332, %c2_333, %c0_334] : memref<2x7x24x128xf32, #tpu.memory_space<vmem>>, vector<1x1x16x128xf32>
    %460 = vector.shape_cast %459 : vector<1x1x16x128xf32> to vector<16x128xf32>
    %461 = vector.broadcast %458 : f32 to vector<16x128xf32>
    %462 = arith.mulf %461, %460 : vector<16x128xf32>
    %463 = arith.addf %457, %462 : vector<16x128xf32>
    %c65 = arith.constant 65 : index
    %464 = memref.load %arg1[%c65] : memref<98xf32, #tpu.memory_space<smem>>
    %c1_335 = arith.constant 1 : index
    %c2_336 = arith.constant 2 : index
    %c2_337 = arith.constant 2 : index
    %c0_338 = arith.constant 0 : index
    %465 = vector.load %arg4[%c1_335, %c2_336, %c2_337, %c0_338] : memref<2x7x24x128xf32, #tpu.memory_space<vmem>>, vector<1x1x16x128xf32>
    %466 = vector.shape_cast %465 : vector<1x1x16x128xf32> to vector<16x128xf32>
    %467 = vector.broadcast %464 : f32 to vector<16x128xf32>
    %468 = arith.mulf %467, %466 : vector<16x128xf32>
    %469 = arith.addf %463, %468 : vector<16x128xf32>
    %c66 = arith.constant 66 : index
    %470 = memref.load %arg1[%c66] : memref<98xf32, #tpu.memory_space<smem>>
    %c1_339 = arith.constant 1 : index
    %c3_340 = arith.constant 3 : index
    %c2_341 = arith.constant 2 : index
    %c0_342 = arith.constant 0 : index
    %471 = vector.load %arg4[%c1_339, %c3_340, %c2_341, %c0_342] : memref<2x7x24x128xf32, #tpu.memory_space<vmem>>, vector<1x1x16x128xf32>
    %472 = vector.shape_cast %471 : vector<1x1x16x128xf32> to vector<16x128xf32>
    %473 = vector.broadcast %470 : f32 to vector<16x128xf32>
    %474 = arith.mulf %473, %472 : vector<16x128xf32>
    %475 = arith.addf %469, %474 : vector<16x128xf32>
    %c67 = arith.constant 67 : index
    %476 = memref.load %arg1[%c67] : memref<98xf32, #tpu.memory_space<smem>>
    %c1_343 = arith.constant 1 : index
    %c4_344 = arith.constant 4 : index
    %c2_345 = arith.constant 2 : index
    %c0_346 = arith.constant 0 : index
    %477 = vector.load %arg4[%c1_343, %c4_344, %c2_345, %c0_346] : memref<2x7x24x128xf32, #tpu.memory_space<vmem>>, vector<1x1x16x128xf32>
    %478 = vector.shape_cast %477 : vector<1x1x16x128xf32> to vector<16x128xf32>
    %479 = vector.broadcast %476 : f32 to vector<16x128xf32>
    %480 = arith.mulf %479, %478 : vector<16x128xf32>
    %481 = arith.addf %475, %480 : vector<16x128xf32>
    %c68 = arith.constant 68 : index
    %482 = memref.load %arg1[%c68] : memref<98xf32, #tpu.memory_space<smem>>
    %c1_347 = arith.constant 1 : index
    %c5_348 = arith.constant 5 : index
    %c2_349 = arith.constant 2 : index
    %c0_350 = arith.constant 0 : index
    %483 = vector.load %arg4[%c1_347, %c5_348, %c2_349, %c0_350] : memref<2x7x24x128xf32, #tpu.memory_space<vmem>>, vector<1x1x16x128xf32>
    %484 = vector.shape_cast %483 : vector<1x1x16x128xf32> to vector<16x128xf32>
    %485 = vector.broadcast %482 : f32 to vector<16x128xf32>
    %486 = arith.mulf %485, %484 : vector<16x128xf32>
    %487 = arith.addf %481, %486 : vector<16x128xf32>
    %c69 = arith.constant 69 : index
    %488 = memref.load %arg1[%c69] : memref<98xf32, #tpu.memory_space<smem>>
    %c1_351 = arith.constant 1 : index
    %c6_352 = arith.constant 6 : index
    %c2_353 = arith.constant 2 : index
    %c0_354 = arith.constant 0 : index
    %489 = vector.load %arg4[%c1_351, %c6_352, %c2_353, %c0_354] : memref<2x7x24x128xf32, #tpu.memory_space<vmem>>, vector<1x1x16x128xf32>
    %490 = vector.shape_cast %489 : vector<1x1x16x128xf32> to vector<16x128xf32>
    %491 = vector.broadcast %488 : f32 to vector<16x128xf32>
    %492 = arith.mulf %491, %490 : vector<16x128xf32>
    %493 = arith.addf %487, %492 : vector<16x128xf32>
    %c70 = arith.constant 70 : index
    %494 = memref.load %arg1[%c70] : memref<98xf32, #tpu.memory_space<smem>>
    %c1_355 = arith.constant 1 : index
    %c0_356 = arith.constant 0 : index
    %c3_357 = arith.constant 3 : index
    %c0_358 = arith.constant 0 : index
    %495 = vector.load %arg4[%c1_355, %c0_356, %c3_357, %c0_358] : memref<2x7x24x128xf32, #tpu.memory_space<vmem>>, vector<1x1x16x128xf32>
    %496 = vector.shape_cast %495 : vector<1x1x16x128xf32> to vector<16x128xf32>
    %497 = vector.broadcast %494 : f32 to vector<16x128xf32>
    %498 = arith.mulf %497, %496 : vector<16x128xf32>
    %499 = arith.addf %451, %498 : vector<16x128xf32>
    %c71 = arith.constant 71 : index
    %500 = memref.load %arg1[%c71] : memref<98xf32, #tpu.memory_space<smem>>
    %c1_359 = arith.constant 1 : index
    %c1_360 = arith.constant 1 : index
    %c3_361 = arith.constant 3 : index
    %c0_362 = arith.constant 0 : index
    %501 = vector.load %arg4[%c1_359, %c1_360, %c3_361, %c0_362] : memref<2x7x24x128xf32, #tpu.memory_space<vmem>>, vector<1x1x16x128xf32>
    %502 = vector.shape_cast %501 : vector<1x1x16x128xf32> to vector<16x128xf32>
    %503 = vector.broadcast %500 : f32 to vector<16x128xf32>
    %504 = arith.mulf %503, %502 : vector<16x128xf32>
    %505 = arith.addf %499, %504 : vector<16x128xf32>
    %c72 = arith.constant 72 : index
    %506 = memref.load %arg1[%c72] : memref<98xf32, #tpu.memory_space<smem>>
    %c1_363 = arith.constant 1 : index
    %c2_364 = arith.constant 2 : index
    %c3_365 = arith.constant 3 : index
    %c0_366 = arith.constant 0 : index
    %507 = vector.load %arg4[%c1_363, %c2_364, %c3_365, %c0_366] : memref<2x7x24x128xf32, #tpu.memory_space<vmem>>, vector<1x1x16x128xf32>
    %508 = vector.shape_cast %507 : vector<1x1x16x128xf32> to vector<16x128xf32>
    %509 = vector.broadcast %506 : f32 to vector<16x128xf32>
    %510 = arith.mulf %509, %508 : vector<16x128xf32>
    %511 = arith.addf %505, %510 : vector<16x128xf32>
    %c73 = arith.constant 73 : index
    %512 = memref.load %arg1[%c73] : memref<98xf32, #tpu.memory_space<smem>>
    %c1_367 = arith.constant 1 : index
    %c3_368 = arith.constant 3 : index
    %c3_369 = arith.constant 3 : index
    %c0_370 = arith.constant 0 : index
    %513 = vector.load %arg4[%c1_367, %c3_368, %c3_369, %c0_370] : memref<2x7x24x128xf32, #tpu.memory_space<vmem>>, vector<1x1x16x128xf32>
    %514 = vector.shape_cast %513 : vector<1x1x16x128xf32> to vector<16x128xf32>
    %515 = vector.broadcast %512 : f32 to vector<16x128xf32>
    %516 = arith.mulf %515, %514 : vector<16x128xf32>
    %517 = arith.addf %511, %516 : vector<16x128xf32>
    %c74 = arith.constant 74 : index
    %518 = memref.load %arg1[%c74] : memref<98xf32, #tpu.memory_space<smem>>
    %c1_371 = arith.constant 1 : index
    %c4_372 = arith.constant 4 : index
    %c3_373 = arith.constant 3 : index
    %c0_374 = arith.constant 0 : index
    %519 = vector.load %arg4[%c1_371, %c4_372, %c3_373, %c0_374] : memref<2x7x24x128xf32, #tpu.memory_space<vmem>>, vector<1x1x16x128xf32>
    %520 = vector.shape_cast %519 : vector<1x1x16x128xf32> to vector<16x128xf32>
    %521 = vector.broadcast %518 : f32 to vector<16x128xf32>
    %522 = arith.mulf %521, %520 : vector<16x128xf32>
    %523 = arith.addf %517, %522 : vector<16x128xf32>
    %c75 = arith.constant 75 : index
    %524 = memref.load %arg1[%c75] : memref<98xf32, #tpu.memory_space<smem>>
    %c1_375 = arith.constant 1 : index
    %c5_376 = arith.constant 5 : index
    %c3_377 = arith.constant 3 : index
    %c0_378 = arith.constant 0 : index
    %525 = vector.load %arg4[%c1_375, %c5_376, %c3_377, %c0_378] : memref<2x7x24x128xf32, #tpu.memory_space<vmem>>, vector<1x1x16x128xf32>
    %526 = vector.shape_cast %525 : vector<1x1x16x128xf32> to vector<16x128xf32>
    %527 = vector.broadcast %524 : f32 to vector<16x128xf32>
    %528 = arith.mulf %527, %526 : vector<16x128xf32>
    %529 = arith.addf %523, %528 : vector<16x128xf32>
    %c76 = arith.constant 76 : index
    %530 = memref.load %arg1[%c76] : memref<98xf32, #tpu.memory_space<smem>>
    %c1_379 = arith.constant 1 : index
    %c6_380 = arith.constant 6 : index
    %c3_381 = arith.constant 3 : index
    %c0_382 = arith.constant 0 : index
    %531 = vector.load %arg4[%c1_379, %c6_380, %c3_381, %c0_382] : memref<2x7x24x128xf32, #tpu.memory_space<vmem>>, vector<1x1x16x128xf32>
    %532 = vector.shape_cast %531 : vector<1x1x16x128xf32> to vector<16x128xf32>
    %533 = vector.broadcast %530 : f32 to vector<16x128xf32>
    %534 = arith.mulf %533, %532 : vector<16x128xf32>
    %535 = arith.addf %529, %534 : vector<16x128xf32>
    %c77 = arith.constant 77 : index
    %536 = memref.load %arg1[%c77] : memref<98xf32, #tpu.memory_space<smem>>
    %c1_383 = arith.constant 1 : index
    %c0_384 = arith.constant 0 : index
    %c4_385 = arith.constant 4 : index
    %c0_386 = arith.constant 0 : index
    %537 = vector.load %arg4[%c1_383, %c0_384, %c4_385, %c0_386] : memref<2x7x24x128xf32, #tpu.memory_space<vmem>>, vector<1x1x16x128xf32>
    %538 = vector.shape_cast %537 : vector<1x1x16x128xf32> to vector<16x128xf32>
    %539 = vector.broadcast %536 : f32 to vector<16x128xf32>
    %540 = arith.mulf %539, %538 : vector<16x128xf32>
    %541 = arith.addf %493, %540 : vector<16x128xf32>
    %c78 = arith.constant 78 : index
    %542 = memref.load %arg1[%c78] : memref<98xf32, #tpu.memory_space<smem>>
    %c1_387 = arith.constant 1 : index
    %c1_388 = arith.constant 1 : index
    %c4_389 = arith.constant 4 : index
    %c0_390 = arith.constant 0 : index
    %543 = vector.load %arg4[%c1_387, %c1_388, %c4_389, %c0_390] : memref<2x7x24x128xf32, #tpu.memory_space<vmem>>, vector<1x1x16x128xf32>
    %544 = vector.shape_cast %543 : vector<1x1x16x128xf32> to vector<16x128xf32>
    %545 = vector.broadcast %542 : f32 to vector<16x128xf32>
    %546 = arith.mulf %545, %544 : vector<16x128xf32>
    %547 = arith.addf %541, %546 : vector<16x128xf32>
    %c79 = arith.constant 79 : index
    %548 = memref.load %arg1[%c79] : memref<98xf32, #tpu.memory_space<smem>>
    %c1_391 = arith.constant 1 : index
    %c2_392 = arith.constant 2 : index
    %c4_393 = arith.constant 4 : index
    %c0_394 = arith.constant 0 : index
    %549 = vector.load %arg4[%c1_391, %c2_392, %c4_393, %c0_394] : memref<2x7x24x128xf32, #tpu.memory_space<vmem>>, vector<1x1x16x128xf32>
    %550 = vector.shape_cast %549 : vector<1x1x16x128xf32> to vector<16x128xf32>
    %551 = vector.broadcast %548 : f32 to vector<16x128xf32>
    %552 = arith.mulf %551, %550 : vector<16x128xf32>
    %553 = arith.addf %547, %552 : vector<16x128xf32>
    %c80 = arith.constant 80 : index
    %554 = memref.load %arg1[%c80] : memref<98xf32, #tpu.memory_space<smem>>
    %c1_395 = arith.constant 1 : index
    %c3_396 = arith.constant 3 : index
    %c4_397 = arith.constant 4 : index
    %c0_398 = arith.constant 0 : index
    %555 = vector.load %arg4[%c1_395, %c3_396, %c4_397, %c0_398] : memref<2x7x24x128xf32, #tpu.memory_space<vmem>>, vector<1x1x16x128xf32>
    %556 = vector.shape_cast %555 : vector<1x1x16x128xf32> to vector<16x128xf32>
    %557 = vector.broadcast %554 : f32 to vector<16x128xf32>
    %558 = arith.mulf %557, %556 : vector<16x128xf32>
    %559 = arith.addf %553, %558 : vector<16x128xf32>
    %c81 = arith.constant 81 : index
    %560 = memref.load %arg1[%c81] : memref<98xf32, #tpu.memory_space<smem>>
    %c1_399 = arith.constant 1 : index
    %c4_400 = arith.constant 4 : index
    %c4_401 = arith.constant 4 : index
    %c0_402 = arith.constant 0 : index
    %561 = vector.load %arg4[%c1_399, %c4_400, %c4_401, %c0_402] : memref<2x7x24x128xf32, #tpu.memory_space<vmem>>, vector<1x1x16x128xf32>
    %562 = vector.shape_cast %561 : vector<1x1x16x128xf32> to vector<16x128xf32>
    %563 = vector.broadcast %560 : f32 to vector<16x128xf32>
    %564 = arith.mulf %563, %562 : vector<16x128xf32>
    %565 = arith.addf %559, %564 : vector<16x128xf32>
    %c82 = arith.constant 82 : index
    %566 = memref.load %arg1[%c82] : memref<98xf32, #tpu.memory_space<smem>>
    %c1_403 = arith.constant 1 : index
    %c5_404 = arith.constant 5 : index
    %c4_405 = arith.constant 4 : index
    %c0_406 = arith.constant 0 : index
    %567 = vector.load %arg4[%c1_403, %c5_404, %c4_405, %c0_406] : memref<2x7x24x128xf32, #tpu.memory_space<vmem>>, vector<1x1x16x128xf32>
    %568 = vector.shape_cast %567 : vector<1x1x16x128xf32> to vector<16x128xf32>
    %569 = vector.broadcast %566 : f32 to vector<16x128xf32>
    %570 = arith.mulf %569, %568 : vector<16x128xf32>
    %571 = arith.addf %565, %570 : vector<16x128xf32>
    %c83 = arith.constant 83 : index
    %572 = memref.load %arg1[%c83] : memref<98xf32, #tpu.memory_space<smem>>
    %c1_407 = arith.constant 1 : index
    %c6_408 = arith.constant 6 : index
    %c4_409 = arith.constant 4 : index
    %c0_410 = arith.constant 0 : index
    %573 = vector.load %arg4[%c1_407, %c6_408, %c4_409, %c0_410] : memref<2x7x24x128xf32, #tpu.memory_space<vmem>>, vector<1x1x16x128xf32>
    %574 = vector.shape_cast %573 : vector<1x1x16x128xf32> to vector<16x128xf32>
    %575 = vector.broadcast %572 : f32 to vector<16x128xf32>
    %576 = arith.mulf %575, %574 : vector<16x128xf32>
    %577 = arith.addf %571, %576 : vector<16x128xf32>
    %c84 = arith.constant 84 : index
    %578 = memref.load %arg1[%c84] : memref<98xf32, #tpu.memory_space<smem>>
    %c1_411 = arith.constant 1 : index
    %c0_412 = arith.constant 0 : index
    %c5_413 = arith.constant 5 : index
    %c0_414 = arith.constant 0 : index
    %579 = vector.load %arg4[%c1_411, %c0_412, %c5_413, %c0_414] : memref<2x7x24x128xf32, #tpu.memory_space<vmem>>, vector<1x1x16x128xf32>
    %580 = vector.shape_cast %579 : vector<1x1x16x128xf32> to vector<16x128xf32>
    %581 = vector.broadcast %578 : f32 to vector<16x128xf32>
    %582 = arith.mulf %581, %580 : vector<16x128xf32>
    %583 = arith.addf %535, %582 : vector<16x128xf32>
    %c85 = arith.constant 85 : index
    %584 = memref.load %arg1[%c85] : memref<98xf32, #tpu.memory_space<smem>>
    %c1_415 = arith.constant 1 : index
    %c1_416 = arith.constant 1 : index
    %c5_417 = arith.constant 5 : index
    %c0_418 = arith.constant 0 : index
    %585 = vector.load %arg4[%c1_415, %c1_416, %c5_417, %c0_418] : memref<2x7x24x128xf32, #tpu.memory_space<vmem>>, vector<1x1x16x128xf32>
    %586 = vector.shape_cast %585 : vector<1x1x16x128xf32> to vector<16x128xf32>
    %587 = vector.broadcast %584 : f32 to vector<16x128xf32>
    %588 = arith.mulf %587, %586 : vector<16x128xf32>
    %589 = arith.addf %583, %588 : vector<16x128xf32>
    %c86 = arith.constant 86 : index
    %590 = memref.load %arg1[%c86] : memref<98xf32, #tpu.memory_space<smem>>
    %c1_419 = arith.constant 1 : index
    %c2_420 = arith.constant 2 : index
    %c5_421 = arith.constant 5 : index
    %c0_422 = arith.constant 0 : index
    %591 = vector.load %arg4[%c1_419, %c2_420, %c5_421, %c0_422] : memref<2x7x24x128xf32, #tpu.memory_space<vmem>>, vector<1x1x16x128xf32>
    %592 = vector.shape_cast %591 : vector<1x1x16x128xf32> to vector<16x128xf32>
    %593 = vector.broadcast %590 : f32 to vector<16x128xf32>
    %594 = arith.mulf %593, %592 : vector<16x128xf32>
    %595 = arith.addf %589, %594 : vector<16x128xf32>
    %c87 = arith.constant 87 : index
    %596 = memref.load %arg1[%c87] : memref<98xf32, #tpu.memory_space<smem>>
    %c1_423 = arith.constant 1 : index
    %c3_424 = arith.constant 3 : index
    %c5_425 = arith.constant 5 : index
    %c0_426 = arith.constant 0 : index
    %597 = vector.load %arg4[%c1_423, %c3_424, %c5_425, %c0_426] : memref<2x7x24x128xf32, #tpu.memory_space<vmem>>, vector<1x1x16x128xf32>
    %598 = vector.shape_cast %597 : vector<1x1x16x128xf32> to vector<16x128xf32>
    %599 = vector.broadcast %596 : f32 to vector<16x128xf32>
    %600 = arith.mulf %599, %598 : vector<16x128xf32>
    %601 = arith.addf %595, %600 : vector<16x128xf32>
    %c88 = arith.constant 88 : index
    %602 = memref.load %arg1[%c88] : memref<98xf32, #tpu.memory_space<smem>>
    %c1_427 = arith.constant 1 : index
    %c4_428 = arith.constant 4 : index
    %c5_429 = arith.constant 5 : index
    %c0_430 = arith.constant 0 : index
    %603 = vector.load %arg4[%c1_427, %c4_428, %c5_429, %c0_430] : memref<2x7x24x128xf32, #tpu.memory_space<vmem>>, vector<1x1x16x128xf32>
    %604 = vector.shape_cast %603 : vector<1x1x16x128xf32> to vector<16x128xf32>
    %605 = vector.broadcast %602 : f32 to vector<16x128xf32>
    %606 = arith.mulf %605, %604 : vector<16x128xf32>
    %607 = arith.addf %601, %606 : vector<16x128xf32>
    %c89 = arith.constant 89 : index
    %608 = memref.load %arg1[%c89] : memref<98xf32, #tpu.memory_space<smem>>
    %c1_431 = arith.constant 1 : index
    %c5_432 = arith.constant 5 : index
    %c5_433 = arith.constant 5 : index
    %c0_434 = arith.constant 0 : index
    %609 = vector.load %arg4[%c1_431, %c5_432, %c5_433, %c0_434] : memref<2x7x24x128xf32, #tpu.memory_space<vmem>>, vector<1x1x16x128xf32>
    %610 = vector.shape_cast %609 : vector<1x1x16x128xf32> to vector<16x128xf32>
    %611 = vector.broadcast %608 : f32 to vector<16x128xf32>
    %612 = arith.mulf %611, %610 : vector<16x128xf32>
    %613 = arith.addf %607, %612 : vector<16x128xf32>
    %c90 = arith.constant 90 : index
    %614 = memref.load %arg1[%c90] : memref<98xf32, #tpu.memory_space<smem>>
    %c1_435 = arith.constant 1 : index
    %c6_436 = arith.constant 6 : index
    %c5_437 = arith.constant 5 : index
    %c0_438 = arith.constant 0 : index
    %615 = vector.load %arg4[%c1_435, %c6_436, %c5_437, %c0_438] : memref<2x7x24x128xf32, #tpu.memory_space<vmem>>, vector<1x1x16x128xf32>
    %616 = vector.shape_cast %615 : vector<1x1x16x128xf32> to vector<16x128xf32>
    %617 = vector.broadcast %614 : f32 to vector<16x128xf32>
    %618 = arith.mulf %617, %616 : vector<16x128xf32>
    %619 = arith.addf %613, %618 : vector<16x128xf32>
    %c91 = arith.constant 91 : index
    %620 = memref.load %arg1[%c91] : memref<98xf32, #tpu.memory_space<smem>>
    %c1_439 = arith.constant 1 : index
    %c0_440 = arith.constant 0 : index
    %c6_441 = arith.constant 6 : index
    %c0_442 = arith.constant 0 : index
    %621 = vector.load %arg4[%c1_439, %c0_440, %c6_441, %c0_442] : memref<2x7x24x128xf32, #tpu.memory_space<vmem>>, vector<1x1x16x128xf32>
    %622 = vector.shape_cast %621 : vector<1x1x16x128xf32> to vector<16x128xf32>
    %623 = vector.broadcast %620 : f32 to vector<16x128xf32>
    %624 = arith.mulf %623, %622 : vector<16x128xf32>
    %625 = arith.addf %577, %624 : vector<16x128xf32>
    %c92 = arith.constant 92 : index
    %626 = memref.load %arg1[%c92] : memref<98xf32, #tpu.memory_space<smem>>
    %c1_443 = arith.constant 1 : index
    %c1_444 = arith.constant 1 : index
    %c6_445 = arith.constant 6 : index
    %c0_446 = arith.constant 0 : index
    %627 = vector.load %arg4[%c1_443, %c1_444, %c6_445, %c0_446] : memref<2x7x24x128xf32, #tpu.memory_space<vmem>>, vector<1x1x16x128xf32>
    %628 = vector.shape_cast %627 : vector<1x1x16x128xf32> to vector<16x128xf32>
    %629 = vector.broadcast %626 : f32 to vector<16x128xf32>
    %630 = arith.mulf %629, %628 : vector<16x128xf32>
    %631 = arith.addf %625, %630 : vector<16x128xf32>
    %c93 = arith.constant 93 : index
    %632 = memref.load %arg1[%c93] : memref<98xf32, #tpu.memory_space<smem>>
    %c1_447 = arith.constant 1 : index
    %c2_448 = arith.constant 2 : index
    %c6_449 = arith.constant 6 : index
    %c0_450 = arith.constant 0 : index
    %633 = vector.load %arg4[%c1_447, %c2_448, %c6_449, %c0_450] : memref<2x7x24x128xf32, #tpu.memory_space<vmem>>, vector<1x1x16x128xf32>
    %634 = vector.shape_cast %633 : vector<1x1x16x128xf32> to vector<16x128xf32>
    %635 = vector.broadcast %632 : f32 to vector<16x128xf32>
    %636 = arith.mulf %635, %634 : vector<16x128xf32>
    %637 = arith.addf %631, %636 : vector<16x128xf32>
    %c94 = arith.constant 94 : index
    %638 = memref.load %arg1[%c94] : memref<98xf32, #tpu.memory_space<smem>>
    %c1_451 = arith.constant 1 : index
    %c3_452 = arith.constant 3 : index
    %c6_453 = arith.constant 6 : index
    %c0_454 = arith.constant 0 : index
    %639 = vector.load %arg4[%c1_451, %c3_452, %c6_453, %c0_454] : memref<2x7x24x128xf32, #tpu.memory_space<vmem>>, vector<1x1x16x128xf32>
    %640 = vector.shape_cast %639 : vector<1x1x16x128xf32> to vector<16x128xf32>
    %641 = vector.broadcast %638 : f32 to vector<16x128xf32>
    %642 = arith.mulf %641, %640 : vector<16x128xf32>
    %643 = arith.addf %637, %642 : vector<16x128xf32>
    %c95 = arith.constant 95 : index
    %644 = memref.load %arg1[%c95] : memref<98xf32, #tpu.memory_space<smem>>
    %c1_455 = arith.constant 1 : index
    %c4_456 = arith.constant 4 : index
    %c6_457 = arith.constant 6 : index
    %c0_458 = arith.constant 0 : index
    %645 = vector.load %arg4[%c1_455, %c4_456, %c6_457, %c0_458] : memref<2x7x24x128xf32, #tpu.memory_space<vmem>>, vector<1x1x16x128xf32>
    %646 = vector.shape_cast %645 : vector<1x1x16x128xf32> to vector<16x128xf32>
    %647 = vector.broadcast %644 : f32 to vector<16x128xf32>
    %648 = arith.mulf %647, %646 : vector<16x128xf32>
    %649 = arith.addf %643, %648 : vector<16x128xf32>
    %c96 = arith.constant 96 : index
    %650 = memref.load %arg1[%c96] : memref<98xf32, #tpu.memory_space<smem>>
    %c1_459 = arith.constant 1 : index
    %c5_460 = arith.constant 5 : index
    %c6_461 = arith.constant 6 : index
    %c0_462 = arith.constant 0 : index
    %651 = vector.load %arg4[%c1_459, %c5_460, %c6_461, %c0_462] : memref<2x7x24x128xf32, #tpu.memory_space<vmem>>, vector<1x1x16x128xf32>
    %652 = vector.shape_cast %651 : vector<1x1x16x128xf32> to vector<16x128xf32>
    %653 = vector.broadcast %650 : f32 to vector<16x128xf32>
    %654 = arith.mulf %653, %652 : vector<16x128xf32>
    %655 = arith.addf %649, %654 : vector<16x128xf32>
    %c97 = arith.constant 97 : index
    %656 = memref.load %arg1[%c97] : memref<98xf32, #tpu.memory_space<smem>>
    %c1_463 = arith.constant 1 : index
    %c6_464 = arith.constant 6 : index
    %c6_465 = arith.constant 6 : index
    %c0_466 = arith.constant 0 : index
    %657 = vector.load %arg4[%c1_463, %c6_464, %c6_465, %c0_466] : memref<2x7x24x128xf32, #tpu.memory_space<vmem>>, vector<1x1x16x128xf32>
    %658 = vector.shape_cast %657 : vector<1x1x16x128xf32> to vector<16x128xf32>
    %659 = vector.broadcast %656 : f32 to vector<16x128xf32>
    %660 = arith.mulf %659, %658 : vector<16x128xf32>
    %661 = arith.addf %655, %660 : vector<16x128xf32>
    %662 = arith.addf %367, %325 : vector<16x128xf32>
    %663 = arith.addf %661, %619 : vector<16x128xf32>
    %664 = arith.addf %662, %663 : vector<16x128xf32>
    %665 = vector.extract_strided_slice %664 {offsets = [0, 0], sizes = [16, 16], strides = [1, 1]} : vector<16x128xf32> to vector<16x16xf32>
    %666 = arith.negf %665 : vector<16x16xf32>
    %667 = math.exp %666 : vector<16x16xf32>
    %cst_467 = arith.constant 1.000000e+00 : f32
    %668 = vector.broadcast %cst_467 : f32 to vector<16x16xf32>
    %669 = arith.addf %668, %667 : vector<16x16xf32>
    %670 = arith.divf %668, %669 : vector<16x16xf32>
    %c0_468 = arith.constant 0 : index
    %c0_469 = arith.constant 0 : index
    %c0_470 = arith.constant 0 : index
    %c0_471 = arith.constant 0 : index
    %671 = vector.load %arg3[%c0_468, %c0_469, %c0_470, %c0_471] : memref<1x1x16x16xf32, #tpu.memory_space<vmem>>, vector<1x1x16x16xf32>
    %672 = vector.shape_cast %671 : vector<1x1x16x16xf32> to vector<16x16xf32>
    %673 = vector.shape_cast %670 : vector<16x16xf32> to vector<1x1x16x16xf32>
    tpu.vector_store %arg3[%c0_468, %c0_469, %c0_470, %c0_471], %673 {strides = array<i32>} : memref<1x1x16x16xf32, #tpu.memory_space<vmem>>, vector<1x1x16x16xf32>,
    return
  }
  func.func @transform_0(%arg0: i32) -> i32 {
    %c0_i32 = arith.constant 0 : i32
    %c0_i32_0 = arith.constant 0 : i32
    return %c0_i32 : i32
  }
  func.func @transform_1(%arg0: i32) -> (i32, i32, i32, i32) {
    %c0_i32 = arith.constant 0 : i32
    %c0_i32_0 = arith.constant 0 : i32
    %c0_i32_1 = arith.constant 0 : i32
    %c0_i32_2 = arith.constant 0 : i32
    return %arg0, %c0_i32, %c0_i32_0, %c0_i32_1 : i32, i32, i32, i32
  }
  func.func @transform_2(%arg0: i32) -> (i32, i32, i32, i32) {
    %c0_i32 = arith.constant 0 : i32
    %c0_i32_0 = arith.constant 0 : i32
    %c0_i32_1 = arith.constant 0 : i32
    %c0_i32_2 = arith.constant 0 : i32
    return %arg0, %c0_i32, %c0_i32_0, %c0_i32_1 : i32, i32, i32, i32
  }
}

</mosaic_0001>

<llo_original>
// kernel: sam_forward.2
$region0: #{sam_forward.2}
  #allocation0 [shape = 'u32[]', space=smem, size = 0x4, offset = 0x4, fixed_abs, tag = 'smem constant byte address 0x4 - core index']
  #allocation1 [shape = 'u32[72,128]{1,0:T(1,128)}', space=vmem, size = 0x9000, scoped, tag = 'internal scratch']
  %s0 = inlined_call_operand.vmem [shape: f32[2,4,256], index: 0, kind: input, shape index: {}]
  %s1 = inlined_call_operand.vmem [shape: f32[2,2,256], index: 1, kind: output, shape index: {}]
  %s2 = sld [smem:[#allocation0]]
  $region37: #{sam_forward.2} parent=0
    _
  %s4 = ssub.s32 1, %s2
  %s5 = scalar_select 0, %s4, %s2
  loop: start=0, step=1, limit=4
  $region2: #{sam_forward.2} parent=0 // loop_pre_header
    _
  $region3: #{sam_forward.2} parent=0 // loop_header
    %s7 = sphi 0, %s11
    %p8 = scmp.ge.s32.totalorder %s7, 4
    %s14 = sphi 0, %s26
    %s15 = sphi 0, %s22
    %s16 = sphi 0, %s14
    %s17 = sphi 0, %s15
    %s18 = sphi 0, %s16
    %s19 = sphi 0, %s17
    %s31 = sphi 0, %s33
    %s34 = sphi 0, %s31
    %s35 = sphi 0, %s34
    %s51 = sphi 0, %s35
    %s57 = sphi 0, %s59
    %s60 = sphi 0, %s57
    %s61 = sphi 0, %s60
    %s77 = sphi 0, %s61
  $region4: #{sam_forward.2} parent=0 // loop_header_branch
    %10 = sbr.rel (%p8) target = $region8
  $region5: #{sam_forward.2} parent=0 // loop_body
    %s12 = ssub.s32 %s7, 1
    %s13 = ssub.s32 %s7, 2
    %s20 = sadd.s32 1, %s15
    %p21 = scmp.ge.s32.totalorder %s20, 1
    %s22 = scalar_select %p21, 0, %s20
    %s23 = sadd.s32 1, %s14
    %s24 = scalar_select %p21, %s23, %s14
    %p25 = scmp.ge.s32.totalorder %s24, 2
    %s26 = scalar_select %p25, 0, %s24
    %s27 = ssub.s32 %s14, %s26
    %s28 = ssub.s32 %s15, %s22
    %s29 = sor.u32 %s27, %s28
    %p30 = scmp.eq.s32.totalorder %s29, 0
    %s32 = sadd.s32 %s31, 1
    %s33 = scalar_select %p30, %s31, %s32
    %p36 = pneg %p30
    %p37 = scmp.eq.s32.totalorder %s7, 1
    %p38 = por %p36, %p37
    %p39 = scmp.ne.s32.totalorder %s31, %s34
    %p40 = scmp.eq.s32.totalorder %s7, 0
    %p41 = por %p39, %p40
    %p42 = scmp.ne.s32.totalorder %s31, %s34
    %p43 = scmp.eq.s32.totalorder %s12, 1
    %p44 = por %p42, %p43
    %p45 = scmp.ne.s32.totalorder %s34, %s35
    %p46 = scmp.eq.s32.totalorder %s12, 0
    %p47 = por %p45, %p46
    %p48 = scmp.ne.s32.totalorder %s34, %s35
    %p49 = scmp.eq.s32.totalorder %s13, 1
    %p50 = por %p48, %p49
    %p52 = scmp.ne.s32.totalorder %s35, %s51
    %p53 = scmp.eq.s32.totalorder %s13, 0
    %p54 = por %p52, %p53
    %s55 = ssub.s32 %s14, %s26
    %p56 = scmp.eq.s32.totalorder %s55, 0
    %s58 = sadd.s32 %s57, 1
    %s59 = scalar_select %p56, %s57, %s58
    %p62 = pneg %p56
    %p63 = scmp.eq.s32.totalorder %s7, 1
    %p64 = por %p62, %p63
    %p65 = scmp.ne.s32.totalorder %s57, %s60
    %p66 = scmp.eq.s32.totalorder %s7, 0
    %p67 = por %p65, %p66
    %p68 = scmp.ne.s32.totalorder %s57, %s60
    %p69 = scmp.eq.s32.totalorder %s12, 1
    %p70 = por %p68, %p69
    %p71 = scmp.ne.s32.totalorder %s60, %s61
    %p72 = scmp.eq.s32.totalorder %s12, 0
    %p73 = por %p71, %p72
    %p74 = scmp.ne.s32.totalorder %s60, %s61
    %p75 = scmp.eq.s32.totalorder %s13, 1
    %p76 = por %p74, %p75
    %p78 = scmp.ne.s32.totalorder %s61, %s77
    %p79 = scmp.eq.s32.totalorder %s13, 0
    %p80 = por %p78, %p79
    %p81 = scmp.le.s32.totalorder 1, %s7
    %p82 = scmp.lt.s32.totalorder %s7, 3
    %p83 = pnand %p81, %p82
    %p84 = pneg %p83
    // Predicated region
    $region9: #{sam_forward.2} parent=5 // pred_check
      _
    $region10: #{sam_forward.2} parent=5 // pred_check_branch
      %86 = sbr.rel (%p83) target = $region12
    $region11: #{sam_forward.2} parent=5 // pred_region
      %s87 = ssub.s32 %s7, 1
    $region12: #{sam_forward.2} parent=5 // pred_fallthru
      _
    %p88 = scmp.lt.s32.totalorder %s7, 2
    // Predicated region
    $region13: #{sam_forward.2} parent=5 // pred_check
      %p89 = pneg %p88
    $region14: #{sam_forward.2} parent=5 // pred_check_branch
      %91 = sbr.rel (%p89) target = $region16
    $region15: #{sam_forward.2} parent=5 // pred_region
      // Predicated region
      $region17: #{sam_forward.2} parent=15 // pred_check
        %p92 = pneg %p41
      $region18: #{sam_forward.2} parent=15 // pred_check_branch
        %94 = sbr.rel (%p92) target = $region20
      $region19: #{sam_forward.2} parent=15 // pred_region
        %p95 = scmp.lt.s32.totalorder %s14, 1
        %s96 = scalar_select %p95, %s14, 1
        %p97 = scmp.lt.s32.totalorder %s15, 0
        %s98 = scalar_select %p97, %s15, 0
        %s99 = smul.addr %s98, 2
        %s100 = smul.addr %s96, 2
        %s101 = sadd.s32 %s99, %s100
        %s102 = smul.addr %s101, 4
        %s103 = scalar_lea.vmem %s0, %s102
      $region20: #{sam_forward.2} parent=15 // pred_fallthru
        _
    $region16: #{sam_forward.2} parent=5 // pred_fallthru
      _
    %p104 = scmp.le.s32.totalorder 1, %s7
    %p105 = scmp.lt.s32.totalorder %s7, 3
    %p106 = pnand %p104, %p105
    %p107 = pneg %p106
    // Predicated region
    $region21: #{sam_forward.2} parent=5 // pred_check
      _
    $region22: #{sam_forward.2} parent=5 // pred_check_branch
      %109 = sbr.rel (%p106) target = $region24
    $region23: #{sam_forward.2} parent=5 // pred_region
      %s110 = ssub.s32 %s7, 1
      %p111 = scmp.lt.s32.totalorder %s16, 1
      %s112 = scalar_select %p111, %s16, 1
      %p113 = scmp.lt.s32.totalorder %s17, 0
      %s114 = scalar_select %p113, %s17, 0
      %s115 = smul.addr %s114, 2
      %s116 = smul.addr %s112, 2
      %s117 = sadd.s32 %s115, %s116
      %s118 = smul.addr %s117, 4
      %s119 = scalar_lea.vmem %s0, %s118
      %p120 = pneg %p47
      %p121 = pneg %p44
      %p122 = pneg %p73
      %p123 = pneg %p70
      %p124 = scmp.lt.s32.totalorder %s16, 1
      %s125 = scalar_select %p124, %s16, 1
      %s126 = smul.addr %s125, 2
      %s127 = smul.addr %s126, 2
      %s128 = scalar_lea.vmem %s1, %s127
      %p129 = scmp.lt.s32.totalorder %s16, 1
      %s130 = scalar_select %p129, %s16, 1
      %p131 = scmp.lt.s32.totalorder %s17, 0
      %s132 = scalar_select %p131, %s17, 0
      %s133 = smul.addr %s132, 2
      %s134 = smul.addr %s130, 2
      %s135 = sadd.s32 %s133, %s134
      %s136 = smul.addr %s135, 4
      %s137 = scalar_lea.vmem %s0, %s136
      %p138 = scmp.lt.s32.totalorder %s16, 1
      %s139 = scalar_select %p138, %s16, 1
      %s140 = smul.addr %s139, 2
      %s141 = smul.addr %s140, 2
      %s142 = scalar_lea.vmem %s1, %s141
      %v143 = vld [vmem:[%s137] sm:$0xff]
      %145 = vst [vmem:[#allocation1] ss:$2 sm:$0xff] %v143
      %v146 = vld.sshfl [vmem:[#allocation1] sm:$0xff pattern:$0x75316420]
      %v147 = vld.sshfl [vmem:[#allocation1 + $0x8] sm:$0xff pattern:$0x75316420]
      %vm150 = vcmask 1043456
      %v151 = vsel %vm150, %v146, 0.0
      %v152 = vrot.slane %v151, 4
      %v153 = vadd.f32 %v151, %v152
      %v154 = vrot.slane %v153, 2
      %v155 = vadd.f32 %v153, %v154
      %v156 = vrot.slane %v155, 1
      %v157 = vadd.f32 %v155, %v156
      %v158 = vsel %vm150, %v147, 0.0
      %v159 = vrot.slane %v158, 4
      %v160 = vadd.f32 %v158, %v159
      %v161 = vrot.slane %v160, 2
      %v162 = vadd.f32 %v160, %v161
      %v163 = vrot.slane %v162, 1
      %v164 = vadd.f32 %v162, %v163
      %165 = vst [vmem:[#allocation1] ss:$2 sm:$0xff] %v143
      %v166 = vld.sshfl [vmem:[#allocation1] sm:$0xff pattern:$0x75316420]
      %v167 = vld.sshfl [vmem:[#allocation1 + $0x8] sm:$0xff pattern:$0x75316420]
      %v170 = vsel %vm150, %v166, -inf
      %v171 = vrot.slane %v170, 4
      %v172 = vmax.f32 %v170, %v171
      %v173 = vrot.slane %v172, 2
      %v174 = vmax.f32 %v172, %v173
      %v175 = vrot.slane %v174, 1
      %v176 = vmax.f32 %v174, %v175
      %v177 = vsel %vm150, %v167, -inf
      %v178 = vrot.slane %v177, 4
      %v179 = vmax.f32 %v177, %v178
      %v180 = vrot.slane %v179, 2
      %v181 = vmax.f32 %v179, %v180
      %v182 = vrot.slane %v181, 1
      %v183 = vmax.f32 %v181, %v182
      %v184 = vmul.f32 %v157, 0.25
      %v185 = vmul.f32 %v164, 0.25
      %v188 = vrot.slane %v185, 7
      %vm189 = vcmask 1040384
      %v190 = vsel %vm189, %v184, %v188
      %v192 = vlaneseq
      %vm193 = vcmp.ge.s32.totalorder %v192, 0
      %vm194 = vcmp.lt.s32.totalorder %v192, 256
      %vm195 = vmand %vm193, %vm194
      %196 = vst.msk [vmem:[%s142] ss:$2 sm:$0x3] %vm195, %v190
      %v199 = vrot.slane %v183, 7
      %v200 = vsel %vm189, %v176, %v199
      %s202 = scalar_lea.vmem %s142, 1
      %203 = vst.msk [vmem:[%s202] ss:$2 sm:$0x3] %vm195, %v200
      %p204 = scmp.lt.s32.totalorder %s16, 1
      %s205 = scalar_select %p204, %s16, 1
      %s206 = smul.addr %s205, 2
      %s207 = smul.addr %s206, 2
      %s208 = scalar_lea.vmem %s1, %s207
      // Predicated region
      $region25: #{sam_forward.2} parent=23 // pred_check
        %p209 = pneg %p70
      $region26: #{sam_forward.2} parent=23 // pred_check_branch
        %211 = sbr.rel (%p209) target = $region28
      $region27: #{sam_forward.2} parent=23 // pred_region
        _
      $region28: #{sam_forward.2} parent=23 // pred_fallthru
        _
    $region24: #{sam_forward.2} parent=5 // pred_fallthru
      _
    %p212 = scmp.le.s32.totalorder 2, %s7
    // Predicated region
    $region29: #{sam_forward.2} parent=5 // pred_check
      %p213 = pneg %p212
    $region30: #{sam_forward.2} parent=5 // pred_check_branch
      %215 = sbr.rel (%p213) target = $region32
    $region31: #{sam_forward.2} parent=5 // pred_region
      %s216 = ssub.s32 %s7, 2
      // Predicated region
      $region33: #{sam_forward.2} parent=31 // pred_check
        %p217 = pneg %p76
      $region34: #{sam_forward.2} parent=31 // pred_check_branch
        %219 = sbr.rel (%p217) target = $region36
      $region35: #{sam_forward.2} parent=31 // pred_region
        %p220 = scmp.lt.s32.totalorder %s18, 1
        %s221 = scalar_select %p220, %s18, 1
        %s222 = smul.addr %s221, 2
        %s223 = smul.addr %s222, 2
        %s224 = scalar_lea.vmem %s1, %s223
      $region36: #{sam_forward.2} parent=31 // pred_fallthru
        _
    $region32: #{sam_forward.2} parent=5 // pred_fallthru
      _
  $region6: #{sam_forward.2} parent=0 // loop_footer
    %s11 = sadd.s32 1, %s7
  $region7: #{sam_forward.2} parent=0 // loop_footer_branch
    %6 = sbr.rel target = $region3
  $region8: #{sam_forward.2} parent=0 // loop_exit
    _

// kernel: sam_forward.3
$region0: #{sam_forward.3}
  #allocation0 [shape = 'u32[]', space=smem, size = 0x4, offset = 0x4, fixed_abs, tag = 'smem constant byte address 0x4 - core index']
  #allocation1 [shape = 'u32[72,128]{1,0:T(1,128)}', space=vmem, size = 0x9000, scoped, tag = 'internal scratch']
  #allocation2 [shape = 'f32[2,7,24,128]{3,2,1,0:T(8,128)}', space=vmem, size = 0x2a000, scoped, tag = 'scratch operand']
  %s0 = inlined_call_operand.vmem [shape: f32[98], index: 0, kind: input, shape index: {}]
  %s1 = inlined_call_operand.vmem [shape: f32[2,2,16,16], index: 1, kind: input, shape index: {}]
  %s2 = inlined_call_operand.hbm [shape: f32[2,1,16,16], index: 2, kind: output, shape index: {}]
  %s3 = sld [smem:[#allocation0]]
  $region45: #{sam_forward.3} parent=0
    _
  %s5 = ssub.s32 1, %s3
  %s6 = scalar_select 0, %s5, %s3
  $region1: #{sam_forward.3} parent=0
    #allocation3 [shape = 'u8[512]{0}', space=smem, size = 0x200, scoped, tag = 'input window, operand 0, single buffered']
    #allocation4 [shape = 's32[2]{0}', space=sflag, size = 0x8, scoped, tag = 'scoped memory for sam_forward.3']
    #allocation5 [shape = 's32[2]{0}', space=sflag, size = 0x8, scoped, tag = 'scoped memory for sam_forward.3']
    #allocation6 [shape = 'u8[16384]{0}', space=vmem, size = 0x4000, scoped, tag = 'output window, operand 0']
    %7 = vsyncpa [#allocation5], 0
    %8 = vsyncpa [#allocation4], 0
    %s9 = scalar_lea.sflag [#allocation4], 1
    %10 = vsyncpa %s9, 0
    loop: start=0, step=1, limit=4
    $region2: #{sam_forward.3} parent=1 // loop_pre_header
      _
    $region3: #{sam_forward.3} parent=1 // loop_header
      %s12 = sphi 0, %s16
      %p13 = scmp.ge.s32.totalorder %s12, 4
      %s20 = sphi 0, %s20
      %s22 = sphi 0, %s20
      %s23 = sphi 0, %s22
      %s37 = sphi 0, %s23
      %s43 = sphi 0, %s45
      %s46 = sphi 0, %s43
      %s47 = sphi 0, %s46
      %s63 = sphi 0, %s47
      %s69 = sphi 0, %s71
      %s72 = sphi 0, %s69
      %s73 = sphi 0, %s72
      %s89 = sphi 0, %s73
    $region4: #{sam_forward.3} parent=1 // loop_header_branch
      %15 = sbr.rel (%p13) target = $region8
    $region5: #{sam_forward.3} parent=1 // loop_body
      %s17 = ssub.s32 %s12, 1
      %s18 = ssub.s32 %s12, 2
      %s19 = sadd.s32 %s12, 1
      %s21 = sadd.s32 %s20, 1
      %p24 = scmp.eq.s32.totalorder %s12, 1
      %p25 = scmp.ne.s32.totalorder %s20, %s22
      %p26 = scmp.eq.s32.totalorder %s12, 0
      %p27 = por %p25, %p26
      %p28 = scmp.ne.s32.totalorder %s20, %s22
      %p29 = scmp.eq.s32.totalorder %s17, 1
      %p30 = por %p28, %p29
      %p31 = scmp.ne.s32.totalorder %s22, %s23
      %p32 = scmp.eq.s32.totalorder %s17, 0
      %p33 = por %p31, %p32
      %p34 = scmp.ne.s32.totalorder %s22, %s23
      %p35 = scmp.eq.s32.totalorder %s18, 1
      %p36 = por %p34, %p35
      %p38 = scmp.ne.s32.totalorder %s23, %s37
      %p39 = scmp.eq.s32.totalorder %s18, 0
      %p40 = por %p38, %p39
      %s41 = ssub.s32 %s12, %s19
      %p42 = scmp.eq.s32.totalorder %s41, 0
      %s44 = sadd.s32 %s43, 1
      %s45 = scalar_select %p42, %s43, %s44
      %p48 = pneg %p42
      %p49 = scmp.eq.s32.totalorder %s12, 1
      %p50 = por %p48, %p49
      %p51 = scmp.ne.s32.totalorder %s43, %s46
      %p52 = scmp.eq.s32.totalorder %s12, 0
      %p53 = por %p51, %p52
      %p54 = scmp.ne.s32.totalorder %s43, %s46
      %p55 = scmp.eq.s32.totalorder %s17, 1
      %p56 = por %p54, %p55
      %p57 = scmp.ne.s32.totalorder %s46, %s47
      %p58 = scmp.eq.s32.totalorder %s17, 0
      %p59 = por %p57, %p58
      %p60 = scmp.ne.s32.totalorder %s46, %s47
      %p61 = scmp.eq.s32.totalorder %s18, 1
      %p62 = por %p60, %p61
      %p64 = scmp.ne.s32.totalorder %s47, %s63
      %p65 = scmp.eq.s32.totalorder %s18, 0
      %p66 = por %p64, %p65
      %s67 = ssub.s32 %s12, %s19
      %p68 = scmp.eq.s32.totalorder %s67, 0
      %s70 = sadd.s32 %s69, 1
      %s71 = scalar_select %p68, %s69, %s70
      %p74 = pneg %p68
      %p75 = scmp.eq.s32.totalorder %s12, 1
      %p76 = por %p74, %p75
      %p77 = scmp.ne.s32.totalorder %s69, %s72
      %p78 = scmp.eq.s32.totalorder %s12, 0
      %p79 = por %p77, %p78
      %p80 = scmp.ne.s32.totalorder %s69, %s72
      %p81 = scmp.eq.s32.totalorder %s17, 1
      %p82 = por %p80, %p81
      %p83 = scmp.ne.s32.totalorder %s72, %s73
      %p84 = scmp.eq.s32.totalorder %s17, 0
      %p85 = por %p83, %p84
      %p86 = scmp.ne.s32.totalorder %s72, %s73
      %p87 = scmp.eq.s32.totalorder %s18, 1
      %p88 = por %p86, %p87
      %p90 = scmp.ne.s32.totalorder %s73, %s89
      %p91 = scmp.eq.s32.totalorder %s18, 0
      %p92 = por %p90, %p91
      %p93 = scmp.le.s32.totalorder 1, %s12
      %p94 = scmp.lt.s32.totalorder %s12, 3
      %p95 = pnand %p93, %p94
      %p96 = pneg %p95
      // Predicated region
      $region9: #{sam_forward.3} parent=5 // pred_check
        _
      $region10: #{sam_forward.3} parent=5 // pred_check_branch
        %98 = sbr.rel (%p95) target = $region12
      $region11: #{sam_forward.3} parent=5 // pred_region
        %s99 = ssub.s32 %s12, 1
        // Predicated region
        $region13: #{sam_forward.3} parent=11 // pred_check
          %p100 = pneg %p33
        $region14: #{sam_forward.3} parent=11 // pred_check_branch
          %102 = sbr.rel (%p100) target = $region16
        $region15: #{sam_forward.3} parent=11 // pred_region
          %104 = vsyncadd [#allocation5], 0
          %s106 = sshll.u32 %s0, 4
          %s107 = int_to_ptr.vmem [resolvable:$true] %s106
          %109 = dma.vmem_to_smem %s107, 16, [#allocation3], [#allocation5]
        $region16: #{sam_forward.3} parent=11 // pred_fallthru
          _
      $region12: #{sam_forward.3} parent=5 // pred_fallthru
        _
      %p110 = scmp.lt.s32.totalorder %s12, 2
      // Predicated region
      $region17: #{sam_forward.3} parent=5 // pred_check
        %p111 = pneg %p110
      $region18: #{sam_forward.3} parent=5 // pred_check_branch
        %113 = sbr.rel (%p111) target = $region20
      $region19: #{sam_forward.3} parent=5 // pred_region
        // Predicated region
        $region21: #{sam_forward.3} parent=19 // pred_check
          %p114 = pneg %p53
        $region22: #{sam_forward.3} parent=19 // pred_check_branch
          %116 = sbr.rel (%p114) target = $region24
        $region23: #{sam_forward.3} parent=19 // pred_region
          %p117 = scmp.lt.s32.totalorder %s12, 1
          %s118 = scalar_select %p117, %s12, 1
          %s119 = smul.addr %s118, 4
          %s120 = smul.addr %s119, 8
          %s121 = scalar_lea.vmem %s1, %s120
        $region24: #{sam_forward.3} parent=19 // pred_fallthru
          _
      $region20: #{sam_forward.3} parent=5 // pred_fallthru
        _
      %p122 = scmp.le.s32.totalorder 1, %s12
      %p123 = scmp.lt.s32.totalorder %s12, 3
      %p124 = pnand %p122, %p123
      %p125 = pneg %p124
      // Predicated region
      $region25: #{sam_forward.3} parent=5 // pred_check
        _
      $region26: #{sam_forward.3} parent=5 // pred_check_branch
        %127 = sbr.rel (%p124) target = $region28
      $region27: #{sam_forward.3} parent=5 // pred_region
        %s128 = ssub.s32 %s12, 1
        // Predicated region
        $region29: #{sam_forward.3} parent=27 // pred_check
          %p129 = pneg %p33
        $region30: #{sam_forward.3} parent=27 // pred_check_branch
          %131 = sbr.rel (%p129) target = $region32
        $region31: #{sam_forward.3} parent=27 // pred_region
          %133 = dma.done [#allocation5], 16
        $region32: #{sam_forward.3} parent=27 // pred_fallthru
          _
        %134 = sfence
        %p135 = pneg %p33
        %p136 = pneg %p30
        %p137 = scmp.lt.s32.totalorder %s17, 1
        %s138 = scalar_select %p137, %s17, 1
        %s139 = smul.addr %s138, 4
        %s140 = smul.addr %s139, 8
        %s141 = scalar_lea.vmem %s1, %s140
        %p142 = pneg %p59
        %p143 = pneg %p56
        %p144 = pneg %p85
        %p145 = pneg %p82
        %s146 = sand.u32 %s72, 1
        %s147 = scalar_lea.sflag [#allocation4], %s146
        %s148 = sand.u32 %s72, 1
        %s149 = smul.addr %s148, 16
        %s150 = scalar_lea.vmem [#allocation6], %s149
        %p151 = scmp.lt.s32.totalorder %s17, 1
        %s152 = scalar_select %p151, %s17, 1
        %s153 = smul.addr %s152, 4
        %s154 = smul.addr %s153, 8
        %s155 = scalar_lea.vmem %s1, %s154
        %v156 = vld [vmem:[%s155] sm:$0xff]
        %v157 = vld [vmem:[%s155 + $0x8] sm:$0xff]
        %vm160 = vcmask 1042432
        %v161 = vrot.slane %v156, 5
        %v162 = vrot.slane %v157, 5
        %v163 = vsel %vm160, %v161, %v162
        %v166 = vsel %vm160, 0.0, %v161
        %v167 = vsel %vm160, %v162, 0.0
        %170 = vrot.lane.b32.xlu0 %v166, 3
        %v171 = vpop.permute.xlu0 %170
        %172 = vrot.lane.b32.xlu0 %v163, 3
        %v173 = vpop.permute.xlu0 %172
        %174 = vrot.lane.b32.xlu0 %v167, 3
        %v175 = vpop.permute.xlu0 %174
        %vm179 = vcmask 23552
        %v180 = vsel %vm179, 0.0, %v171
        %v181 = vsel %vm179, 0.0, %v173
        %v182 = vsel %vm179, 0.0, %v175
        %vm183 = vcmask 154624
        %v184 = vsel %vm183, %v180, 0.0
        %v185 = vsel %vm183, %v181, 0.0
        %v186 = vsel %vm183, %v182, 0.0
        %187 = vst [vmem:[#allocation2] sm:$0xff] %v184
        %188 = vst [vmem:[#allocation2 + $0x8] sm:$0xff] %v185
        %189 = vst [vmem:[#allocation2 + $0x10] sm:$0xff] %v186
        %193 = vrot.lane.b32.xlu0 %v184, 127
        %v194 = vpop.permute.xlu0 %193
        %195 = vrot.lane.b32.xlu0 %v185, 127
        %v196 = vpop.permute.xlu0 %195
        %197 = vrot.lane.b32.xlu0 %v186, 127
        %v198 = vpop.permute.xlu0 %197
        %s202 = scalar_lea.vmem [#allocation2], 24
        %vm203 = vcmask 1039360
        %204 = vst.msk [vmem:[%s202] sm:$0xff] %vm203, %v194
        %205 = vst.msk [vmem:[%s202 + $0x8] sm:$0xff] %vm203, %v196
        %206 = vst.msk [vmem:[%s202 + $0x10] sm:$0xff] %vm203, %v198
        %207 = vrot.lane.b32.xlu0 %v184, 126
        %v208 = vpop.permute.xlu0 %207
        %209 = vrot.lane.b32.xlu0 %v185, 126
        %v210 = vpop.permute.xlu0 %209
        %211 = vrot.lane.b32.xlu0 %v186, 126
        %v212 = vpop.permute.xlu0 %211
        %s216 = scalar_lea.vmem [#allocation2], 48
        %vm217 = vcmask 1031168
        %218 = vst.msk [vmem:[%s216] sm:$0xff] %vm217, %v208
        %219 = vst.msk [vmem:[%s216 + $0x8] sm:$0xff] %vm217, %v210
        %220 = vst.msk [vmem:[%s216 + $0x10] sm:$0xff] %vm217, %v212
        %221 = vrot.lane.b32.xlu0 %v184, 125
        %v222 = vpop.permute.xlu0 %221
        %223 = vrot.lane.b32.xlu0 %v185, 125
        %v224 = vpop.permute.xlu0 %223
        %225 = vrot.lane.b32.xlu0 %v186, 125
        %v226 = vpop.permute.xlu0 %225
        %s230 = scalar_lea.vmem [#allocation2], 72
        %vm231 = vcmask 1022976
        %232 = vst.msk [vmem:[%s230] sm:$0xff] %vm231, %v222
        %233 = vst.msk [vmem:[%s230 + $0x8] sm:$0xff] %vm231, %v224
        %234 = vst.msk [vmem:[%s230 + $0x10] sm:$0xff] %vm231, %v226
        %235 = vrot.lane.b32.xlu0 %v184, 124
        %v236 = vpop.permute.xlu0 %235
        %237 = vrot.lane.b32.xlu0 %v185, 124
        %v238 = vpop.permute.xlu0 %237
        %239 = vrot.lane.b32.xlu0 %v186, 124
        %v240 = vpop.permute.xlu0 %239
        %s244 = scalar_lea.vmem [#allocation2], 96
        %vm245 = vcmask 1014784
        %246 = vst.msk [vmem:[%s244] sm:$0xff] %vm245, %v236
        %247 = vst.msk [vmem:[%s244 + $0x8] sm:$0xff] %vm245, %v238
        %248 = vst.msk [vmem:[%s244 + $0x10] sm:$0xff] %vm245, %v240
        %249 = vrot.lane.b32.xlu0 %v184, 123
        %v250 = vpop.permute.xlu0 %249
        %251 = vrot.lane.b32.xlu0 %v185, 123
        %v252 = vpop.permute.xlu0 %251
        %253 = vrot.lane.b32.xlu0 %v186, 123
        %v254 = vpop.permute.xlu0 %253
        %s258 = scalar_lea.vmem [#allocation2], 120
        %vm259 = vcmask 1006592
        %260 = vst.msk [vmem:[%s258] sm:$0xff] %vm259, %v250
        %261 = vst.msk [vmem:[%s258 + $0x8] sm:$0xff] %vm259, %v252
        %262 = vst.msk [vmem:[%s258 + $0x10] sm:$0xff] %vm259, %v254
        %263 = vrot.lane.b32.xlu0 %v184, 122
        %v264 = vpop.permute.xlu0 %263
        %265 = vrot.lane.b32.xlu0 %v185, 122
        %v266 = vpop.permute.xlu0 %265
        %267 = vrot.lane.b32.xlu0 %v186, 122
        %v268 = vpop.permute.xlu0 %267
        %s272 = scalar_lea.vmem [#allocation2], 144
        %vm273 = vcmask 998400
        %274 = vst.msk [vmem:[%s272] sm:$0xff] %vm273, %v264
        %275 = vst.msk [vmem:[%s272 + $0x8] sm:$0xff] %vm273, %v266
        %276 = vst.msk [vmem:[%s272 + $0x10] sm:$0xff] %vm273, %v268
        %s277 = scalar_lea.vmem %s155, 16
        %v278 = vld [vmem:[%s277] sm:$0xff]
        %v279 = vld [vmem:[%s277 + $0x8] sm:$0xff]
        %v282 = vrot.slane %v278, 5
        %v283 = vrot.slane %v279, 5
        %v284 = vsel %vm160, %v282, %v283
        %v287 = vsel %vm160, 0.0, %v282
        %v288 = vsel %vm160, %v283, 0.0
        %291 = vrot.lane.b32.xlu0 %v287, 3
        %v292 = vpop.permute.xlu0 %291
        %293 = vrot.lane.b32.xlu0 %v284, 3
        %v294 = vpop.permute.xlu0 %293
        %295 = vrot.lane.b32.xlu0 %v288, 3
        %v296 = vpop.permute.xlu0 %295
        %v300 = vsel %vm179, 0.0, %v292
        %v301 = vsel %vm179, 0.0, %v294
        %v302 = vsel %vm179, 0.0, %v296
        %v303 = vsel %vm183, %v300, 0.0
        %v304 = vsel %vm183, %v301, 0.0
        %v305 = vsel %vm183, %v302, 0.0
        %s306 = scalar_lea.vmem [#allocation2], 168
        %307 = vst [vmem:[%s306] sm:$0xff] %v303
        %308 = vst [vmem:[%s306 + $0x8] sm:$0xff] %v304
        %309 = vst [vmem:[%s306 + $0x10] sm:$0xff] %v305
        %313 = vrot.lane.b32.xlu0 %v303, 127
        %v314 = vpop.permute.xlu0 %313
        %315 = vrot.lane.b32.xlu0 %v304, 127
        %v316 = vpop.permute.xlu0 %315
        %317 = vrot.lane.b32.xlu0 %v305, 127
        %v318 = vpop.permute.xlu0 %317
        %s322 = scalar_lea.vmem [#allocation2], 192
        %323 = vst.msk [vmem:[%s322] sm:$0xff] %vm203, %v314
        %324 = vst.msk [vmem:[%s322 + $0x8] sm:$0xff] %vm203, %v316
        %325 = vst.msk [vmem:[%s322 + $0x10] sm:$0xff] %vm203, %v318
        %326 = vrot.lane.b32.xlu0 %v303, 126
        %v327 = vpop.permute.xlu0 %326
        %328 = vrot.lane.b32.xlu0 %v304, 126
        %v329 = vpop.permute.xlu0 %328
        %330 = vrot.lane.b32.xlu0 %v305, 126
        %v331 = vpop.permute.xlu0 %330
        %s335 = scalar_lea.vmem [#allocation2], 216
        %336 = vst.msk [vmem:[%s335] sm:$0xff] %vm217, %v327
        %337 = vst.msk [vmem:[%s335 + $0x8] sm:$0xff] %vm217, %v329
        %338 = vst.msk [vmem:[%s335 + $0x10] sm:$0xff] %vm217, %v331
        %339 = vrot.lane.b32.xlu0 %v303, 125
        %v340 = vpop.permute.xlu0 %339
        %341 = vrot.lane.b32.xlu0 %v304, 125
        %v342 = vpop.permute.xlu0 %341
        %343 = vrot.lane.b32.xlu0 %v305, 125
        %v344 = vpop.permute.xlu0 %343
        %s348 = scalar_lea.vmem [#allocation2], 240
        %349 = vst.msk [vmem:[%s348] sm:$0xff] %vm231, %v340
        %350 = vst.msk [vmem:[%s348 + $0x8] sm:$0xff] %vm231, %v342
        %351 = vst.msk [vmem:[%s348 + $0x10] sm:$0xff] %vm231, %v344
        %352 = vrot.lane.b32.xlu0 %v303, 124
        %v353 = vpop.permute.xlu0 %352
        %354 = vrot.lane.b32.xlu0 %v304, 124
        %v355 = vpop.permute.xlu0 %354
        %356 = vrot.lane.b32.xlu0 %v305, 124
        %v357 = vpop.permute.xlu0 %356
        %s361 = scalar_lea.vmem [#allocation2], 264
        %362 = vst.msk [vmem:[%s361] sm:$0xff] %vm245, %v353
        %363 = vst.msk [vmem:[%s361 + $0x8] sm:$0xff] %vm245, %v355
        %364 = vst.msk [vmem:[%s361 + $0x10] sm:$0xff] %vm245, %v357
        %365 = vrot.lane.b32.xlu0 %v303, 123
        %v366 = vpop.permute.xlu0 %365
        %367 = vrot.lane.b32.xlu0 %v304, 123
        %v368 = vpop.permute.xlu0 %367
        %369 = vrot.lane.b32.xlu0 %v305, 123
        %v370 = vpop.permute.xlu0 %369
        %s374 = scalar_lea.vmem [#allocation2], 288
        %375 = vst.msk [vmem:[%s374] sm:$0xff] %vm259, %v366
        %376 = vst.msk [vmem:[%s374 + $0x8] sm:$0xff] %vm259, %v368
        %377 = vst.msk [vmem:[%s374 + $0x10] sm:$0xff] %vm259, %v370
        %378 = vrot.lane.b32.xlu0 %v303, 122
        %v379 = vpop.permute.xlu0 %378
        %380 = vrot.lane.b32.xlu0 %v304, 122
        %v381 = vpop.permute.xlu0 %380
        %382 = vrot.lane.b32.xlu0 %v305, 122
        %v383 = vpop.permute.xlu0 %382
        %s387 = scalar_lea.vmem [#allocation2], 312
        %388 = vst.msk [vmem:[%s387] sm:$0xff] %vm273, %v379
        %389 = vst.msk [vmem:[%s387 + $0x8] sm:$0xff] %vm273, %v381
        %390 = vst.msk [vmem:[%s387 + $0x10] sm:$0xff] %vm273, %v383
        %s391 = sld [smem:[#allocation3]]
        %v392 = vld [vmem:[#allocation2] sm:$0xff]
        %v393 = vld [vmem:[#allocation2 + $0x8] sm:$0xff]
        %v394 = vstv %s391
        %v395 = vmul.f32 %v394, %v392
        %v396 = vmul.f32 %v394, %v393
        %v397 = vadd.f32 %v395, 0.0
        %v398 = vadd.f32 %v396, 0.0
        %s399 = sld [smem:[#allocation3 + $0x1]]
        %v400 = vld [vmem:[%s202] sm:$0xff]
        %v401 = vld [vmem:[%s202 + $0x8] sm:$0xff]
        %v402 = vstv %s399
        %v403 = vmul.f32 %v402, %v400
        %v404 = vmul.f32 %v402, %v401
        %v405 = vadd.f32 %v397, %v403
        %v406 = vadd.f32 %v398, %v404
        %s407 = sld [smem:[#allocation3 + $0x2]]
        %v408 = vld [vmem:[%s216] sm:$0xff]
        %v409 = vld [vmem:[%s216 + $0x8] sm:$0xff]
        %v410 = vstv %s407
        %v411 = vmul.f32 %v410, %v408
        %v412 = vmul.f32 %v410, %v409
        %v413 = vadd.f32 %v405, %v411
        %v414 = vadd.f32 %v406, %v412
        %s415 = sld [smem:[#allocation3 + $0x3]]
        %v416 = vld [vmem:[%s230] sm:$0xff]
        %v417 = vld [vmem:[%s230 + $0x8] sm:$0xff]
        %v418 = vstv %s415
        %v419 = vmul.f32 %v418, %v416
        %v420 = vmul.f32 %v418, %v417
        %v421 = vadd.f32 %v413, %v419
        %v422 = vadd.f32 %v414, %v420
        %s423 = sld [smem:[#allocation3 + $0x4]]
        %v424 = vld [vmem:[%s244] sm:$0xff]
        %v425 = vld [vmem:[%s244 + $0x8] sm:$0xff]
        %v426 = vstv %s423
        %v427 = vmul.f32 %v426, %v424
        %v428 = vmul.f32 %v426, %v425
        %v429 = vadd.f32 %v421, %v427
        %v430 = vadd.f32 %v422, %v428
        %s431 = sld [smem:[#allocation3 + $0x5]]
        %v432 = vld [vmem:[%s258] sm:$0xff]
        %v433 = vld [vmem:[%s258 + $0x8] sm:$0xff]
        %v434 = vstv %s431
        %v435 = vmul.f32 %v434, %v432
        %v436 = vmul.f32 %v434, %v433
        %v437 = vadd.f32 %v429, %v435
        %v438 = vadd.f32 %v430, %v436
        %s439 = sld [smem:[#allocation3 + $0x6]]
        %v440 = vld [vmem:[%s272] sm:$0xff]
        %v441 = vld [vmem:[%s272 + $0x8] sm:$0xff]
        %v442 = vstv %s439
        %v443 = vmul.f32 %v442, %v440
        %v444 = vmul.f32 %v442, %v441
        %v445 = vadd.f32 %v437, %v443
        %v446 = vadd.f32 %v438, %v444
        %s447 = sld [smem:[#allocation3 + $0x7]]
        %v448 = vld [vmem:[#allocation2 + $0x1] sm:$0xff]
        %v449 = vld [vmem:[#allocation2 + $0x9] sm:$0xff]
        %v450 = vstv %s447
        %v451 = vmul.f32 %v450, %v448
        %v452 = vmul.f32 %v450, %v449
        %v453 = vadd.f32 %v451, 0.0
        %v454 = vadd.f32 %v452, 0.0
        %s455 = sld [smem:[#allocation3 + $0x8]]
        %v456 = vld [vmem:[%s202 + $0x1] sm:$0xff]
        %v457 = vld [vmem:[%s202 + $0x9] sm:$0xff]
        %v458 = vstv %s455
        %v459 = vmul.f32 %v458, %v456
        %v460 = vmul.f32 %v458, %v457
        %v461 = vadd.f32 %v453, %v459
        %v462 = vadd.f32 %v454, %v460
        %s463 = sld [smem:[#allocation3 + $0x9]]
        %v464 = vld [vmem:[%s216 + $0x1] sm:$0xff]
        %v465 = vld [vmem:[%s216 + $0x9] sm:$0xff]
        %v466 = vstv %s463
        %v467 = vmul.f32 %v466, %v464
        %v468 = vmul.f32 %v466, %v465
        %v469 = vadd.f32 %v461, %v467
        %v470 = vadd.f32 %v462, %v468
        %s471 = sld [smem:[#allocation3 + $0xa]]
        %v472 = vld [vmem:[%s230 + $0x1] sm:$0xff]
        %v473 = vld [vmem:[%s230 + $0x9] sm:$0xff]
        %v474 = vstv %s471
        %v475 = vmul.f32 %v474, %v472
        %v476 = vmul.f32 %v474, %v473
        %v477 = vadd.f32 %v469, %v475
        %v478 = vadd.f32 %v470, %v476
        %s479 = sld [smem:[#allocation3 + $0xb]]
        %v480 = vld [vmem:[%s244 + $0x1] sm:$0xff]
        %v481 = vld [vmem:[%s244 + $0x9] sm:$0xff]
        %v482 = vstv %s479
        %v483 = vmul.f32 %v482, %v480
        %v484 = vmul.f32 %v482, %v481
        %v485 = vadd.f32 %v477, %v483
        %v486 = vadd.f32 %v478, %v484
        %s487 = sld [smem:[#allocation3 + $0xc]]
        %v488 = vld [vmem:[%s258 + $0x1] sm:$0xff]
        %v489 = vld [vmem:[%s258 + $0x9] sm:$0xff]
        %v490 = vstv %s487
        %v491 = vmul.f32 %v490, %v488
        %v492 = vmul.f32 %v490, %v489
        %v493 = vadd.f32 %v485, %v491
        %v494 = vadd.f32 %v486, %v492
        %s495 = sld [smem:[#allocation3 + $0xd]]
        %v496 = vld [vmem:[%s272 + $0x1] sm:$0xff]
        %v497 = vld [vmem:[%s272 + $0x9] sm:$0xff]
        %v498 = vstv %s495
        %v499 = vmul.f32 %v498, %v496
        %v500 = vmul.f32 %v498, %v497
        %v501 = vadd.f32 %v493, %v499
        %v502 = vadd.f32 %v494, %v500
        %s503 = sld [smem:[#allocation3 + $0xe]]
        %v504 = vld [vmem:[#allocation2 + $0x2] sm:$0xff]
        %v505 = vld [vmem:[#allocation2 + $0xa] sm:$0xff]
        %v506 = vstv %s503
        %v507 = vmul.f32 %v506, %v504
        %v508 = vmul.f32 %v506, %v505
        %v509 = vadd.f32 %v445, %v507
        %v510 = vadd.f32 %v446, %v508
        %s511 = sld [smem:[#allocation3 + $0xf]]
        %v512 = vld [vmem:[%s202 + $0x2] sm:$0xff]
        %v513 = vld [vmem:[%s202 + $0xa] sm:$0xff]
        %v514 = vstv %s511
        %v515 = vmul.f32 %v514, %v512
        %v516 = vmul.f32 %v514, %v513
        %v517 = vadd.f32 %v509, %v515
        %v518 = vadd.f32 %v510, %v516
        %s519 = sld [smem:[#allocation3 + $0x10]]
        %v520 = vld [vmem:[%s216 + $0x2] sm:$0xff]
        %v521 = vld [vmem:[%s216 + $0xa] sm:$0xff]
        %v522 = vstv %s519
        %v523 = vmul.f32 %v522, %v520
        %v524 = vmul.f32 %v522, %v521
        %v525 = vadd.f32 %v517, %v523
        %v526 = vadd.f32 %v518, %v524
        %s527 = sld [smem:[#allocation3 + $0x11]]
        %v528 = vld [vmem:[%s230 + $0x2] sm:$0xff]
        %v529 = vld [vmem:[%s230 + $0xa] sm:$0xff]
        %v530 = vstv %s527
        %v531 = vmul.f32 %v530, %v528
        %v532 = vmul.f32 %v530, %v529
        %v533 = vadd.f32 %v525, %v531
        %v534 = vadd.f32 %v526, %v532
        %s535 = sld [smem:[#allocation3 + $0x12]]
        %v536 = vld [vmem:[%s244 + $0x2] sm:$0xff]
        %v537 = vld [vmem:[%s244 + $0xa] sm:$0xff]
        %v538 = vstv %s535
        %v539 = vmul.f32 %v538, %v536
        %v540 = vmul.f32 %v538, %v537
        %v541 = vadd.f32 %v533, %v539
        %v542 = vadd.f32 %v534, %v540
        %s543 = sld [smem:[#allocation3 + $0x13]]
        %v544 = vld [vmem:[%s258 + $0x2] sm:$0xff]
        %v545 = vld [vmem:[%s258 + $0xa] sm:$0xff]
        %v546 = vstv %s543
        %v547 = vmul.f32 %v546, %v544
        %v548 = vmul.f32 %v546, %v545
        %v549 = vadd.f32 %v541, %v547
        %v550 = vadd.f32 %v542, %v548
        %s551 = sld [smem:[#allocation3 + $0x14]]
        %v552 = vld [vmem:[%s272 + $0x2] sm:$0xff]
        %v553 = vld [vmem:[%s272 + $0xa] sm:$0xff]
        %v554 = vstv %s551
        %v555 = vmul.f32 %v554, %v552
        %v556 = vmul.f32 %v554, %v553
        %v557 = vadd.f32 %v549, %v555
        %v558 = vadd.f32 %v550, %v556
        %s559 = sld [smem:[#allocation3 + $0x15]]
        %v560 = vld [vmem:[#allocation2 + $0x3] sm:$0xff]
        %v561 = vld [vmem:[#allocation2 + $0xb] sm:$0xff]
        %v562 = vstv %s559
        %v563 = vmul.f32 %v562, %v560
        %v564 = vmul.f32 %v562, %v561
        %v565 = vadd.f32 %v501, %v563
        %v566 = vadd.f32 %v502, %v564
        %s567 = sld [smem:[#allocation3 + $0x16]]
        %v568 = vld [vmem:[%s202 + $0x3] sm:$0xff]
        %v569 = vld [vmem:[%s202 + $0xb] sm:$0xff]
        %v570 = vstv %s567
        %v571 = vmul.f32 %v570, %v568
        %v572 = vmul.f32 %v570, %v569
        %v573 = vadd.f32 %v565, %v571
        %v574 = vadd.f32 %v566, %v572
        %s575 = sld [smem:[#allocation3 + $0x17]]
        %v576 = vld [vmem:[%s216 + $0x3] sm:$0xff]
        %v577 = vld [vmem:[%s216 + $0xb] sm:$0xff]
        %v578 = vstv %s575
        %v579 = vmul.f32 %v578, %v576
        %v580 = vmul.f32 %v578, %v577
        %v581 = vadd.f32 %v573, %v579
        %v582 = vadd.f32 %v574, %v580
        %s583 = sld [smem:[#allocation3 + $0x18]]
        %v584 = vld [vmem:[%s230 + $0x3] sm:$0xff]
        %v585 = vld [vmem:[%s230 + $0xb] sm:$0xff]
        %v586 = vstv %s583
        %v587 = vmul.f32 %v586, %v584
        %v588 = vmul.f32 %v586, %v585
        %v589 = vadd.f32 %v581, %v587
        %v590 = vadd.f32 %v582, %v588
        %s591 = sld [smem:[#allocation3 + $0x19]]
        %v592 = vld [vmem:[%s244 + $0x3] sm:$0xff]
        %v593 = vld [vmem:[%s244 + $0xb] sm:$0xff]
        %v594 = vstv %s591
        %v595 = vmul.f32 %v594, %v592
        %v596 = vmul.f32 %v594, %v593
        %v597 = vadd.f32 %v589, %v595
        %v598 = vadd.f32 %v590, %v596
        %s599 = sld [smem:[#allocation3 + $0x1a]]
        %v600 = vld [vmem:[%s258 + $0x3] sm:$0xff]
        %v601 = vld [vmem:[%s258 + $0xb] sm:$0xff]
        %v602 = vstv %s599
        %v603 = vmul.f32 %v602, %v600
        %v604 = vmul.f32 %v602, %v601
        %v605 = vadd.f32 %v597, %v603
        %v606 = vadd.f32 %v598, %v604
        %s607 = sld [smem:[#allocation3 + $0x1b]]
        %v608 = vld [vmem:[%s272 + $0x3] sm:$0xff]
        %v609 = vld [vmem:[%s272 + $0xb] sm:$0xff]
        %v610 = vstv %s607
        %v611 = vmul.f32 %v610, %v608
        %v612 = vmul.f32 %v610, %v609
        %v613 = vadd.f32 %v605, %v611
        %v614 = vadd.f32 %v606, %v612
        %s615 = sld [smem:[#allocation3 + $0x1c]]
        %v616 = vld [vmem:[#allocation2 + $0x4] sm:$0xff]
        %v617 = vld [vmem:[#allocation2 + $0xc] sm:$0xff]
        %v618 = vstv %s615
        %v619 = vmul.f32 %v618, %v616
        %v620 = vmul.f32 %v618, %v617
        %v621 = vadd.f32 %v557, %v619
        %v622 = vadd.f32 %v558, %v620
        %s623 = sld [smem:[#allocation3 + $0x1d]]
        %v624 = vld [vmem:[%s202 + $0x4] sm:$0xff]
        %v625 = vld [vmem:[%s202 + $0xc] sm:$0xff]
        %v626 = vstv %s623
        %v627 = vmul.f32 %v626, %v624
        %v628 = vmul.f32 %v626, %v625
        %v629 = vadd.f32 %v621, %v627
        %v630 = vadd.f32 %v622, %v628
        %s631 = sld [smem:[#allocation3 + $0x1e]]
        %v632 = vld [vmem:[%s216 + $0x4] sm:$0xff]
        %v633 = vld [vmem:[%s216 + $0xc] sm:$0xff]
        %v634 = vstv %s631
        %v635 = vmul.f32 %v634, %v632
        %v636 = vmul.f32 %v634, %v633
        %v637 = vadd.f32 %v629, %v635
        %v638 = vadd.f32 %v630, %v636
        %s639 = sld [smem:[#allocation3 + $0x1f]]
        %v640 = vld [vmem:[%s230 + $0x4] sm:$0xff]
        %v641 = vld [vmem:[%s230 + $0xc] sm:$0xff]
        %v642 = vstv %s639
        %v643 = vmul.f32 %v642, %v640
        %v644 = vmul.f32 %v642, %v641
        %v645 = vadd.f32 %v637, %v643
        %v646 = vadd.f32 %v638, %v644
        %s647 = sld [smem:[#allocation3 + $0x20]]
        %v648 = vld [vmem:[%s244 + $0x4] sm:$0xff]
        %v649 = vld [vmem:[%s244 + $0xc] sm:$0xff]
        %v650 = vstv %s647
        %v651 = vmul.f32 %v650, %v648
        %v652 = vmul.f32 %v650, %v649
        %v653 = vadd.f32 %v645, %v651
        %v654 = vadd.f32 %v646, %v652
        %s655 = sld [smem:[#allocation3 + $0x21]]
        %v656 = vld [vmem:[%s258 + $0x4] sm:$0xff]
        %v657 = vld [vmem:[%s258 + $0xc] sm:$0xff]
        %v658 = vstv %s655
        %v659 = vmul.f32 %v658, %v656
        %v660 = vmul.f32 %v658, %v657
        %v661 = vadd.f32 %v653, %v659
        %v662 = vadd.f32 %v654, %v660
        %s663 = sld [smem:[#allocation3 + $0x22]]
        %v664 = vld [vmem:[%s272 + $0x4] sm:$0xff]
        %v665 = vld [vmem:[%s272 + $0xc] sm:$0xff]
        %v666 = vstv %s663
        %v667 = vmul.f32 %v666, %v664
        %v668 = vmul.f32 %v666, %v665
        %v669 = vadd.f32 %v661, %v667
        %v670 = vadd.f32 %v662, %v668
        %s671 = sld [smem:[#allocation3 + $0x23]]
        %v672 = vld [vmem:[#allocation2 + $0x5] sm:$0xff]
        %v673 = vld [vmem:[#allocation2 + $0xd] sm:$0xff]
        %v674 = vstv %s671
        %v675 = vmul.f32 %v674, %v672
        %v676 = vmul.f32 %v674, %v673
        %v677 = vadd.f32 %v613, %v675
        %v678 = vadd.f32 %v614, %v676
        %s679 = sld [smem:[#allocation3 + $0x24]]
        %v680 = vld [vmem:[%s202 + $0x5] sm:$0xff]
        %v681 = vld [vmem:[%s202 + $0xd] sm:$0xff]
        %v682 = vstv %s679
        %v683 = vmul.f32 %v682, %v680
        %v684 = vmul.f32 %v682, %v681
        %v685 = vadd.f32 %v677, %v683
        %v686 = vadd.f32 %v678, %v684
        %s687 = sld [smem:[#allocation3 + $0x25]]
        %v688 = vld [vmem:[%s216 + $0x5] sm:$0xff]
        %v689 = vld [vmem:[%s216 + $0xd] sm:$0xff]
        %v690 = vstv %s687
        %v691 = vmul.f32 %v690, %v688
        %v692 = vmul.f32 %v690, %v689
        %v693 = vadd.f32 %v685, %v691
        %v694 = vadd.f32 %v686, %v692
        %s695 = sld [smem:[#allocation3 + $0x26]]
        %v696 = vld [vmem:[%s230 + $0x5] sm:$0xff]
        %v697 = vld [vmem:[%s230 + $0xd] sm:$0xff]
        %v698 = vstv %s695
        %v699 = vmul.f32 %v698, %v696
        %v700 = vmul.f32 %v698, %v697
        %v701 = vadd.f32 %v693, %v699
        %v702 = vadd.f32 %v694, %v700
        %s703 = sld [smem:[#allocation3 + $0x27]]
        %v704 = vld [vmem:[%s244 + $0x5] sm:$0xff]
        %v705 = vld [vmem:[%s244 + $0xd] sm:$0xff]
        %v706 = vstv %s703
        %v707 = vmul.f32 %v706, %v704
        %v708 = vmul.f32 %v706, %v705
        %v709 = vadd.f32 %v701, %v707
        %v710 = vadd.f32 %v702, %v708
        %s711 = sld [smem:[#allocation3 + $0x28]]
        %v712 = vld [vmem:[%s258 + $0x5] sm:$0xff]
        %v713 = vld [vmem:[%s258 + $0xd] sm:$0xff]
        %v714 = vstv %s711
        %v715 = vmul.f32 %v714, %v712
        %v716 = vmul.f32 %v714, %v713
        %v717 = vadd.f32 %v709, %v715
        %v718 = vadd.f32 %v710, %v716
        %s719 = sld [smem:[#allocation3 + $0x29]]
        %v720 = vld [vmem:[%s272 + $0x5] sm:$0xff]
        %v721 = vld [vmem:[%s272 + $0xd] sm:$0xff]
        %v722 = vstv %s719
        %v723 = vmul.f32 %v722, %v720
        %v724 = vmul.f32 %v722, %v721
        %v725 = vadd.f32 %v717, %v723
        %v726 = vadd.f32 %v718, %v724
        %s727 = sld [smem:[#allocation3 + $0x2a]]
        %v728 = vld [vmem:[#allocation2 + $0x6] sm:$0xff]
        %v729 = vld [vmem:[#allocation2 + $0xe] sm:$0xff]
        %v730 = vstv %s727
        %v731 = vmul.f32 %v730, %v728
        %v732 = vmul.f32 %v730, %v729
        %v733 = vadd.f32 %v669, %v731
        %v734 = vadd.f32 %v670, %v732
        %s735 = sld [smem:[#allocation3 + $0x2b]]
        %v736 = vld [vmem:[%s202 + $0x6] sm:$0xff]
        %v737 = vld [vmem:[%s202 + $0xe] sm:$0xff]
        %v738 = vstv %s735
        %v739 = vmul.f32 %v738, %v736
        %v740 = vmul.f32 %v738, %v737
        %v741 = vadd.f32 %v733, %v739
        %v742 = vadd.f32 %v734, %v740
        %s743 = sld [smem:[#allocation3 + $0x2c]]
        %v744 = vld [vmem:[%s216 + $0x6] sm:$0xff]
        %v745 = vld [vmem:[%s216 + $0xe] sm:$0xff]
        %v746 = vstv %s743
        %v747 = vmul.f32 %v746, %v744
        %v748 = vmul.f32 %v746, %v745
        %v749 = vadd.f32 %v741, %v747
        %v750 = vadd.f32 %v742, %v748
        %s751 = sld [smem:[#allocation3 + $0x2d]]
        %v752 = vld [vmem:[%s230 + $0x6] sm:$0xff]
        %v753 = vld [vmem:[%s230 + $0xe] sm:$0xff]
        %v754 = vstv %s751
        %v755 = vmul.f32 %v754, %v752
        %v756 = vmul.f32 %v754, %v753
        %v757 = vadd.f32 %v749, %v755
        %v758 = vadd.f32 %v750, %v756
        %s759 = sld [smem:[#allocation3 + $0x2e]]
        %v760 = vld [vmem:[%s244 + $0x6] sm:$0xff]
        %v761 = vld [vmem:[%s244 + $0xe] sm:$0xff]
        %v762 = vstv %s759
        %v763 = vmul.f32 %v762, %v760
        %v764 = vmul.f32 %v762, %v761
        %v765 = vadd.f32 %v757, %v763
        %v766 = vadd.f32 %v758, %v764
        %s767 = sld [smem:[#allocation3 + $0x2f]]
        %v768 = vld [vmem:[%s258 + $0x6] sm:$0xff]
        %v769 = vld [vmem:[%s258 + $0xe] sm:$0xff]
        %v770 = vstv %s767
        %v771 = vmul.f32 %v770, %v768
        %v772 = vmul.f32 %v770, %v769
        %v773 = vadd.f32 %v765, %v771
        %v774 = vadd.f32 %v766, %v772
        %s775 = sld [smem:[#allocation3 + $0x30]]
        %v776 = vld [vmem:[%s272 + $0x6] sm:$0xff]
        %v777 = vld [vmem:[%s272 + $0xe] sm:$0xff]
        %v778 = vstv %s775
        %v779 = vmul.f32 %v778, %v776
        %v780 = vmul.f32 %v778, %v777
        %v781 = vadd.f32 %v773, %v779
        %v782 = vadd.f32 %v774, %v780
        %s783 = sld [smem:[#allocation3 + $0x31]]
        %v784 = vld [vmem:[%s306] sm:$0xff]
        %v785 = vld [vmem:[%s306 + $0x8] sm:$0xff]
        %v786 = vstv %s783
        %v787 = vmul.f32 %v786, %v784
        %v788 = vmul.f32 %v786, %v785
        %v789 = vadd.f32 %v787, 0.0
        %v790 = vadd.f32 %v788, 0.0
        %s791 = sld [smem:[#allocation3 + $0x32]]
        %v792 = vld [vmem:[%s322] sm:$0xff]
        %v793 = vld [vmem:[%s322 + $0x8] sm:$0xff]
        %v794 = vstv %s791
        %v795 = vmul.f32 %v794, %v792
        %v796 = vmul.f32 %v794, %v793
        %v797 = vadd.f32 %v789, %v795
        %v798 = vadd.f32 %v790, %v796
        %s799 = sld [smem:[#allocation3 + $0x33]]
        %v800 = vld [vmem:[%s335] sm:$0xff]
        %v801 = vld [vmem:[%s335 + $0x8] sm:$0xff]
        %v802 = vstv %s799
        %v803 = vmul.f32 %v802, %v800
        %v804 = vmul.f32 %v802, %v801
        %v805 = vadd.f32 %v797, %v803
        %v806 = vadd.f32 %v798, %v804
        %s807 = sld [smem:[#allocation3 + $0x34]]
        %v808 = vld [vmem:[%s348] sm:$0xff]
        %v809 = vld [vmem:[%s348 + $0x8] sm:$0xff]
        %v810 = vstv %s807
        %v811 = vmul.f32 %v810, %v808
        %v812 = vmul.f32 %v810, %v809
        %v813 = vadd.f32 %v805, %v811
        %v814 = vadd.f32 %v806, %v812
        %s815 = sld [smem:[#allocation3 + $0x35]]
        %v816 = vld [vmem:[%s361] sm:$0xff]
        %v817 = vld [vmem:[%s361 + $0x8] sm:$0xff]
        %v818 = vstv %s815
        %v819 = vmul.f32 %v818, %v816
        %v820 = vmul.f32 %v818, %v817
        %v821 = vadd.f32 %v813, %v819
        %v822 = vadd.f32 %v814, %v820
        %s823 = sld [smem:[#allocation3 + $0x36]]
        %v824 = vld [vmem:[%s374] sm:$0xff]
        %v825 = vld [vmem:[%s374 + $0x8] sm:$0xff]
        %v826 = vstv %s823
        %v827 = vmul.f32 %v826, %v824
        %v828 = vmul.f32 %v826, %v825
        %v829 = vadd.f32 %v821, %v827
        %v830 = vadd.f32 %v822, %v828
        %s831 = sld [smem:[#allocation3 + $0x37]]
        %v832 = vld [vmem:[%s387] sm:$0xff]
        %v833 = vld [vmem:[%s387 + $0x8] sm:$0xff]
        %v834 = vstv %s831
        %v835 = vmul.f32 %v834, %v832
        %v836 = vmul.f32 %v834, %v833
        %v837 = vadd.f32 %v829, %v835
        %v838 = vadd.f32 %v830, %v836
        %s839 = sld [smem:[#allocation3 + $0x38]]
        %v840 = vld [vmem:[%s306 + $0x1] sm:$0xff]
        %v841 = vld [vmem:[%s306 + $0x9] sm:$0xff]
        %v842 = vstv %s839
        %v843 = vmul.f32 %v842, %v840
        %v844 = vmul.f32 %v842, %v841
        %v845 = vadd.f32 %v843, 0.0
        %v846 = vadd.f32 %v844, 0.0
        %s847 = sld [smem:[#allocation3 + $0x39]]
        %v848 = vld [vmem:[%s322 + $0x1] sm:$0xff]
        %v849 = vld [vmem:[%s322 + $0x9] sm:$0xff]
        %v850 = vstv %s847
        %v851 = vmul.f32 %v850, %v848
        %v852 = vmul.f32 %v850, %v849
        %v853 = vadd.f32 %v845, %v851
        %v854 = vadd.f32 %v846, %v852
        %s855 = sld [smem:[#allocation3 + $0x3a]]
        %v856 = vld [vmem:[%s335 + $0x1] sm:$0xff]
        %v857 = vld [vmem:[%s335 + $0x9] sm:$0xff]
        %v858 = vstv %s855
        %v859 = vmul.f32 %v858, %v856
        %v860 = vmul.f32 %v858, %v857
        %v861 = vadd.f32 %v853, %v859
        %v862 = vadd.f32 %v854, %v860
        %s863 = sld [smem:[#allocation3 + $0x3b]]
        %v864 = vld [vmem:[%s348 + $0x1] sm:$0xff]
        %v865 = vld [vmem:[%s348 + $0x9] sm:$0xff]
        %v866 = vstv %s863
        %v867 = vmul.f32 %v866, %v864
        %v868 = vmul.f32 %v866, %v865
        %v869 = vadd.f32 %v861, %v867
        %v870 = vadd.f32 %v862, %v868
        %s871 = sld [smem:[#allocation3 + $0x3c]]
        %v872 = vld [vmem:[%s361 + $0x1] sm:$0xff]
        %v873 = vld [vmem:[%s361 + $0x9] sm:$0xff]
        %v874 = vstv %s871
        %v875 = vmul.f32 %v874, %v872
        %v876 = vmul.f32 %v874, %v873
        %v877 = vadd.f32 %v869, %v875
        %v878 = vadd.f32 %v870, %v876
        %s879 = sld [smem:[#allocation3 + $0x3d]]
        %v880 = vld [vmem:[%s374 + $0x1] sm:$0xff]
        %v881 = vld [vmem:[%s374 + $0x9] sm:$0xff]
        %v882 = vstv %s879
        %v883 = vmul.f32 %v882, %v880
        %v884 = vmul.f32 %v882, %v881
        %v885 = vadd.f32 %v877, %v883
        %v886 = vadd.f32 %v878, %v884
        %s887 = sld [smem:[#allocation3 + $0x3e]]
        %v888 = vld [vmem:[%s387 + $0x1] sm:$0xff]
        %v889 = vld [vmem:[%s387 + $0x9] sm:$0xff]
        %v890 = vstv %s887
        %v891 = vmul.f32 %v890, %v888
        %v892 = vmul.f32 %v890, %v889
        %v893 = vadd.f32 %v885, %v891
        %v894 = vadd.f32 %v886, %v892
        %s895 = sld [smem:[#allocation3 + $0x3f]]
        %v896 = vld [vmem:[%s306 + $0x2] sm:$0xff]
        %v897 = vld [vmem:[%s306 + $0xa] sm:$0xff]
        %v898 = vstv %s895
        %v899 = vmul.f32 %v898, %v896
        %v900 = vmul.f32 %v898, %v897
        %v901 = vadd.f32 %v837, %v899
        %v902 = vadd.f32 %v838, %v900
        %s903 = sld [smem:[#allocation3 + $0x40]]
        %v904 = vld [vmem:[%s322 + $0x2] sm:$0xff]
        %v905 = vld [vmem:[%s322 + $0xa] sm:$0xff]
        %v906 = vstv %s903
        %v907 = vmul.f32 %v906, %v904
        %v908 = vmul.f32 %v906, %v905
        %v909 = vadd.f32 %v901, %v907
        %v910 = vadd.f32 %v902, %v908
        %s911 = sld [smem:[#allocation3 + $0x41]]
        %v912 = vld [vmem:[%s335 + $0x2] sm:$0xff]
        %v913 = vld [vmem:[%s335 + $0xa] sm:$0xff]
        %v914 = vstv %s911
        %v915 = vmul.f32 %v914, %v912
        %v916 = vmul.f32 %v914, %v913
        %v917 = vadd.f32 %v909, %v915
        %v918 = vadd.f32 %v910, %v916
        %s919 = sld [smem:[#allocation3 + $0x42]]
        %v920 = vld [vmem:[%s348 + $0x2] sm:$0xff]
        %v921 = vld [vmem:[%s348 + $0xa] sm:$0xff]
        %v922 = vstv %s919
        %v923 = vmul.f32 %v922, %v920
        %v924 = vmul.f32 %v922, %v921
        %v925 = vadd.f32 %v917, %v923
        %v926 = vadd.f32 %v918, %v924
        %s927 = sld [smem:[#allocation3 + $0x43]]
        %v928 = vld [vmem:[%s361 + $0x2] sm:$0xff]
        %v929 = vld [vmem:[%s361 + $0xa] sm:$0xff]
        %v930 = vstv %s927
        %v931 = vmul.f32 %v930, %v928
        %v932 = vmul.f32 %v930, %v929
        %v933 = vadd.f32 %v925, %v931
        %v934 = vadd.f32 %v926, %v932
        %s935 = sld [smem:[#allocation3 + $0x44]]
        %v936 = vld [vmem:[%s374 + $0x2] sm:$0xff]
        %v937 = vld [vmem:[%s374 + $0xa] sm:$0xff]
        %v938 = vstv %s935
        %v939 = vmul.f32 %v938, %v936
        %v940 = vmul.f32 %v938, %v937
        %v941 = vadd.f32 %v933, %v939
        %v942 = vadd.f32 %v934, %v940
        %s943 = sld [smem:[#allocation3 + $0x45]]
        %v944 = vld [vmem:[%s387 + $0x2] sm:$0xff]
        %v945 = vld [vmem:[%s387 + $0xa] sm:$0xff]
        %v946 = vstv %s943
        %v947 = vmul.f32 %v946, %v944
        %v948 = vmul.f32 %v946, %v945
        %v949 = vadd.f32 %v941, %v947
        %v950 = vadd.f32 %v942, %v948
        %s951 = sld [smem:[#allocation3 + $0x46]]
        %v952 = vld [vmem:[%s306 + $0x3] sm:$0xff]
        %v953 = vld [vmem:[%s306 + $0xb] sm:$0xff]
        %v954 = vstv %s951
        %v955 = vmul.f32 %v954, %v952
        %v956 = vmul.f32 %v954, %v953
        %v957 = vadd.f32 %v893, %v955
        %v958 = vadd.f32 %v894, %v956
        %s959 = sld [smem:[#allocation3 + $0x47]]
        %v960 = vld [vmem:[%s322 + $0x3] sm:$0xff]
        %v961 = vld [vmem:[%s322 + $0xb] sm:$0xff]
        %v962 = vstv %s959
        %v963 = vmul.f32 %v962, %v960
        %v964 = vmul.f32 %v962, %v961
        %v965 = vadd.f32 %v957, %v963
        %v966 = vadd.f32 %v958, %v964
        %s967 = sld [smem:[#allocation3 + $0x48]]
        %v968 = vld [vmem:[%s335 + $0x3] sm:$0xff]
        %v969 = vld [vmem:[%s335 + $0xb] sm:$0xff]
        %v970 = vstv %s967
        %v971 = vmul.f32 %v970, %v968
        %v972 = vmul.f32 %v970, %v969
        %v973 = vadd.f32 %v965, %v971
        %v974 = vadd.f32 %v966, %v972
        %s975 = sld [smem:[#allocation3 + $0x49]]
        %v976 = vld [vmem:[%s348 + $0x3] sm:$0xff]
        %v977 = vld [vmem:[%s348 + $0xb] sm:$0xff]
        %v978 = vstv %s975
        %v979 = vmul.f32 %v978, %v976
        %v980 = vmul.f32 %v978, %v977
        %v981 = vadd.f32 %v973, %v979
        %v982 = vadd.f32 %v974, %v980
        %s983 = sld [smem:[#allocation3 + $0x4a]]
        %v984 = vld [vmem:[%s361 + $0x3] sm:$0xff]
        %v985 = vld [vmem:[%s361 + $0xb] sm:$0xff]
        %v986 = vstv %s983
        %v987 = vmul.f32 %v986, %v984
        %v988 = vmul.f32 %v986, %v985
        %v989 = vadd.f32 %v981, %v987
        %v990 = vadd.f32 %v982, %v988
        %s991 = sld [smem:[#allocation3 + $0x4b]]
        %v992 = vld [vmem:[%s374 + $0x3] sm:$0xff]
        %v993 = vld [vmem:[%s374 + $0xb] sm:$0xff]
        %v994 = vstv %s991
        %v995 = vmul.f32 %v994, %v992
        %v996 = vmul.f32 %v994, %v993
        %v997 = vadd.f32 %v989, %v995
        %v998 = vadd.f32 %v990, %v996
        %s999 = sld [smem:[#allocation3 + $0x4c]]
        %v1000 = vld [vmem:[%s387 + $0x3] sm:$0xff]
        %v1001 = vld [vmem:[%s387 + $0xb] sm:$0xff]
        %v1002 = vstv %s999
        %v1003 = vmul.f32 %v1002, %v1000
        %v1004 = vmul.f32 %v1002, %v1001
        %v1005 = vadd.f32 %v997, %v1003
        %v1006 = vadd.f32 %v998, %v1004
        %s1007 = sld [smem:[#allocation3 + $0x4d]]
        %v1008 = vld [vmem:[%s306 + $0x4] sm:$0xff]
        %v1009 = vld [vmem:[%s306 + $0xc] sm:$0xff]
        %v1010 = vstv %s1007
        %v1011 = vmul.f32 %v1010, %v1008
        %v1012 = vmul.f32 %v1010, %v1009
        %v1013 = vadd.f32 %v949, %v1011
        %v1014 = vadd.f32 %v950, %v1012
        %s1015 = sld [smem:[#allocation3 + $0x4e]]
        %v1016 = vld [vmem:[%s322 + $0x4] sm:$0xff]
        %v1017 = vld [vmem:[%s322 + $0xc] sm:$0xff]
        %v1018 = vstv %s1015
        %v1019 = vmul.f32 %v1018, %v1016
        %v1020 = vmul.f32 %v1018, %v1017
        %v1021 = vadd.f32 %v1013, %v1019
        %v1022 = vadd.f32 %v1014, %v1020
        %s1023 = sld [smem:[#allocation3 + $0x4f]]
        %v1024 = vld [vmem:[%s335 + $0x4] sm:$0xff]
        %v1025 = vld [vmem:[%s335 + $0xc] sm:$0xff]
        %v1026 = vstv %s1023
        %v1027 = vmul.f32 %v1026, %v1024
        %v1028 = vmul.f32 %v1026, %v1025
        %v1029 = vadd.f32 %v1021, %v1027
        %v1030 = vadd.f32 %v1022, %v1028
        %s1031 = sld [smem:[#allocation3 + $0x50]]
        %v1032 = vld [vmem:[%s348 + $0x4] sm:$0xff]
        %v1033 = vld [vmem:[%s348 + $0xc] sm:$0xff]
        %v1034 = vstv %s1031
        %v1035 = vmul.f32 %v1034, %v1032
        %v1036 = vmul.f32 %v1034, %v1033
        %v1037 = vadd.f32 %v1029, %v1035
        %v1038 = vadd.f32 %v1030, %v1036
        %s1039 = sld [smem:[#allocation3 + $0x51]]
        %v1040 = vld [vmem:[%s361 + $0x4] sm:$0xff]
        %v1041 = vld [vmem:[%s361 + $0xc] sm:$0xff]
        %v1042 = vstv %s1039
        %v1043 = vmul.f32 %v1042, %v1040
        %v1044 = vmul.f32 %v1042, %v1041
        %v1045 = vadd.f32 %v1037, %v1043
        %v1046 = vadd.f32 %v1038, %v1044
        %s1047 = sld [smem:[#allocation3 + $0x52]]
        %v1048 = vld [vmem:[%s374 + $0x4] sm:$0xff]
        %v1049 = vld [vmem:[%s374 + $0xc] sm:$0xff]
        %v1050 = vstv %s1047
        %v1051 = vmul.f32 %v1050, %v1048
        %v1052 = vmul.f32 %v1050, %v1049
        %v1053 = vadd.f32 %v1045, %v1051
        %v1054 = vadd.f32 %v1046, %v1052
        %s1055 = sld [smem:[#allocation3 + $0x53]]
        %v1056 = vld [vmem:[%s387 + $0x4] sm:$0xff]
        %v1057 = vld [vmem:[%s387 + $0xc] sm:$0xff]
        %v1058 = vstv %s1055
        %v1059 = vmul.f32 %v1058, %v1056
        %v1060 = vmul.f32 %v1058, %v1057
        %v1061 = vadd.f32 %v1053, %v1059
        %v1062 = vadd.f32 %v1054, %v1060
        %s1063 = sld [smem:[#allocation3 + $0x54]]
        %v1064 = vld [vmem:[%s306 + $0x5] sm:$0xff]
        %v1065 = vld [vmem:[%s306 + $0xd] sm:$0xff]
        %v1066 = vstv %s1063
        %v1067 = vmul.f32 %v1066, %v1064
        %v1068 = vmul.f32 %v1066, %v1065
        %v1069 = vadd.f32 %v1005, %v1067
        %v1070 = vadd.f32 %v1006, %v1068
        %s1071 = sld [smem:[#allocation3 + $0x55]]
        %v1072 = vld [vmem:[%s322 + $0x5] sm:$0xff]
        %v1073 = vld [vmem:[%s322 + $0xd] sm:$0xff]
        %v1074 = vstv %s1071
        %v1075 = vmul.f32 %v1074, %v1072
        %v1076 = vmul.f32 %v1074, %v1073
        %v1077 = vadd.f32 %v1069, %v1075
        %v1078 = vadd.f32 %v1070, %v1076
        %s1079 = sld [smem:[#allocation3 + $0x56]]
        %v1080 = vld [vmem:[%s335 + $0x5] sm:$0xff]
        %v1081 = vld [vmem:[%s335 + $0xd] sm:$0xff]
        %v1082 = vstv %s1079
        %v1083 = vmul.f32 %v1082, %v1080
        %v1084 = vmul.f32 %v1082, %v1081
        %v1085 = vadd.f32 %v1077, %v1083
        %v1086 = vadd.f32 %v1078, %v1084
        %s1087 = sld [smem:[#allocation3 + $0x57]]
        %v1088 = vld [vmem:[%s348 + $0x5] sm:$0xff]
        %v1089 = vld [vmem:[%s348 + $0xd] sm:$0xff]
        %v1090 = vstv %s1087
        %v1091 = vmul.f32 %v1090, %v1088
        %v1092 = vmul.f32 %v1090, %v1089
        %v1093 = vadd.f32 %v1085, %v1091
        %v1094 = vadd.f32 %v1086, %v1092
        %s1095 = sld [smem:[#allocation3 + $0x58]]
        %v1096 = vld [vmem:[%s361 + $0x5] sm:$0xff]
        %v1097 = vld [vmem:[%s361 + $0xd] sm:$0xff]
        %v1098 = vstv %s1095
        %v1099 = vmul.f32 %v1098, %v1096
        %v1100 = vmul.f32 %v1098, %v1097
        %v1101 = vadd.f32 %v1093, %v1099
        %v1102 = vadd.f32 %v1094, %v1100
        %s1103 = sld [smem:[#allocation3 + $0x59]]
        %v1104 = vld [vmem:[%s374 + $0x5] sm:$0xff]
        %v1105 = vld [vmem:[%s374 + $0xd] sm:$0xff]
        %v1106 = vstv %s1103
        %v1107 = vmul.f32 %v1106, %v1104
        %v1108 = vmul.f32 %v1106, %v1105
        %v1109 = vadd.f32 %v1101, %v1107
        %v1110 = vadd.f32 %v1102, %v1108
        %s1111 = sld [smem:[#allocation3 + $0x5a]]
        %v1112 = vld [vmem:[%s387 + $0x5] sm:$0xff]
        %v1113 = vld [vmem:[%s387 + $0xd] sm:$0xff]
        %v1114 = vstv %s1111
        %v1115 = vmul.f32 %v1114, %v1112
        %v1116 = vmul.f32 %v1114, %v1113
        %v1117 = vadd.f32 %v1109, %v1115
        %v1118 = vadd.f32 %v1110, %v1116
        %s1119 = sld [smem:[#allocation3 + $0x5b]]
        %v1120 = vld [vmem:[%s306 + $0x6] sm:$0xff]
        %v1121 = vld [vmem:[%s306 + $0xe] sm:$0xff]
        %v1122 = vstv %s1119
        %v1123 = vmul.f32 %v1122, %v1120
        %v1124 = vmul.f32 %v1122, %v1121
        %v1125 = vadd.f32 %v1061, %v1123
        %v1126 = vadd.f32 %v1062, %v1124
        %s1127 = sld [smem:[#allocation3 + $0x5c]]
        %v1128 = vld [vmem:[%s322 + $0x6] sm:$0xff]
        %v1129 = vld [vmem:[%s322 + $0xe] sm:$0xff]
        %v1130 = vstv %s1127
        %v1131 = vmul.f32 %v1130, %v1128
        %v1132 = vmul.f32 %v1130, %v1129
        %v1133 = vadd.f32 %v1125, %v1131
        %v1134 = vadd.f32 %v1126, %v1132
        %s1135 = sld [smem:[#allocation3 + $0x5d]]
        %v1136 = vld [vmem:[%s335 + $0x6] sm:$0xff]
        %v1137 = vld [vmem:[%s335 + $0xe] sm:$0xff]
        %v1138 = vstv %s1135
        %v1139 = vmul.f32 %v1138, %v1136
        %v1140 = vmul.f32 %v1138, %v1137
        %v1141 = vadd.f32 %v1133, %v1139
        %v1142 = vadd.f32 %v1134, %v1140
        %s1143 = sld [smem:[#allocation3 + $0x5e]]
        %v1144 = vld [vmem:[%s348 + $0x6] sm:$0xff]
        %v1145 = vld [vmem:[%s348 + $0xe] sm:$0xff]
        %v1146 = vstv %s1143
        %v1147 = vmul.f32 %v1146, %v1144
        %v1148 = vmul.f32 %v1146, %v1145
        %v1149 = vadd.f32 %v1141, %v1147
        %v1150 = vadd.f32 %v1142, %v1148
        %s1151 = sld [smem:[#allocation3 + $0x5f]]
        %v1152 = vld [vmem:[%s361 + $0x6] sm:$0xff]
        %v1153 = vld [vmem:[%s361 + $0xe] sm:$0xff]
        %v1154 = vstv %s1151
        %v1155 = vmul.f32 %v1154, %v1152
        %v1156 = vmul.f32 %v1154, %v1153
        %v1157 = vadd.f32 %v1149, %v1155
        %v1158 = vadd.f32 %v1150, %v1156
        %s1159 = sld [smem:[#allocation3 + $0x60]]
        %v1160 = vld [vmem:[%s374 + $0x6] sm:$0xff]
        %v1161 = vld [vmem:[%s374 + $0xe] sm:$0xff]
        %v1162 = vstv %s1159
        %v1163 = vmul.f32 %v1162, %v1160
        %v1164 = vmul.f32 %v1162, %v1161
        %v1165 = vadd.f32 %v1157, %v1163
        %v1166 = vadd.f32 %v1158, %v1164
        %s1167 = sld [smem:[#allocation3 + $0x61]]
        %v1168 = vld [vmem:[%s387 + $0x6] sm:$0xff]
        %v1169 = vld [vmem:[%s387 + $0xe] sm:$0xff]
        %v1170 = vstv %s1167
        %v1171 = vmul.f32 %v1170, %v1168
        %v1172 = vmul.f32 %v1170, %v1169
        %v1173 = vadd.f32 %v1165, %v1171
        %v1174 = vadd.f32 %v1166, %v1172
        %v1175 = vadd.f32 %v781, %v725
        %v1176 = vadd.f32 %v782, %v726
        %v1177 = vadd.f32 %v1173, %v1117
        %v1178 = vadd.f32 %v1174, %v1118
        %v1179 = vadd.f32 %v1175, %v1177
        %v1180 = vadd.f32 %v1176, %v1178
        %v1181 = vxor.u32 %v1179, 2147483648
        %v1182 = vxor.u32 %v1180, 2147483648
        %v1183 = vmul.f32 %v1181, 1.442695
        %v1184 = vpow.pop %v1183
        %v1185 = vmul.f32 %v1182, 1.442695
        %v1186 = vpow.pop %v1185
        %v1187 = vadd.f32 %v1184, 1.0
        %v1188 = vadd.f32 %v1186, 1.0
        %v1189 = vrcp.pop %v1187
        %v1190 = vmul.f32 %v1187, %v1189
        %v1191 = vsub.f32 1.0, %v1190
        %v1192 = vmul.f32 %v1189, %v1191
        %v1193 = vadd.f32 %v1189, %v1192
        %vm1194 = vweird.f32 %v1187
        %vm1195 = vweird.f32 %v1189
        %vm1196 = vmor %vm1194, %vm1195
        %v1197 = vsel %vm1196, %v1189, %v1193
        %v1198 = vand.u32 2147483647, %v1187
        %vm1199 = vcmp.eq.f32.partialorder %v1198, 8.507059e+37
        %v1200 = vand.u32 %v1187, 2147483648
        %v1201 = vor.u32 1.1754944e-38, %v1200
        %v1202 = vsel %vm1199, %v1201, %v1197
        %v1203 = vmul.f32 1.0, %v1202
        %v1204 = vrcp.pop %v1188
        %v1205 = vmul.f32 %v1188, %v1204
        %v1206 = vsub.f32 1.0, %v1205
        %v1207 = vmul.f32 %v1204, %v1206
        %v1208 = vadd.f32 %v1204, %v1207
        %vm1209 = vweird.f32 %v1188
        %vm1210 = vweird.f32 %v1204
        %vm1211 = vmor %vm1209, %vm1210
        %v1212 = vsel %vm1211, %v1204, %v1208
        %v1213 = vand.u32 2147483647, %v1188
        %vm1214 = vcmp.eq.f32.partialorder %v1213, 8.507059e+37
        %v1215 = vand.u32 %v1188, 2147483648
        %v1216 = vor.u32 1.1754944e-38, %v1215
        %v1217 = vsel %vm1214, %v1216, %v1212
        %v1218 = vmul.f32 1.0, %v1217
        %vm1219 = vcmask 130048
        %1220 = vst.msk [vmem:[%s150] sm:$0xff] %vm1219, %v1203
        %1221 = vst.msk [vmem:[%s150 + $0x8] sm:$0xff] %vm1219, %v1218
        %s1222 = sand.u32 %s72, 1
        %s1223 = scalar_lea.sflag [#allocation4], %s1222
        %s1224 = sand.u32 %s72, 1
        %s1225 = smul.addr %s1224, 16
        %s1226 = scalar_lea.vmem [#allocation6], %s1225
        // Predicated region
        $region33: #{sam_forward.3} parent=27 // pred_check
          %p1227 = pneg %p82
        $region34: #{sam_forward.3} parent=27 // pred_check_branch
          %1229 = sbr.rel (%p1227) target = $region36
        $region35: #{sam_forward.3} parent=27 // pred_region
          %1231 = vsyncadd %s1223, 0
          %s1232 = smul.addr %s17, 2
          %s1233 = smul.addr %s1232, 8
          %s1234 = scalar_lea.hbm %s2, %s1233
          %s1235 = sshll.u32 %s1226, 4
          %s1236 = int_to_ptr.vmem [resolvable:$true] %s1235
          %s1237 = sshll.u32 %s1234, 4
          %s1238 = int_to_ptr.hbm [resolvable:$true] %s1237
          %1243 = dma.vmem_to_hbm [thread:$0]  %s1236, 256, %s1238, %s1223, 128, 128, 8
        $region36: #{sam_forward.3} parent=27 // pred_fallthru
          _
      $region28: #{sam_forward.3} parent=5 // pred_fallthru
        _
      %p1244 = scmp.le.s32.totalorder 2, %s12
      // Predicated region
      $region37: #{sam_forward.3} parent=5 // pred_check
        %p1245 = pneg %p1244
      $region38: #{sam_forward.3} parent=5 // pred_check_branch
        %1247 = sbr.rel (%p1245) target = $region40
      $region39: #{sam_forward.3} parent=5 // pred_region
        %s1248 = ssub.s32 %s12, 2
        // Predicated region
        $region41: #{sam_forward.3} parent=39 // pred_check
          %p1249 = pneg %p88
        $region42: #{sam_forward.3} parent=39 // pred_check_branch
          %1251 = sbr.rel (%p1249) target = $region44
        $region43: #{sam_forward.3} parent=39 // pred_region
          %s1252 = sand.u32 %s73, 1
          %s1253 = scalar_lea.sflag [#allocation4], %s1252
          %s1254 = sand.u32 %s73, 1
          %s1255 = smul.addr %s1254, 16
          %s1256 = scalar_lea.vmem [#allocation6], %s1255
          %1258 = dma.done %s1253, 256
        $region44: #{sam_forward.3} parent=39 // pred_fallthru
          _
      $region40: #{sam_forward.3} parent=5 // pred_fallthru
        _
    $region6: #{sam_forward.3} parent=1 // loop_footer
      %s16 = sadd.s32 1, %s12
    $region7: #{sam_forward.3} parent=1 // loop_footer_branch
      %11 = sbr.rel target = $region3
    $region8: #{sam_forward.3} parent=1 // loop_exit
      _
    %1259 = vsyncpa [#allocation4], 1
    %s1260 = scalar_lea.sflag [#allocation4], 1
    %1261 = vsyncpa %s1260, 1
    %1262 = vsyncpa [#allocation5], 1
    %s1263 = scalar_lea.sflag [#allocation5], 1
    %1264 = vsyncpa %s1263, 1

</llo_original>
